<compile_context>
chip_gen: v7x
topology: tpu7x:2x2x1
jax: 0.10.0
libtpu: 0.0.40
codegen_flags: <defaults>
</compile_context>

<pallas_src>
import functools
import numpy as np

import jax
import jax.numpy as jnp
from jax import lax
from jax.experimental import pallas as pl
from jax.experimental.pallas import tpu as pltpu


def _relu(x):
    return jnp.maximum(x, 0.0)


def _vmem():
    return pl.BlockSpec(memory_space=pltpu.MemorySpace.VMEM)


# ----------------------------------------------------------------------------
# Fused kernel: whole k-step forward pass (gridless, k unrolled).
# ----------------------------------------------------------------------------
def dss_fused_kernel(s_ref, d_ref, st_ref, dt_ref, ea_ref, prb_ref, a_ref,
                     y_ref, sol_ref, gw_ref, eyek_ref,
                     wn_ref, we1_ref, we2_ref, wp1_ref, wp2_ref, wd1_ref, wd2_ref,
                     u_ref, loss_ref, *, k, L, alpha):
    f32 = jnp.float32
    bf16 = jnp.bfloat16

    def dot(a, b):
        return jnp.dot(a, b, preferred_element_type=f32)

    # bf16 one-hots used directly on the MXU (never upcast to f32).
    S, D = s_ref[...], d_ref[...]          # (E, N) one-hot(src) / one-hot(dst)
    ST, DT = st_ref[...], dt_ref[...]      # (N, E) host-precomputed transposes
    ea = ea_ref[...]                       # (E, 8)  [edge_attr | 1 | 0 ...]
    prb = prb_ref[...]                     # (N, 8)  [prb       | 1 | 0 ...]
    A = a_ref[...]                         # (N, N)  densified system matrix
    y = y_ref[...]                         # (N, 1)
    sol = sol_ref[...]                     # (N, 1)

    N = A.shape[0]

    def decode(H, t):
        hid = _relu(dot(H, wd1_ref[t, :L, :]) + wd1_ref[t, L:L + 1, :])
        return dot(hid, wd2_ref[t, :L, :]) + wd2_ref[t, L:L + 1, :]   # (N, 1)

    H = jnp.zeros((N, L), f32)
    u_cols = [decode(H, 0)]                 # U['0'] uses decoder_list[0]

    for t in range(k):                      # static k -> fully unrolled
        # ---- fused Phi_to / Phi_from edge MLP, lane layout [to | from] -------
        # One 4L-wide node projection, then bf16 one-hot gathers per edge.
        P = dot(H, wn_ref[t]).astype(bf16)                       # (N, 4L)
        pre = (dot(D, P[:, :2 * L]) + dot(S, P[:, 2 * L:])       # bf16 gathers
               + dot(ea, we1_ref[t]))                            # edge_attr + b1
        msg = (dot(_relu(pre), we2_ref[t, :2 * L, :])            # blockdiag W2
               + we2_ref[t, 2 * L:2 * L + 1, :]).astype(bf16)    # (E, 2L)
        # scatter-add (bf16 MXU): Phi_to aggregates at dst, Phi_from at src
        mess_to = dot(DT, msg[:, :L])                            # (N, L)
        mess_from = dot(ST, msg[:, L:])                          # (N, L)

        # ---- Psi on [H, mess_to, mess_from, prb, 1] ---------------------------
        pre_psi = (dot(H, wp1_ref[t, :L, :])
                   + dot(mess_to, wp1_ref[t, L:2 * L, :])
                   + dot(mess_from, wp1_ref[t, 2 * L:3 * L, :])
                   + dot(prb, wp1_ref[t, 3 * L:3 * L + 8, :]))
        corr = dot(_relu(pre_psi), wp2_ref[t, :L, :]) + wp2_ref[t, L:L + 1, :]
        H = H + alpha * corr

        u_cols.append(decode(H, t))         # decoder_list[t], like the nn.Module

    # ---- batched epilogue: ONE residual matmul + lane reductions -------------
    U_all = jnp.concatenate(u_cols, axis=1)                      # (N, k+1)
    R = dot(A, U_all) - y                                        # (N, k+1)
    res = jnp.mean(R * R, axis=0, keepdims=True)                 # (1, k+1)
    dlt = U_all - sol
    mse = jnp.mean(dlt * dlt, axis=0, keepdims=True)             # (1, k+1)
    sol_nrm = jnp.sqrt(jnp.sum(sol * sol, keepdims=True))        # (1, 1)
    rel = jnp.sqrt(jnp.sum(dlt * dlt, axis=0, keepdims=True)) / sol_nrm
    total = jnp.sum(res * gw_ref[...], axis=1, keepdims=True)    # gamma-weighted
    loss_ref[...] = jnp.concatenate(
        [res, mse, rel, jnp.zeros_like(res) + total], axis=0)    # (4, k+1)

    # Lane-dense U output: (k+1, N) = U_all^T via a tiny NT matmul with I_{k+1}.
    u_ref[...] = lax.dot_general(eyek_ref[...], U_all,
                                 (((1,), (1,)), ((), ())),
                                 preferred_element_type=f32)


# ----------------------------------------------------------------------------
# Host-side weight packing: per-step MLP weights -> 7 stacked, 8-row-aligned
# tensors.  Layer-1 biases ride inside the ea/prb augmented matmuls.
# ----------------------------------------------------------------------------
def pack_params(params, L, k):
    assert L % 8 == 0, "latent_dim must be a multiple of 8 for aligned packing"
    f32 = jnp.float32
    zLL = jnp.zeros((L, L), f32)

    def pad_rows(x, rows):
        pad = rows - x.shape[0]
        if pad == 0:
            return x
        return jnp.concatenate([x, jnp.zeros((pad, x.shape[1]), f32)], axis=0)

    wn, we1, we2, wp1, wp2, wd1, wd2 = [], [], [], [], [], [], []
    for t in range(k):
        Wt1, bt1, Wt2, bt2 = params['phi_to'][t]     # Wt1 (2L+3, L)
        Wf1, bf1, Wf2, bf2 = params['phi_from'][t]
        Wp1, bp1, Wp2, bp2 = params['psi'][t]        # Wp1 (3L+1, L)
        Wd1, bd1, Wd2, bd2 = params['dec'][t]        # Wd1 (L, L), Wd2 (L, 1)

        # PyG message input order is [x_i, x_j, edge_attr]:
        #   Phi_to  (source_to_target): x_i = H[dst], x_j = H[src], aggr @ dst
        #   Phi_from(target_to_source): x_i = H[src], x_j = H[dst], aggr @ src
        Wd_blk = jnp.concatenate([Wt1[:L], Wf1[L:2 * L]], axis=1)   # H[dst] -> [to|from]
        Ws_blk = jnp.concatenate([Wt1[L:2 * L], Wf1[:L]], axis=1)   # H[src] -> [to|from]
        wn.append(jnp.concatenate([Wd_blk, Ws_blk], axis=1))        # (L, 4L)

        We_blk = jnp.concatenate([Wt1[2 * L:], Wf1[2 * L:]], axis=1)  # (3, 2L)
        b1_blk = jnp.concatenate([bt1, bf1], axis=1)                  # (1, 2L)
        # paired with ea_aug = [edge_attr | 1 | 0,0,0,0]
        we1.append(pad_rows(jnp.concatenate([We_blk, b1_blk], axis=0), 8))

        W2_blk = jnp.concatenate(
            [jnp.concatenate([Wt2, zLL], axis=1),
             jnp.concatenate([zLL, Wf2], axis=1)], axis=0)            # (2L, 2L)
        b2_blk = jnp.concatenate([bt2, bf2], axis=1)
        we2.append(pad_rows(jnp.concatenate([W2_blk, b2_blk], axis=0), 2 * L + 8))

        # rows 0:3L weights for [H, mess_to, mess_from]; row 3L prb weight;
        # row 3L+1 bias (paired with prb_aug = [prb | 1 | 0...]).
        wp1.append(pad_rows(jnp.concatenate([Wp1, bp1], axis=0), 3 * L + 8))
        wp2.append(pad_rows(jnp.concatenate([Wp2, bp2], axis=0), L + 8))
        wd1.append(pad_rows(jnp.concatenate([Wd1, bd1], axis=0), L + 8))
        wd2.append(pad_rows(jnp.concatenate([Wd2, bd2], axis=0), L + 8))

    return tuple(jnp.stack(x) for x in (wn, we1, we2, wp1, wp2, wd1, wd2))


def _padded_vmem_bytes(arrays):
    total = 0
    for x in arrays:
        shape = list(x.shape)
        while len(shape) < 2:
            shape = [1] + shape
        sub = 16 if x.dtype == jnp.bfloat16 else 8
        shape[-1] = -(-shape[-1] // 128) * 128
        shape[-2] = -(-shape[-2] // sub) * sub
        total += int(np.prod(shape)) * jnp.dtype(x.dtype).itemsize
    return total


# ----------------------------------------------------------------------------
# Full forward pass (mirrors DeepStatisticalSolver.forward) -- single kernel.
# ----------------------------------------------------------------------------
def dss_forward(params, edge_index, edge_attr, a_ij, prb, sol, y, num_nodes, config):
    L, k, alpha, gamma = (config['latent_dim'], config['k'],
                          config['alpha'], config['gamma'])
    src = np.asarray(edge_index[0])
    dst = np.asarray(edge_index[1])

    # remove_self_loops on the host (both Phi_* drop self-loops before
    # propagate); the system matrix A keeps the full edge list (duplicates
    # summed), matching the SparseTensor in the module.
    keep = src != dst
    src_k, dst_k = src[keep], dst[keep]
    ea_k = np.asarray(edge_attr)[keep]
    E = int(src_k.shape[0])
    N = num_nodes

    S = jax.nn.one_hot(jnp.asarray(src_k), N, dtype=jnp.bfloat16)    # (E, N)
    D = jax.nn.one_hot(jnp.asarray(dst_k), N, dtype=jnp.bfloat16)    # (E, N)
    ST, DT = S.T, D.T                                                # (N, E)
    ea_aug = jnp.asarray(np.concatenate(
        [ea_k, np.ones((E, 1), np.float32), np.zeros((E, 4), np.float32)],
        axis=1), jnp.float32)                                        # (E, 8)
    prb_aug = jnp.concatenate(
        [prb, jnp.ones((N, 1), jnp.float32), jnp.zeros((N, 6), jnp.float32)],
        axis=1)                                                      # (N, 8)
    A = jnp.zeros((N, N), jnp.float32).at[
        jnp.asarray(src), jnp.asarray(dst)].add(a_ij.ravel())
    gw = jnp.asarray(
        np.array([[0.0] + [gamma ** (k - s) for s in range(1, k + 1)]],
                 np.float32))                                        # (1, k+1)
    eyek = jnp.eye(k + 1, dtype=jnp.float32)                         # (k+1, k+1)

    wn, we1, we2, wp1, wp2, wd1, wd2 = pack_params(params, L, k)
    inputs = [S, D, ST, DT, ea_aug, prb_aug, A, y, sol, gw, eyek,
              wn, we1, we2, wp1, wp2, wd1, wd2]

    out_shapes = (
        jax.ShapeDtypeStruct((k + 1, N), jnp.float32),   # U (lane-dense), row t = u_t
        jax.ShapeDtypeStruct((4, k + 1), jnp.float32),   # [res; mse; rel; train]
    )

    # VMEM budget from the real tile-padded footprint (+ outputs + headroom).
    footprint = _padded_vmem_bytes(inputs) + _padded_vmem_bytes(
        [np.zeros(s.shape, s.dtype) for s in out_shapes])
    vmem_limit = int(min(100 * 2 ** 20, max(32 * 2 ** 20, 4 * footprint)))

    per_step = (2 * N * L * 4 * L              # node projection
                + 2 * E * N * 2 * L * 2        # one-hot gathers
                + 2 * E * 8 * 2 * L            # edge_attr / bias
                + 2 * E * 2 * L * 2 * L        # edge MLP layer 2
                + 2 * N * E * L * 2            # scatter-adds
                + 2 * N * L * L * 4 + 2 * N * 8 * L   # psi
                + 2 * N * L * L + 2 * N * L)          # decoder
    flops = (k * per_step + 2 * N * L * L + 2 * N * L
             + 2 * N * N * (k + 1) + 2 * (k + 1) ** 2 * N)
    bytes_accessed = sum(int(np.prod(x.shape)) * jnp.dtype(x.dtype).itemsize
                         for x in inputs)
    bytes_accessed += (k + 1) * N * 4 + 4 * (k + 1) * 4
    cost = pl.CostEstimate(flops=int(flops), transcendentals=k + 3,
                           bytes_accessed=int(bytes_accessed))

    u_all, losses = pl.pallas_call(
        functools.partial(dss_fused_kernel, k=k, L=L, alpha=alpha),
        out_shape=out_shapes,
        in_specs=[_vmem() for _ in inputs],
        out_specs=tuple(_vmem() for _ in range(len(out_shapes))),
        compiler_params=pltpu.CompilerParams(vmem_limit_bytes=vmem_limit),
        cost_estimate=cost,
    )(*inputs)

    U = {str(i): u_all[i].reshape(N, 1) for i in range(k + 1)}
    cumul_res = {str(i): losses[0, i] for i in range(k + 1)}
    cumul_mse = {str(i): losses[1, i] for i in range(k + 1)}
    cumul_rel = {str(i): losses[2, i] for i in range(k + 1)}
    loss_dic = {'train_loss': losses[3, 0], 'residual_loss': cumul_res,
                'mse_loss': cumul_mse, 'rel_loss': cumul_rel}
    return U, loss_dic


# ----------------------------------------------------------------------------
# Deterministic parameter init (nn.Linear shapes; weights stored (in, out)).
# ----------------------------------------------------------------------------
def init_linear(key, fan_in, fan_out):
    kw, kb = jax.random.split(key)
    bound = 1.0 / np.sqrt(fan_in)
    W = jax.random.uniform(kw, (fan_in, fan_out), jnp.float32, -bound, bound)
    b = jax.random.uniform(kb, (1, fan_out), jnp.float32, -bound, bound)
    return W, b


def init_params(key, L, k):
    params = {'phi_to': [], 'phi_from': [], 'psi': [], 'dec': []}
    dims = {'phi_to': [2 * L + 3, L, L], 'phi_from': [2 * L + 3, L, L],
            'psi': [3 * L + 1, L, L], 'dec': [L, L, 1]}
    for name in ['phi_to', 'phi_from', 'psi', 'dec']:
        d = dims[name]
        for _ in range(k):
            key, k1, k2 = jax.random.split(key, 3)
            W1, b1 = init_linear(k1, d[0], d[1])
            W2, b2 = init_linear(k2, d[1], d[2])
            params[name].append((W1, b1, W2, b2))
    return params


# ----------------------------------------------------------------------------
# Pure-JAX reference (segment_sum based, PyG semantics) for validation.
# ----------------------------------------------------------------------------
def _ref_mlp2(x, W1, b1, W2, b2):
    return jnp.maximum(x @ W1 + b1, 0.0) @ W2 + b2


def ref_forward(params, edge_index, edge_attr, a_ij, prb, sol, y, N, config):
    L, k, alpha, gamma = (config['latent_dim'], config['k'],
                          config['alpha'], config['gamma'])
    src = np.asarray(edge_index[0])
    dst = np.asarray(edge_index[1])
    keep = src != dst
    src_k = jnp.asarray(src[keep])
    dst_k = jnp.asarray(dst[keep])
    ea_k = jnp.asarray(np.asarray(edge_attr)[keep])
    A = jnp.zeros((N, N), jnp.float32).at[
        jnp.asarray(src), jnp.asarray(dst)].add(a_ij.ravel())

    def dec_loss(H, dp):
        u = _ref_mlp2(H, *dp)
        r = A @ u - y
        return u, jnp.mean(r ** 2)

    H = jnp.zeros((N, L), jnp.float32)
    U, res = {}, {}
    u, r0 = dec_loss(H, params['dec'][0])
    U['0'], res['0'] = u, r0
    total = None
    for t in range(k):
        msg_to = _ref_mlp2(jnp.concatenate([H[dst_k], H[src_k], ea_k], axis=1),
                           *params['phi_to'][t])
        mess_to = jax.ops.segment_sum(msg_to, dst_k, num_segments=N)
        msg_fr = _ref_mlp2(jnp.concatenate([H[src_k], H[dst_k], ea_k], axis=1),
                           *params['phi_from'][t])
        mess_from = jax.ops.segment_sum(msg_fr, src_k, num_segments=N)
        concat = jnp.concatenate([H, mess_to, mess_from, prb], axis=1)
        H = H + alpha * _ref_mlp2(concat, *params['psi'][t])
        u, r = dec_loss(H, params['dec'][t])
        U[str(t + 1)], res[str(t + 1)] = u, r
        w = gamma ** (k - t - 1)
        total = r * w if total is None else total + r * w
    return U, res, total


if __name__ == "__main__":
    config = {'latent_dim': 32, 'k': 3, 'alpha': 1e-3, 'gamma': 0.9}
    N, E = 16, 40

    key = jax.random.PRNGKey(0)
    keys = jax.random.split(key, 8)
    src = jax.random.randint(keys[0], (E,), 0, N, dtype=jnp.int32)
    dst = jax.random.randint(keys[1], (E,), 0, N, dtype=jnp.int32)
    dst = dst.at[:4].set(src[:4])                 # include a few self-loops
    edge_index = jnp.stack([src, dst])            # (2, E)
    edge_attr = jax.random.normal(keys[2], (E, 3), jnp.float32)
    a_ij = jax.random.normal(keys[3], (E, 1), jnp.float32)
    prb_data = jax.random.normal(keys[4], (N, 1), jnp.float32)
    sol = jax.random.normal(keys[5], (N, 1), jnp.float32)
    y = jax.random.normal(keys[6], (N, 1), jnp.float32)
    params = init_params(keys[7], config['latent_dim'], config['k'])

    U, loss_dic = dss_forward(params, edge_index, edge_attr, a_ij,
                              prb_data, sol, y, N, config)
    jax.block_until_ready(loss_dic['train_loss'])
    jax.block_until_ready(U[str(config['k'])])

    # Validate against pure-JAX reference (PyG-style gather / segment_sum),
    # run at full f32 matmul precision.
    with jax.default_matmul_precision('highest'):
        U_ref, res_ref_d, total_ref = ref_forward(params, edge_index, edge_attr, a_ij,
                                                  prb_data, sol, y, N, config)
    kf = str(config['k'])
    rtol, atol = 5e-3, 1e-4
    np.testing.assert_allclose(np.asarray(U['0']), np.asarray(U_ref['0']),
                               rtol=rtol, atol=atol)
    np.testing.assert_allclose(np.asarray(U[kf]), np.asarray(U_ref[kf]),
                               rtol=rtol, atol=atol)
    np.testing.assert_allclose(float(loss_dic['train_loss']), float(total_ref),
                               rtol=rtol, atol=atol)
    np.testing.assert_allclose(float(loss_dic['residual_loss']['0']),
                               float(res_ref_d['0']), rtol=rtol, atol=atol)
    np.testing.assert_allclose(float(loss_dic['residual_loss'][kf]),
                               float(res_ref_d[kf]), rtol=rtol, atol=atol)
    mse_ref = float(np.mean((np.asarray(U_ref[kf]) - np.asarray(sol)) ** 2))
    rel_ref = float(np.linalg.norm(np.asarray(U_ref[kf]) - np.asarray(sol))
                    / np.linalg.norm(np.asarray(sol)))
    np.testing.assert_allclose(float(loss_dic['mse_loss'][kf]), mse_ref,
                               rtol=rtol, atol=atol)
    np.testing.assert_allclose(float(loss_dic['rel_loss'][kf]), rel_ref,
                               rtol=rtol, atol=atol)
    assert np.isfinite(float(loss_dic['train_loss']))

    print("KERNEL_OK")
</pallas_src>

<mosaic_0001>
module attributes {stable_mosaic.version = 11 : i64} {
  func.func @dss_fused_kernel(%arg0: memref<33x16xbf16, #tpu.memory_space<vmem>>, %arg1: memref<33x16xbf16, #tpu.memory_space<vmem>>, %arg2: memref<16x33xbf16, #tpu.memory_space<vmem>>, %arg3: memref<16x33xbf16, #tpu.memory_space<vmem>>, %arg4: memref<33x8xf32, #tpu.memory_space<vmem>>, %arg5: memref<16x8xf32, #tpu.memory_space<vmem>>, %arg6: memref<16x16xf32, #tpu.memory_space<vmem>>, %arg7: memref<16x1xf32, #tpu.memory_space<vmem>>, %arg8: memref<16x1xf32, #tpu.memory_space<vmem>>, %arg9: memref<1x4xf32, #tpu.memory_space<vmem>>, %arg10: memref<4x4xf32, #tpu.memory_space<vmem>>, %arg11: memref<3x32x128xf32, #tpu.memory_space<vmem>>, %arg12: memref<3x8x64xf32, #tpu.memory_space<vmem>>, %arg13: memref<3x72x64xf32, #tpu.memory_space<vmem>>, %arg14: memref<3x104x32xf32, #tpu.memory_space<vmem>>, %arg15: memref<3x40x32xf32, #tpu.memory_space<vmem>>, %arg16: memref<3x40x32xf32, #tpu.memory_space<vmem>>, %arg17: memref<3x40x1xf32, #tpu.memory_space<vmem>>, %arg18: memref<4x16xf32, #tpu.memory_space<vmem>>, %arg19: memref<4x4xf32, #tpu.memory_space<vmem>>) attributes {dimension_semantics = [], scalar_prefetch = 0 : i64, scratch_operands = 0 : i64, tpu.core_type = #tpu.core_type<tc>} {
    %c0 = arith.constant 0 : index
    %c0_0 = arith.constant 0 : index
    %0 = vector.load %arg0[%c0, %c0_0] : memref<33x16xbf16, #tpu.memory_space<vmem>>, vector<33x16xbf16>
    %c0_1 = arith.constant 0 : index
    %c0_2 = arith.constant 0 : index
    %1 = vector.load %arg1[%c0_1, %c0_2] : memref<33x16xbf16, #tpu.memory_space<vmem>>, vector<33x16xbf16>
    %c0_3 = arith.constant 0 : index
    %c0_4 = arith.constant 0 : index
    %2 = vector.load %arg2[%c0_3, %c0_4] : memref<16x33xbf16, #tpu.memory_space<vmem>>, vector<16x33xbf16>
    %c0_5 = arith.constant 0 : index
    %c0_6 = arith.constant 0 : index
    %3 = vector.load %arg3[%c0_5, %c0_6] : memref<16x33xbf16, #tpu.memory_space<vmem>>, vector<16x33xbf16>
    %c0_7 = arith.constant 0 : index
    %c0_8 = arith.constant 0 : index
    %4 = vector.load %arg4[%c0_7, %c0_8] : memref<33x8xf32, #tpu.memory_space<vmem>>, vector<33x8xf32>
    %c0_9 = arith.constant 0 : index
    %c0_10 = arith.constant 0 : index
    %5 = vector.load %arg5[%c0_9, %c0_10] : memref<16x8xf32, #tpu.memory_space<vmem>>, vector<16x8xf32>
    %c0_11 = arith.constant 0 : index
    %c0_12 = arith.constant 0 : index
    %6 = vector.load %arg6[%c0_11, %c0_12] : memref<16x16xf32, #tpu.memory_space<vmem>>, vector<16x16xf32>
    %c0_13 = arith.constant 0 : index
    %c0_14 = arith.constant 0 : index
    %7 = vector.load %arg7[%c0_13, %c0_14] : memref<16x1xf32, #tpu.memory_space<vmem>>, vector<16x1xf32>
    %c0_15 = arith.constant 0 : index
    %c0_16 = arith.constant 0 : index
    %8 = vector.load %arg8[%c0_15, %c0_16] : memref<16x1xf32, #tpu.memory_space<vmem>>, vector<16x1xf32>
    %cst = arith.constant 0.000000e+00 : f32
    %9 = vector.broadcast %cst : f32 to vector<16x32xf32>
    %c0_17 = arith.constant 0 : index
    %c0_18 = arith.constant 0 : index
    %c0_19 = arith.constant 0 : index
    %10 = vector.load %arg16[%c0_17, %c0_18, %c0_19] : memref<3x40x32xf32, #tpu.memory_space<vmem>>, vector<1x32x32xf32>
    %11 = vector.shape_cast %10 : vector<1x32x32xf32> to vector<32x32xf32>
    %cst_20 = arith.constant dense<0.000000e+00> : vector<16x32xf32>
    %12 = tpu.matmul %9, %11, %cst_20 {dimension_numbers = #tpu.dot_dimension_numbers<[1], [0], [0], [1], [0, 0, 1, 1], [], []>} : vector<16x32xf32>, vector<32x32xf32>, vector<16x32xf32> -> vector<16x32xf32>
    %c0_21 = arith.constant 0 : index
    %c32 = arith.constant 32 : index
    %c0_22 = arith.constant 0 : index
    %13 = vector.load %arg16[%c0_21, %c32, %c0_22] : memref<3x40x32xf32, #tpu.memory_space<vmem>>, vector<1x1x32xf32>
    %14 = vector.shape_cast %13 : vector<1x1x32xf32> to vector<1x32xf32>
    %15 = vector.broadcast %14 : vector<1x32xf32> to vector<16x32xf32>
    %16 = arith.addf %12, %15 : vector<16x32xf32>
    %cst_23 = arith.constant 0.000000e+00 : f32
    %17 = vector.broadcast %cst_23 : f32 to vector<16x32xf32>
    %18 = arith.maximumf %16, %17 : vector<16x32xf32>
    %c0_24 = arith.constant 0 : index
    %c0_25 = arith.constant 0 : index
    %c0_26 = arith.constant 0 : index
    %19 = vector.load %arg17[%c0_24, %c0_25, %c0_26] : memref<3x40x1xf32, #tpu.memory_space<vmem>>, vector<1x32x1xf32>
    %20 = vector.shape_cast %19 : vector<1x32x1xf32> to vector<32x1xf32>
    %cst_27 = arith.constant dense<0.000000e+00> : vector<16x1xf32>
    %21 = tpu.matmul %18, %20, %cst_27 {dimension_numbers = #tpu.dot_dimension_numbers<[1], [0], [0], [1], [0, 0, 1, 1], [], []>} : vector<16x32xf32>, vector<32x1xf32>, vector<16x1xf32> -> vector<16x1xf32>
    %c0_28 = arith.constant 0 : index
    %c32_29 = arith.constant 32 : index
    %c0_30 = arith.constant 0 : index
    %22 = vector.load %arg17[%c0_28, %c32_29, %c0_30] : memref<3x40x1xf32, #tpu.memory_space<vmem>>, vector<1x1x1xf32>
    %23 = vector.shape_cast %22 : vector<1x1x1xf32> to vector<1x1xf32>
    %24 = vector.broadcast %23 : vector<1x1xf32> to vector<16x1xf32>
    %25 = arith.addf %21, %24 : vector<16x1xf32>
    %c0_31 = arith.constant 0 : index
    %c0_32 = arith.constant 0 : index
    %c0_33 = arith.constant 0 : index
    %26 = vector.load %arg11[%c0_31, %c0_32, %c0_33] : memref<3x32x128xf32, #tpu.memory_space<vmem>>, vector<1x32x128xf32>
    %27 = vector.shape_cast %26 : vector<1x32x128xf32> to vector<32x128xf32>
    %cst_34 = arith.constant dense<0.000000e+00> : vector<16x128xf32>
    %28 = tpu.matmul %9, %27, %cst_34 {dimension_numbers = #tpu.dot_dimension_numbers<[1], [0], [0], [1], [0, 0, 1, 1], [], []>} : vector<16x32xf32>, vector<32x128xf32>, vector<16x128xf32> -> vector<16x128xf32>
    %29 = arith.truncf %28 : vector<16x128xf32> to vector<16x128xbf16>
    %30 = vector.extract_strided_slice %29 {offsets = [0, 0], sizes = [16, 64], strides = [1, 1]} : vector<16x128xbf16> to vector<16x64xbf16>
    %cst_35 = arith.constant dense<0.000000e+00> : vector<33x64xf32>
    %31 = tpu.matmul %1, %30, %cst_35 {dimension_numbers = #tpu.dot_dimension_numbers<[1], [0], [0], [1], [0, 0, 1, 1], [], []>} : vector<33x16xbf16>, vector<16x64xbf16>, vector<33x64xf32> -> vector<33x64xf32>
    %32 = vector.extract_strided_slice %29 {offsets = [0, 64], sizes = [16, 64], strides = [1, 1]} : vector<16x128xbf16> to vector<16x64xbf16>
    %cst_36 = arith.constant dense<0.000000e+00> : vector<33x64xf32>
    %33 = tpu.matmul %0, %32, %cst_36 {dimension_numbers = #tpu.dot_dimension_numbers<[1], [0], [0], [1], [0, 0, 1, 1], [], []>} : vector<33x16xbf16>, vector<16x64xbf16>, vector<33x64xf32> -> vector<33x64xf32>
    %34 = arith.addf %31, %33 : vector<33x64xf32>
    %c0_37 = arith.constant 0 : index
    %c0_38 = arith.constant 0 : index
    %c0_39 = arith.constant 0 : index
    %35 = vector.load %arg12[%c0_37, %c0_38, %c0_39] : memref<3x8x64xf32, #tpu.memory_space<vmem>>, vector<1x8x64xf32>
    %36 = vector.shape_cast %35 : vector<1x8x64xf32> to vector<8x64xf32>
    %cst_40 = arith.constant dense<0.000000e+00> : vector<33x64xf32>
    %37 = tpu.matmul %4, %36, %cst_40 {dimension_numbers = #tpu.dot_dimension_numbers<[1], [0], [0], [1], [0, 0, 1, 1], [], []>} : vector<33x8xf32>, vector<8x64xf32>, vector<33x64xf32> -> vector<33x64xf32>
    %38 = arith.addf %34, %37 : vector<33x64xf32>
    %cst_41 = arith.constant 0.000000e+00 : f32
    %39 = vector.broadcast %cst_41 : f32 to vector<33x64xf32>
    %40 = arith.maximumf %38, %39 : vector<33x64xf32>
    %c0_42 = arith.constant 0 : index
    %c0_43 = arith.constant 0 : index
    %c0_44 = arith.constant 0 : index
    %41 = vector.load %arg13[%c0_42, %c0_43, %c0_44] : memref<3x72x64xf32, #tpu.memory_space<vmem>>, vector<1x64x64xf32>
    %42 = vector.shape_cast %41 : vector<1x64x64xf32> to vector<64x64xf32>
    %cst_45 = arith.constant dense<0.000000e+00> : vector<33x64xf32>
    %43 = tpu.matmul %40, %42, %cst_45 {dimension_numbers = #tpu.dot_dimension_numbers<[1], [0], [0], [1], [0, 0, 1, 1], [], []>} : vector<33x64xf32>, vector<64x64xf32>, vector<33x64xf32> -> vector<33x64xf32>
    %c0_46 = arith.constant 0 : index
    %c64 = arith.constant 64 : index
    %c0_47 = arith.constant 0 : index
    %44 = vector.load %arg13[%c0_46, %c64, %c0_47] : memref<3x72x64xf32, #tpu.memory_space<vmem>>, vector<1x1x64xf32>
    %45 = vector.shape_cast %44 : vector<1x1x64xf32> to vector<1x64xf32>
    %46 = vector.broadcast %45 : vector<1x64xf32> to vector<33x64xf32>
    %47 = arith.addf %43, %46 : vector<33x64xf32>
    %48 = arith.truncf %47 : vector<33x64xf32> to vector<33x64xbf16>
    %49 = vector.extract_strided_slice %48 {offsets = [0, 0], sizes = [33, 32], strides = [1, 1]} : vector<33x64xbf16> to vector<33x32xbf16>
    %cst_48 = arith.constant dense<0.000000e+00> : vector<16x32xf32>
    %50 = tpu.matmul %3, %49, %cst_48 {dimension_numbers = #tpu.dot_dimension_numbers<[1], [0], [0], [1], [0, 0, 1, 1], [], []>} : vector<16x33xbf16>, vector<33x32xbf16>, vector<16x32xf32> -> vector<16x32xf32>
    %51 = vector.extract_strided_slice %48 {offsets = [0, 32], sizes = [33, 32], strides = [1, 1]} : vector<33x64xbf16> to vector<33x32xbf16>
    %cst_49 = arith.constant dense<0.000000e+00> : vector<16x32xf32>
    %52 = tpu.matmul %2, %51, %cst_49 {dimension_numbers = #tpu.dot_dimension_numbers<[1], [0], [0], [1], [0, 0, 1, 1], [], []>} : vector<16x33xbf16>, vector<33x32xbf16>, vector<16x32xf32> -> vector<16x32xf32>
    %c0_50 = arith.constant 0 : index
    %c0_51 = arith.constant 0 : index
    %c0_52 = arith.constant 0 : index
    %53 = vector.load %arg14[%c0_50, %c0_51, %c0_52] : memref<3x104x32xf32, #tpu.memory_space<vmem>>, vector<1x32x32xf32>
    %54 = vector.shape_cast %53 : vector<1x32x32xf32> to vector<32x32xf32>
    %cst_53 = arith.constant dense<0.000000e+00> : vector<16x32xf32>
    %55 = tpu.matmul %9, %54, %cst_53 {dimension_numbers = #tpu.dot_dimension_numbers<[1], [0], [0], [1], [0, 0, 1, 1], [], []>} : vector<16x32xf32>, vector<32x32xf32>, vector<16x32xf32> -> vector<16x32xf32>
    %c0_54 = arith.constant 0 : index
    %c32_55 = arith.constant 32 : index
    %c0_56 = arith.constant 0 : index
    %56 = vector.load %arg14[%c0_54, %c32_55, %c0_56] : memref<3x104x32xf32, #tpu.memory_space<vmem>>, vector<1x32x32xf32>
    %57 = vector.shape_cast %56 : vector<1x32x32xf32> to vector<32x32xf32>
    %cst_57 = arith.constant dense<0.000000e+00> : vector<16x32xf32>
    %58 = tpu.matmul %50, %57, %cst_57 {dimension_numbers = #tpu.dot_dimension_numbers<[1], [0], [0], [1], [0, 0, 1, 1], [], []>} : vector<16x32xf32>, vector<32x32xf32>, vector<16x32xf32> -> vector<16x32xf32>
    %59 = arith.addf %55, %58 : vector<16x32xf32>
    %c0_58 = arith.constant 0 : index
    %c64_59 = arith.constant 64 : index
    %c0_60 = arith.constant 0 : index
    %60 = vector.load %arg14[%c0_58, %c64_59, %c0_60] : memref<3x104x32xf32, #tpu.memory_space<vmem>>, vector<1x32x32xf32>
    %61 = vector.shape_cast %60 : vector<1x32x32xf32> to vector<32x32xf32>
    %cst_61 = arith.constant dense<0.000000e+00> : vector<16x32xf32>
    %62 = tpu.matmul %52, %61, %cst_61 {dimension_numbers = #tpu.dot_dimension_numbers<[1], [0], [0], [1], [0, 0, 1, 1], [], []>} : vector<16x32xf32>, vector<32x32xf32>, vector<16x32xf32> -> vector<16x32xf32>
    %63 = arith.addf %59, %62 : vector<16x32xf32>
    %c0_62 = arith.constant 0 : index
    %c96 = arith.constant 96 : index
    %c0_63 = arith.constant 0 : index
    %64 = vector.load %arg14[%c0_62, %c96, %c0_63] : memref<3x104x32xf32, #tpu.memory_space<vmem>>, vector<1x8x32xf32>
    %65 = vector.shape_cast %64 : vector<1x8x32xf32> to vector<8x32xf32>
    %cst_64 = arith.constant dense<0.000000e+00> : vector<16x32xf32>
    %66 = tpu.matmul %5, %65, %cst_64 {dimension_numbers = #tpu.dot_dimension_numbers<[1], [0], [0], [1], [0, 0, 1, 1], [], []>} : vector<16x8xf32>, vector<8x32xf32>, vector<16x32xf32> -> vector<16x32xf32>
    %67 = arith.addf %63, %66 : vector<16x32xf32>
    %cst_65 = arith.constant 0.000000e+00 : f32
    %68 = vector.broadcast %cst_65 : f32 to vector<16x32xf32>
    %69 = arith.maximumf %67, %68 : vector<16x32xf32>
    %c0_66 = arith.constant 0 : index
    %c0_67 = arith.constant 0 : index
    %c0_68 = arith.constant 0 : index
    %70 = vector.load %arg15[%c0_66, %c0_67, %c0_68] : memref<3x40x32xf32, #tpu.memory_space<vmem>>, vector<1x32x32xf32>
    %71 = vector.shape_cast %70 : vector<1x32x32xf32> to vector<32x32xf32>
    %cst_69 = arith.constant dense<0.000000e+00> : vector<16x32xf32>
    %72 = tpu.matmul %69, %71, %cst_69 {dimension_numbers = #tpu.dot_dimension_numbers<[1], [0], [0], [1], [0, 0, 1, 1], [], []>} : vector<16x32xf32>, vector<32x32xf32>, vector<16x32xf32> -> vector<16x32xf32>
    %c0_70 = arith.constant 0 : index
    %c32_71 = arith.constant 32 : index
    %c0_72 = arith.constant 0 : index
    %73 = vector.load %arg15[%c0_70, %c32_71, %c0_72] : memref<3x40x32xf32, #tpu.memory_space<vmem>>, vector<1x1x32xf32>
    %74 = vector.shape_cast %73 : vector<1x1x32xf32> to vector<1x32xf32>
    %75 = vector.broadcast %74 : vector<1x32xf32> to vector<16x32xf32>
    %76 = arith.addf %72, %75 : vector<16x32xf32>
    %cst_73 = arith.constant 1.000000e-03 : f32
    %77 = vector.broadcast %cst_73 : f32 to vector<16x32xf32>
    %78 = arith.mulf %77, %76 : vector<16x32xf32>
    %79 = arith.addf %9, %78 : vector<16x32xf32>
    %c0_74 = arith.constant 0 : index
    %c0_75 = arith.constant 0 : index
    %c0_76 = arith.constant 0 : index
    %80 = vector.load %arg16[%c0_74, %c0_75, %c0_76] : memref<3x40x32xf32, #tpu.memory_space<vmem>>, vector<1x32x32xf32>
    %81 = vector.shape_cast %80 : vector<1x32x32xf32> to vector<32x32xf32>
    %cst_77 = arith.constant dense<0.000000e+00> : vector<16x32xf32>
    %82 = tpu.matmul %79, %81, %cst_77 {dimension_numbers = #tpu.dot_dimension_numbers<[1], [0], [0], [1], [0, 0, 1, 1], [], []>} : vector<16x32xf32>, vector<32x32xf32>, vector<16x32xf32> -> vector<16x32xf32>
    %c0_78 = arith.constant 0 : index
    %c32_79 = arith.constant 32 : index
    %c0_80 = arith.constant 0 : index
    %83 = vector.load %arg16[%c0_78, %c32_79, %c0_80] : memref<3x40x32xf32, #tpu.memory_space<vmem>>, vector<1x1x32xf32>
    %84 = vector.shape_cast %83 : vector<1x1x32xf32> to vector<1x32xf32>
    %85 = vector.broadcast %84 : vector<1x32xf32> to vector<16x32xf32>
    %86 = arith.addf %82, %85 : vector<16x32xf32>
    %cst_81 = arith.constant 0.000000e+00 : f32
    %87 = vector.broadcast %cst_81 : f32 to vector<16x32xf32>
    %88 = arith.maximumf %86, %87 : vector<16x32xf32>
    %c0_82 = arith.constant 0 : index
    %c0_83 = arith.constant 0 : index
    %c0_84 = arith.constant 0 : index
    %89 = vector.load %arg17[%c0_82, %c0_83, %c0_84] : memref<3x40x1xf32, #tpu.memory_space<vmem>>, vector<1x32x1xf32>
    %90 = vector.shape_cast %89 : vector<1x32x1xf32> to vector<32x1xf32>
    %cst_85 = arith.constant dense<0.000000e+00> : vector<16x1xf32>
    %91 = tpu.matmul %88, %90, %cst_85 {dimension_numbers = #tpu.dot_dimension_numbers<[1], [0], [0], [1], [0, 0, 1, 1], [], []>} : vector<16x32xf32>, vector<32x1xf32>, vector<16x1xf32> -> vector<16x1xf32>
    %c0_86 = arith.constant 0 : index
    %c32_87 = arith.constant 32 : index
    %c0_88 = arith.constant 0 : index
    %92 = vector.load %arg17[%c0_86, %c32_87, %c0_88] : memref<3x40x1xf32, #tpu.memory_space<vmem>>, vector<1x1x1xf32>
    %93 = vector.shape_cast %92 : vector<1x1x1xf32> to vector<1x1xf32>
    %94 = vector.broadcast %93 : vector<1x1xf32> to vector<16x1xf32>
    %95 = arith.addf %91, %94 : vector<16x1xf32>
    %c1 = arith.constant 1 : index
    %c0_89 = arith.constant 0 : index
    %c0_90 = arith.constant 0 : index
    %96 = vector.load %arg11[%c1, %c0_89, %c0_90] : memref<3x32x128xf32, #tpu.memory_space<vmem>>, vector<1x32x128xf32>
    %97 = vector.shape_cast %96 : vector<1x32x128xf32> to vector<32x128xf32>
    %cst_91 = arith.constant dense<0.000000e+00> : vector<16x128xf32>
    %98 = tpu.matmul %79, %97, %cst_91 {dimension_numbers = #tpu.dot_dimension_numbers<[1], [0], [0], [1], [0, 0, 1, 1], [], []>} : vector<16x32xf32>, vector<32x128xf32>, vector<16x128xf32> -> vector<16x128xf32>
    %99 = arith.truncf %98 : vector<16x128xf32> to vector<16x128xbf16>
    %100 = vector.extract_strided_slice %99 {offsets = [0, 0], sizes = [16, 64], strides = [1, 1]} : vector<16x128xbf16> to vector<16x64xbf16>
    %cst_92 = arith.constant dense<0.000000e+00> : vector<33x64xf32>
    %101 = tpu.matmul %1, %100, %cst_92 {dimension_numbers = #tpu.dot_dimension_numbers<[1], [0], [0], [1], [0, 0, 1, 1], [], []>} : vector<33x16xbf16>, vector<16x64xbf16>, vector<33x64xf32> -> vector<33x64xf32>
    %102 = vector.extract_strided_slice %99 {offsets = [0, 64], sizes = [16, 64], strides = [1, 1]} : vector<16x128xbf16> to vector<16x64xbf16>
    %cst_93 = arith.constant dense<0.000000e+00> : vector<33x64xf32>
    %103 = tpu.matmul %0, %102, %cst_93 {dimension_numbers = #tpu.dot_dimension_numbers<[1], [0], [0], [1], [0, 0, 1, 1], [], []>} : vector<33x16xbf16>, vector<16x64xbf16>, vector<33x64xf32> -> vector<33x64xf32>
    %104 = arith.addf %101, %103 : vector<33x64xf32>
    %c1_94 = arith.constant 1 : index
    %c0_95 = arith.constant 0 : index
    %c0_96 = arith.constant 0 : index
    %105 = vector.load %arg12[%c1_94, %c0_95, %c0_96] : memref<3x8x64xf32, #tpu.memory_space<vmem>>, vector<1x8x64xf32>
    %106 = vector.shape_cast %105 : vector<1x8x64xf32> to vector<8x64xf32>
    %cst_97 = arith.constant dense<0.000000e+00> : vector<33x64xf32>
    %107 = tpu.matmul %4, %106, %cst_97 {dimension_numbers = #tpu.dot_dimension_numbers<[1], [0], [0], [1], [0, 0, 1, 1], [], []>} : vector<33x8xf32>, vector<8x64xf32>, vector<33x64xf32> -> vector<33x64xf32>
    %108 = arith.addf %104, %107 : vector<33x64xf32>
    %cst_98 = arith.constant 0.000000e+00 : f32
    %109 = vector.broadcast %cst_98 : f32 to vector<33x64xf32>
    %110 = arith.maximumf %108, %109 : vector<33x64xf32>
    %c1_99 = arith.constant 1 : index
    %c0_100 = arith.constant 0 : index
    %c0_101 = arith.constant 0 : index
    %111 = vector.load %arg13[%c1_99, %c0_100, %c0_101] : memref<3x72x64xf32, #tpu.memory_space<vmem>>, vector<1x64x64xf32>
    %112 = vector.shape_cast %111 : vector<1x64x64xf32> to vector<64x64xf32>
    %cst_102 = arith.constant dense<0.000000e+00> : vector<33x64xf32>
    %113 = tpu.matmul %110, %112, %cst_102 {dimension_numbers = #tpu.dot_dimension_numbers<[1], [0], [0], [1], [0, 0, 1, 1], [], []>} : vector<33x64xf32>, vector<64x64xf32>, vector<33x64xf32> -> vector<33x64xf32>
    %c1_103 = arith.constant 1 : index
    %c64_104 = arith.constant 64 : index
    %c0_105 = arith.constant 0 : index
    %114 = vector.load %arg13[%c1_103, %c64_104, %c0_105] : memref<3x72x64xf32, #tpu.memory_space<vmem>>, vector<1x1x64xf32>
    %115 = vector.shape_cast %114 : vector<1x1x64xf32> to vector<1x64xf32>
    %116 = vector.broadcast %115 : vector<1x64xf32> to vector<33x64xf32>
    %117 = arith.addf %113, %116 : vector<33x64xf32>
    %118 = arith.truncf %117 : vector<33x64xf32> to vector<33x64xbf16>
    %119 = vector.extract_strided_slice %118 {offsets = [0, 0], sizes = [33, 32], strides = [1, 1]} : vector<33x64xbf16> to vector<33x32xbf16>
    %cst_106 = arith.constant dense<0.000000e+00> : vector<16x32xf32>
    %120 = tpu.matmul %3, %119, %cst_106 {dimension_numbers = #tpu.dot_dimension_numbers<[1], [0], [0], [1], [0, 0, 1, 1], [], []>} : vector<16x33xbf16>, vector<33x32xbf16>, vector<16x32xf32> -> vector<16x32xf32>
    %121 = vector.extract_strided_slice %118 {offsets = [0, 32], sizes = [33, 32], strides = [1, 1]} : vector<33x64xbf16> to vector<33x32xbf16>
    %cst_107 = arith.constant dense<0.000000e+00> : vector<16x32xf32>
    %122 = tpu.matmul %2, %121, %cst_107 {dimension_numbers = #tpu.dot_dimension_numbers<[1], [0], [0], [1], [0, 0, 1, 1], [], []>} : vector<16x33xbf16>, vector<33x32xbf16>, vector<16x32xf32> -> vector<16x32xf32>
    %c1_108 = arith.constant 1 : index
    %c0_109 = arith.constant 0 : index
    %c0_110 = arith.constant 0 : index
    %123 = vector.load %arg14[%c1_108, %c0_109, %c0_110] : memref<3x104x32xf32, #tpu.memory_space<vmem>>, vector<1x32x32xf32>
    %124 = vector.shape_cast %123 : vector<1x32x32xf32> to vector<32x32xf32>
    %cst_111 = arith.constant dense<0.000000e+00> : vector<16x32xf32>
    %125 = tpu.matmul %79, %124, %cst_111 {dimension_numbers = #tpu.dot_dimension_numbers<[1], [0], [0], [1], [0, 0, 1, 1], [], []>} : vector<16x32xf32>, vector<32x32xf32>, vector<16x32xf32> -> vector<16x32xf32>
    %c1_112 = arith.constant 1 : index
    %c32_113 = arith.constant 32 : index
    %c0_114 = arith.constant 0 : index
    %126 = vector.load %arg14[%c1_112, %c32_113, %c0_114] : memref<3x104x32xf32, #tpu.memory_space<vmem>>, vector<1x32x32xf32>
    %127 = vector.shape_cast %126 : vector<1x32x32xf32> to vector<32x32xf32>
    %cst_115 = arith.constant dense<0.000000e+00> : vector<16x32xf32>
    %128 = tpu.matmul %120, %127, %cst_115 {dimension_numbers = #tpu.dot_dimension_numbers<[1], [0], [0], [1], [0, 0, 1, 1], [], []>} : vector<16x32xf32>, vector<32x32xf32>, vector<16x32xf32> -> vector<16x32xf32>
    %129 = arith.addf %125, %128 : vector<16x32xf32>
    %c1_116 = arith.constant 1 : index
    %c64_117 = arith.constant 64 : index
    %c0_118 = arith.constant 0 : index
    %130 = vector.load %arg14[%c1_116, %c64_117, %c0_118] : memref<3x104x32xf32, #tpu.memory_space<vmem>>, vector<1x32x32xf32>
    %131 = vector.shape_cast %130 : vector<1x32x32xf32> to vector<32x32xf32>
    %cst_119 = arith.constant dense<0.000000e+00> : vector<16x32xf32>
    %132 = tpu.matmul %122, %131, %cst_119 {dimension_numbers = #tpu.dot_dimension_numbers<[1], [0], [0], [1], [0, 0, 1, 1], [], []>} : vector<16x32xf32>, vector<32x32xf32>, vector<16x32xf32> -> vector<16x32xf32>
    %133 = arith.addf %129, %132 : vector<16x32xf32>
    %c1_120 = arith.constant 1 : index
    %c96_121 = arith.constant 96 : index
    %c0_122 = arith.constant 0 : index
    %134 = vector.load %arg14[%c1_120, %c96_121, %c0_122] : memref<3x104x32xf32, #tpu.memory_space<vmem>>, vector<1x8x32xf32>
    %135 = vector.shape_cast %134 : vector<1x8x32xf32> to vector<8x32xf32>
    %cst_123 = arith.constant dense<0.000000e+00> : vector<16x32xf32>
    %136 = tpu.matmul %5, %135, %cst_123 {dimension_numbers = #tpu.dot_dimension_numbers<[1], [0], [0], [1], [0, 0, 1, 1], [], []>} : vector<16x8xf32>, vector<8x32xf32>, vector<16x32xf32> -> vector<16x32xf32>
    %137 = arith.addf %133, %136 : vector<16x32xf32>
    %cst_124 = arith.constant 0.000000e+00 : f32
    %138 = vector.broadcast %cst_124 : f32 to vector<16x32xf32>
    %139 = arith.maximumf %137, %138 : vector<16x32xf32>
    %c1_125 = arith.constant 1 : index
    %c0_126 = arith.constant 0 : index
    %c0_127 = arith.constant 0 : index
    %140 = vector.load %arg15[%c1_125, %c0_126, %c0_127] : memref<3x40x32xf32, #tpu.memory_space<vmem>>, vector<1x32x32xf32>
    %141 = vector.shape_cast %140 : vector<1x32x32xf32> to vector<32x32xf32>
    %cst_128 = arith.constant dense<0.000000e+00> : vector<16x32xf32>
    %142 = tpu.matmul %139, %141, %cst_128 {dimension_numbers = #tpu.dot_dimension_numbers<[1], [0], [0], [1], [0, 0, 1, 1], [], []>} : vector<16x32xf32>, vector<32x32xf32>, vector<16x32xf32> -> vector<16x32xf32>
    %c1_129 = arith.constant 1 : index
    %c32_130 = arith.constant 32 : index
    %c0_131 = arith.constant 0 : index
    %143 = vector.load %arg15[%c1_129, %c32_130, %c0_131] : memref<3x40x32xf32, #tpu.memory_space<vmem>>, vector<1x1x32xf32>
    %144 = vector.shape_cast %143 : vector<1x1x32xf32> to vector<1x32xf32>
    %145 = vector.broadcast %144 : vector<1x32xf32> to vector<16x32xf32>
    %146 = arith.addf %142, %145 : vector<16x32xf32>
    %cst_132 = arith.constant 1.000000e-03 : f32
    %147 = vector.broadcast %cst_132 : f32 to vector<16x32xf32>
    %148 = arith.mulf %147, %146 : vector<16x32xf32>
    %149 = arith.addf %79, %148 : vector<16x32xf32>
    %c1_133 = arith.constant 1 : index
    %c0_134 = arith.constant 0 : index
    %c0_135 = arith.constant 0 : index
    %150 = vector.load %arg16[%c1_133, %c0_134, %c0_135] : memref<3x40x32xf32, #tpu.memory_space<vmem>>, vector<1x32x32xf32>
    %151 = vector.shape_cast %150 : vector<1x32x32xf32> to vector<32x32xf32>
    %cst_136 = arith.constant dense<0.000000e+00> : vector<16x32xf32>
    %152 = tpu.matmul %149, %151, %cst_136 {dimension_numbers = #tpu.dot_dimension_numbers<[1], [0], [0], [1], [0, 0, 1, 1], [], []>} : vector<16x32xf32>, vector<32x32xf32>, vector<16x32xf32> -> vector<16x32xf32>
    %c1_137 = arith.constant 1 : index
    %c32_138 = arith.constant 32 : index
    %c0_139 = arith.constant 0 : index
    %153 = vector.load %arg16[%c1_137, %c32_138, %c0_139] : memref<3x40x32xf32, #tpu.memory_space<vmem>>, vector<1x1x32xf32>
    %154 = vector.shape_cast %153 : vector<1x1x32xf32> to vector<1x32xf32>
    %155 = vector.broadcast %154 : vector<1x32xf32> to vector<16x32xf32>
    %156 = arith.addf %152, %155 : vector<16x32xf32>
    %cst_140 = arith.constant 0.000000e+00 : f32
    %157 = vector.broadcast %cst_140 : f32 to vector<16x32xf32>
    %158 = arith.maximumf %156, %157 : vector<16x32xf32>
    %c1_141 = arith.constant 1 : index
    %c0_142 = arith.constant 0 : index
    %c0_143 = arith.constant 0 : index
    %159 = vector.load %arg17[%c1_141, %c0_142, %c0_143] : memref<3x40x1xf32, #tpu.memory_space<vmem>>, vector<1x32x1xf32>
    %160 = vector.shape_cast %159 : vector<1x32x1xf32> to vector<32x1xf32>
    %cst_144 = arith.constant dense<0.000000e+00> : vector<16x1xf32>
    %161 = tpu.matmul %158, %160, %cst_144 {dimension_numbers = #tpu.dot_dimension_numbers<[1], [0], [0], [1], [0, 0, 1, 1], [], []>} : vector<16x32xf32>, vector<32x1xf32>, vector<16x1xf32> -> vector<16x1xf32>
    %c1_145 = arith.constant 1 : index
    %c32_146 = arith.constant 32 : index
    %c0_147 = arith.constant 0 : index
    %162 = vector.load %arg17[%c1_145, %c32_146, %c0_147] : memref<3x40x1xf32, #tpu.memory_space<vmem>>, vector<1x1x1xf32>
    %163 = vector.shape_cast %162 : vector<1x1x1xf32> to vector<1x1xf32>
    %164 = vector.broadcast %163 : vector<1x1xf32> to vector<16x1xf32>
    %165 = arith.addf %161, %164 : vector<16x1xf32>
    %c2 = arith.constant 2 : index
    %c0_148 = arith.constant 0 : index
    %c0_149 = arith.constant 0 : index
    %166 = vector.load %arg11[%c2, %c0_148, %c0_149] : memref<3x32x128xf32, #tpu.memory_space<vmem>>, vector<1x32x128xf32>
    %167 = vector.shape_cast %166 : vector<1x32x128xf32> to vector<32x128xf32>
    %cst_150 = arith.constant dense<0.000000e+00> : vector<16x128xf32>
    %168 = tpu.matmul %149, %167, %cst_150 {dimension_numbers = #tpu.dot_dimension_numbers<[1], [0], [0], [1], [0, 0, 1, 1], [], []>} : vector<16x32xf32>, vector<32x128xf32>, vector<16x128xf32> -> vector<16x128xf32>
    %169 = arith.truncf %168 : vector<16x128xf32> to vector<16x128xbf16>
    %170 = vector.extract_strided_slice %169 {offsets = [0, 0], sizes = [16, 64], strides = [1, 1]} : vector<16x128xbf16> to vector<16x64xbf16>
    %cst_151 = arith.constant dense<0.000000e+00> : vector<33x64xf32>
    %171 = tpu.matmul %1, %170, %cst_151 {dimension_numbers = #tpu.dot_dimension_numbers<[1], [0], [0], [1], [0, 0, 1, 1], [], []>} : vector<33x16xbf16>, vector<16x64xbf16>, vector<33x64xf32> -> vector<33x64xf32>
    %172 = vector.extract_strided_slice %169 {offsets = [0, 64], sizes = [16, 64], strides = [1, 1]} : vector<16x128xbf16> to vector<16x64xbf16>
    %cst_152 = arith.constant dense<0.000000e+00> : vector<33x64xf32>
    %173 = tpu.matmul %0, %172, %cst_152 {dimension_numbers = #tpu.dot_dimension_numbers<[1], [0], [0], [1], [0, 0, 1, 1], [], []>} : vector<33x16xbf16>, vector<16x64xbf16>, vector<33x64xf32> -> vector<33x64xf32>
    %174 = arith.addf %171, %173 : vector<33x64xf32>
    %c2_153 = arith.constant 2 : index
    %c0_154 = arith.constant 0 : index
    %c0_155 = arith.constant 0 : index
    %175 = vector.load %arg12[%c2_153, %c0_154, %c0_155] : memref<3x8x64xf32, #tpu.memory_space<vmem>>, vector<1x8x64xf32>
    %176 = vector.shape_cast %175 : vector<1x8x64xf32> to vector<8x64xf32>
    %cst_156 = arith.constant dense<0.000000e+00> : vector<33x64xf32>
    %177 = tpu.matmul %4, %176, %cst_156 {dimension_numbers = #tpu.dot_dimension_numbers<[1], [0], [0], [1], [0, 0, 1, 1], [], []>} : vector<33x8xf32>, vector<8x64xf32>, vector<33x64xf32> -> vector<33x64xf32>
    %178 = arith.addf %174, %177 : vector<33x64xf32>
    %cst_157 = arith.constant 0.000000e+00 : f32
    %179 = vector.broadcast %cst_157 : f32 to vector<33x64xf32>
    %180 = arith.maximumf %178, %179 : vector<33x64xf32>
    %c2_158 = arith.constant 2 : index
    %c0_159 = arith.constant 0 : index
    %c0_160 = arith.constant 0 : index
    %181 = vector.load %arg13[%c2_158, %c0_159, %c0_160] : memref<3x72x64xf32, #tpu.memory_space<vmem>>, vector<1x64x64xf32>
    %182 = vector.shape_cast %181 : vector<1x64x64xf32> to vector<64x64xf32>
    %cst_161 = arith.constant dense<0.000000e+00> : vector<33x64xf32>
    %183 = tpu.matmul %180, %182, %cst_161 {dimension_numbers = #tpu.dot_dimension_numbers<[1], [0], [0], [1], [0, 0, 1, 1], [], []>} : vector<33x64xf32>, vector<64x64xf32>, vector<33x64xf32> -> vector<33x64xf32>
    %c2_162 = arith.constant 2 : index
    %c64_163 = arith.constant 64 : index
    %c0_164 = arith.constant 0 : index
    %184 = vector.load %arg13[%c2_162, %c64_163, %c0_164] : memref<3x72x64xf32, #tpu.memory_space<vmem>>, vector<1x1x64xf32>
    %185 = vector.shape_cast %184 : vector<1x1x64xf32> to vector<1x64xf32>
    %186 = vector.broadcast %185 : vector<1x64xf32> to vector<33x64xf32>
    %187 = arith.addf %183, %186 : vector<33x64xf32>
    %188 = arith.truncf %187 : vector<33x64xf32> to vector<33x64xbf16>
    %189 = vector.extract_strided_slice %188 {offsets = [0, 0], sizes = [33, 32], strides = [1, 1]} : vector<33x64xbf16> to vector<33x32xbf16>
    %cst_165 = arith.constant dense<0.000000e+00> : vector<16x32xf32>
    %190 = tpu.matmul %3, %189, %cst_165 {dimension_numbers = #tpu.dot_dimension_numbers<[1], [0], [0], [1], [0, 0, 1, 1], [], []>} : vector<16x33xbf16>, vector<33x32xbf16>, vector<16x32xf32> -> vector<16x32xf32>
    %191 = vector.extract_strided_slice %188 {offsets = [0, 32], sizes = [33, 32], strides = [1, 1]} : vector<33x64xbf16> to vector<33x32xbf16>
    %cst_166 = arith.constant dense<0.000000e+00> : vector<16x32xf32>
    %192 = tpu.matmul %2, %191, %cst_166 {dimension_numbers = #tpu.dot_dimension_numbers<[1], [0], [0], [1], [0, 0, 1, 1], [], []>} : vector<16x33xbf16>, vector<33x32xbf16>, vector<16x32xf32> -> vector<16x32xf32>
    %c2_167 = arith.constant 2 : index
    %c0_168 = arith.constant 0 : index
    %c0_169 = arith.constant 0 : index
    %193 = vector.load %arg14[%c2_167, %c0_168, %c0_169] : memref<3x104x32xf32, #tpu.memory_space<vmem>>, vector<1x32x32xf32>
    %194 = vector.shape_cast %193 : vector<1x32x32xf32> to vector<32x32xf32>
    %cst_170 = arith.constant dense<0.000000e+00> : vector<16x32xf32>
    %195 = tpu.matmul %149, %194, %cst_170 {dimension_numbers = #tpu.dot_dimension_numbers<[1], [0], [0], [1], [0, 0, 1, 1], [], []>} : vector<16x32xf32>, vector<32x32xf32>, vector<16x32xf32> -> vector<16x32xf32>
    %c2_171 = arith.constant 2 : index
    %c32_172 = arith.constant 32 : index
    %c0_173 = arith.constant 0 : index
    %196 = vector.load %arg14[%c2_171, %c32_172, %c0_173] : memref<3x104x32xf32, #tpu.memory_space<vmem>>, vector<1x32x32xf32>
    %197 = vector.shape_cast %196 : vector<1x32x32xf32> to vector<32x32xf32>
    %cst_174 = arith.constant dense<0.000000e+00> : vector<16x32xf32>
    %198 = tpu.matmul %190, %197, %cst_174 {dimension_numbers = #tpu.dot_dimension_numbers<[1], [0], [0], [1], [0, 0, 1, 1], [], []>} : vector<16x32xf32>, vector<32x32xf32>, vector<16x32xf32> -> vector<16x32xf32>
    %199 = arith.addf %195, %198 : vector<16x32xf32>
    %c2_175 = arith.constant 2 : index
    %c64_176 = arith.constant 64 : index
    %c0_177 = arith.constant 0 : index
    %200 = vector.load %arg14[%c2_175, %c64_176, %c0_177] : memref<3x104x32xf32, #tpu.memory_space<vmem>>, vector<1x32x32xf32>
    %201 = vector.shape_cast %200 : vector<1x32x32xf32> to vector<32x32xf32>
    %cst_178 = arith.constant dense<0.000000e+00> : vector<16x32xf32>
    %202 = tpu.matmul %192, %201, %cst_178 {dimension_numbers = #tpu.dot_dimension_numbers<[1], [0], [0], [1], [0, 0, 1, 1], [], []>} : vector<16x32xf32>, vector<32x32xf32>, vector<16x32xf32> -> vector<16x32xf32>
    %203 = arith.addf %199, %202 : vector<16x32xf32>
    %c2_179 = arith.constant 2 : index
    %c96_180 = arith.constant 96 : index
    %c0_181 = arith.constant 0 : index
    %204 = vector.load %arg14[%c2_179, %c96_180, %c0_181] : memref<3x104x32xf32, #tpu.memory_space<vmem>>, vector<1x8x32xf32>
    %205 = vector.shape_cast %204 : vector<1x8x32xf32> to vector<8x32xf32>
    %cst_182 = arith.constant dense<0.000000e+00> : vector<16x32xf32>
    %206 = tpu.matmul %5, %205, %cst_182 {dimension_numbers = #tpu.dot_dimension_numbers<[1], [0], [0], [1], [0, 0, 1, 1], [], []>} : vector<16x8xf32>, vector<8x32xf32>, vector<16x32xf32> -> vector<16x32xf32>
    %207 = arith.addf %203, %206 : vector<16x32xf32>
    %cst_183 = arith.constant 0.000000e+00 : f32
    %208 = vector.broadcast %cst_183 : f32 to vector<16x32xf32>
    %209 = arith.maximumf %207, %208 : vector<16x32xf32>
    %c2_184 = arith.constant 2 : index
    %c0_185 = arith.constant 0 : index
    %c0_186 = arith.constant 0 : index
    %210 = vector.load %arg15[%c2_184, %c0_185, %c0_186] : memref<3x40x32xf32, #tpu.memory_space<vmem>>, vector<1x32x32xf32>
    %211 = vector.shape_cast %210 : vector<1x32x32xf32> to vector<32x32xf32>
    %cst_187 = arith.constant dense<0.000000e+00> : vector<16x32xf32>
    %212 = tpu.matmul %209, %211, %cst_187 {dimension_numbers = #tpu.dot_dimension_numbers<[1], [0], [0], [1], [0, 0, 1, 1], [], []>} : vector<16x32xf32>, vector<32x32xf32>, vector<16x32xf32> -> vector<16x32xf32>
    %c2_188 = arith.constant 2 : index
    %c32_189 = arith.constant 32 : index
    %c0_190 = arith.constant 0 : index
    %213 = vector.load %arg15[%c2_188, %c32_189, %c0_190] : memref<3x40x32xf32, #tpu.memory_space<vmem>>, vector<1x1x32xf32>
    %214 = vector.shape_cast %213 : vector<1x1x32xf32> to vector<1x32xf32>
    %215 = vector.broadcast %214 : vector<1x32xf32> to vector<16x32xf32>
    %216 = arith.addf %212, %215 : vector<16x32xf32>
    %cst_191 = arith.constant 1.000000e-03 : f32
    %217 = vector.broadcast %cst_191 : f32 to vector<16x32xf32>
    %218 = arith.mulf %217, %216 : vector<16x32xf32>
    %219 = arith.addf %149, %218 : vector<16x32xf32>
    %c2_192 = arith.constant 2 : index
    %c0_193 = arith.constant 0 : index
    %c0_194 = arith.constant 0 : index
    %220 = vector.load %arg16[%c2_192, %c0_193, %c0_194] : memref<3x40x32xf32, #tpu.memory_space<vmem>>, vector<1x32x32xf32>
    %221 = vector.shape_cast %220 : vector<1x32x32xf32> to vector<32x32xf32>
    %cst_195 = arith.constant dense<0.000000e+00> : vector<16x32xf32>
    %222 = tpu.matmul %219, %221, %cst_195 {dimension_numbers = #tpu.dot_dimension_numbers<[1], [0], [0], [1], [0, 0, 1, 1], [], []>} : vector<16x32xf32>, vector<32x32xf32>, vector<16x32xf32> -> vector<16x32xf32>
    %c2_196 = arith.constant 2 : index
    %c32_197 = arith.constant 32 : index
    %c0_198 = arith.constant 0 : index
    %223 = vector.load %arg16[%c2_196, %c32_197, %c0_198] : memref<3x40x32xf32, #tpu.memory_space<vmem>>, vector<1x1x32xf32>
    %224 = vector.shape_cast %223 : vector<1x1x32xf32> to vector<1x32xf32>
    %225 = vector.broadcast %224 : vector<1x32xf32> to vector<16x32xf32>
    %226 = arith.addf %222, %225 : vector<16x32xf32>
    %cst_199 = arith.constant 0.000000e+00 : f32
    %227 = vector.broadcast %cst_199 : f32 to vector<16x32xf32>
    %228 = arith.maximumf %226, %227 : vector<16x32xf32>
    %c2_200 = arith.constant 2 : index
    %c0_201 = arith.constant 0 : index
    %c0_202 = arith.constant 0 : index
    %229 = vector.load %arg17[%c2_200, %c0_201, %c0_202] : memref<3x40x1xf32, #tpu.memory_space<vmem>>, vector<1x32x1xf32>
    %230 = vector.shape_cast %229 : vector<1x32x1xf32> to vector<32x1xf32>
    %cst_203 = arith.constant dense<0.000000e+00> : vector<16x1xf32>
    %231 = tpu.matmul %228, %230, %cst_203 {dimension_numbers = #tpu.dot_dimension_numbers<[1], [0], [0], [1], [0, 0, 1, 1], [], []>} : vector<16x32xf32>, vector<32x1xf32>, vector<16x1xf32> -> vector<16x1xf32>
    %c2_204 = arith.constant 2 : index
    %c32_205 = arith.constant 32 : index
    %c0_206 = arith.constant 0 : index
    %232 = vector.load %arg17[%c2_204, %c32_205, %c0_206] : memref<3x40x1xf32, #tpu.memory_space<vmem>>, vector<1x1x1xf32>
    %233 = vector.shape_cast %232 : vector<1x1x1xf32> to vector<1x1xf32>
    %234 = vector.broadcast %233 : vector<1x1xf32> to vector<16x1xf32>
    %235 = arith.addf %231, %234 : vector<16x1xf32>
    %236 = tpu.concatenate %25, %95, %165, %235 in 1 : vector<16x1xf32>, vector<16x1xf32>, vector<16x1xf32>, vector<16x1xf32> -> vector<16x4xf32>
    %cst_207 = arith.constant dense<0.000000e+00> : vector<16x4xf32>
    %237 = tpu.matmul %6, %236, %cst_207 {dimension_numbers = #tpu.dot_dimension_numbers<[1], [0], [0], [1], [0, 0, 1, 1], [], []>} : vector<16x16xf32>, vector<16x4xf32>, vector<16x4xf32> -> vector<16x4xf32>
    %238 = vector.broadcast %7 : vector<16x1xf32> to vector<16x4xf32>
    %239 = arith.subf %237, %238 : vector<16x4xf32>
    %240 = arith.mulf %239, %239 : vector<16x4xf32>
    %cst_208 = arith.constant dense<0.000000e+00> : vector<4xf32>
    %241 = vector.multi_reduction <add>, %240, %cst_208 [0] : vector<16x4xf32> to vector<4xf32>
    %242 = vector.shape_cast %241 : vector<4xf32> to vector<1x4xf32>
    %cst_209 = arith.constant 1.600000e+01 : f32
    %243 = vector.broadcast %cst_209 : f32 to vector<1x4xf32>
    %244 = arith.divf %242, %243 : vector<1x4xf32>
    %245 = vector.broadcast %8 : vector<16x1xf32> to vector<16x4xf32>
    %246 = arith.subf %236, %245 : vector<16x4xf32>
    %247 = arith.mulf %246, %246 : vector<16x4xf32>
    %cst_210 = arith.constant dense<0.000000e+00> : vector<4xf32>
    %248 = vector.multi_reduction <add>, %247, %cst_210 [0] : vector<16x4xf32> to vector<4xf32>
    %249 = vector.shape_cast %248 : vector<4xf32> to vector<1x4xf32>
    %cst_211 = arith.constant 1.600000e+01 : f32
    %250 = vector.broadcast %cst_211 : f32 to vector<1x4xf32>
    %251 = arith.divf %249, %250 : vector<1x4xf32>
    %252 = arith.mulf %8, %8 : vector<16x1xf32>
    %253 = vector.shape_cast %252 : vector<16x1xf32> to vector<1x16x1xf32>
    %cst_212 = arith.constant dense<0.000000e+00> : vector<1xf32>
    %254 = vector.multi_reduction <add>, %253, %cst_212 [1, 2] : vector<1x16x1xf32> to vector<1xf32>
    %255 = vector.shape_cast %254 : vector<1xf32> to vector<1x1x1xf32>
    %256 = vector.extract %255[0, 0, 0] : f32 from vector<1x1x1xf32>
    %257 = vector.broadcast %256 : f32 to vector<1x1xf32>
    %258 = math.sqrt %257 : vector<1x1xf32>
    %259 = arith.mulf %246, %246 : vector<16x4xf32>
    %cst_213 = arith.constant dense<0.000000e+00> : vector<4xf32>
    %260 = vector.multi_reduction <add>, %259, %cst_213 [0] : vector<16x4xf32> to vector<4xf32>
    %261 = vector.shape_cast %260 : vector<4xf32> to vector<1x4xf32>
    %262 = math.sqrt %261 : vector<1x4xf32>
    %263 = vector.broadcast %258 : vector<1x1xf32> to vector<1x4xf32>
    %264 = arith.divf %262, %263 : vector<1x4xf32>
    %c0_214 = arith.constant 0 : index
    %c0_215 = arith.constant 0 : index
    %265 = vector.load %arg9[%c0_214, %c0_215] : memref<1x4xf32, #tpu.memory_space<vmem>>, vector<1x4xf32>
    %266 = arith.mulf %244, %265 : vector<1x4xf32>
    %cst_216 = arith.constant dense<0.000000e+00> : vector<1xf32>
    %267 = vector.multi_reduction <add>, %266, %cst_216 [1] : vector<1x4xf32> to vector<1xf32>
    %268 = vector.shape_cast %267 : vector<1xf32> to vector<1x1xf32>
    %cst_217 = arith.constant 0.000000e+00 : f32
    %269 = vector.broadcast %cst_217 : f32 to vector<1x4xf32>
    %270 = vector.broadcast %268 : vector<1x1xf32> to vector<1x4xf32>
    %271 = arith.addf %269, %270 : vector<1x4xf32>
    %272 = tpu.concatenate %244, %251, %264, %271 in 0 : vector<1x4xf32>, vector<1x4xf32>, vector<1x4xf32>, vector<1x4xf32> -> vector<4x4xf32>
    %c0_218 = arith.constant 0 : index
    %c0_219 = arith.constant 0 : index
    %273 = vector.load %arg19[%c0_218, %c0_219] : memref<4x4xf32, #tpu.memory_space<vmem>>, vector<4x4xf32>
    tpu.vector_store %arg19[%c0_218, %c0_219], %272 {strides = array<i32>} : memref<4x4xf32, #tpu.memory_space<vmem>>, vector<4x4xf32>,
    %c0_220 = arith.constant 0 : index
    %c0_221 = arith.constant 0 : index
    %274 = vector.load %arg10[%c0_220, %c0_221] : memref<4x4xf32, #tpu.memory_space<vmem>>, vector<4x4xf32>
    %cst_222 = arith.constant dense<0.000000e+00> : vector<4x16xf32>
    %275 = tpu.matmul %274, %236, %cst_222 {dimension_numbers = #tpu.dot_dimension_numbers<[1], [1], [0], [0], [0, 0, 1, 0], [], []>} : vector<4x4xf32>, vector<16x4xf32>, vector<4x16xf32> -> vector<4x16xf32>
    %c0_223 = arith.constant 0 : index
    %c0_224 = arith.constant 0 : index
    %276 = vector.load %arg18[%c0_223, %c0_224] : memref<4x16xf32, #tpu.memory_space<vmem>>, vector<4x16xf32>
    tpu.vector_store %arg18[%c0_223, %c0_224], %275 {strides = array<i32>} : memref<4x16xf32, #tpu.memory_space<vmem>>, vector<4x16xf32>,
    return
  }
}

</mosaic_0001>

<llo_original>
// kernel: tpu_custom_call.1
$region0: #{tpu_custom_call.1}
  #allocation0 [shape = 'u32[]', space=smem, size = 0x4, offset = 0x4, fixed_abs, tag = 'smem constant byte address 0x4 - core index']
  #allocation1 [shape = 'u32[144,128]{1,0:T(1,128)}', space=vmem, size = 0x12000, scoped, tag = 'internal scratch']
  %s0 = inlined_call_operand.vmem [shape: bf16[33,16], index: 0, kind: input, shape index: {}]
  %s1 = inlined_call_operand.vmem [shape: bf16[33,16], index: 1, kind: input, shape index: {}]
  %s2 = inlined_call_operand.vmem [shape: bf16[16,33], index: 2, kind: input, shape index: {}]
  %s3 = inlined_call_operand.vmem [shape: bf16[16,33], index: 3, kind: input, shape index: {}]
  %s4 = inlined_call_operand.vmem [shape: f32[33,8], index: 4, kind: input, shape index: {}]
  %s5 = inlined_call_operand.vmem [shape: f32[16,8], index: 5, kind: input, shape index: {}]
  %s6 = inlined_call_operand.vmem [shape: f32[16,16], index: 6, kind: input, shape index: {}]
  %s7 = inlined_call_operand.vmem [shape: f32[16,1], index: 7, kind: input, shape index: {}]
  %s8 = inlined_call_operand.vmem [shape: f32[16,1], index: 8, kind: input, shape index: {}]
  %s9 = inlined_call_operand.vmem [shape: f32[1,4], index: 9, kind: input, shape index: {}]
  %s10 = inlined_call_operand.vmem [shape: f32[4,4], index: 10, kind: input, shape index: {}]
  %s11 = inlined_call_operand.vmem [shape: f32[3,32,128], index: 11, kind: input, shape index: {}]
  %s12 = inlined_call_operand.vmem [shape: f32[3,8,64], index: 12, kind: input, shape index: {}]
  %s13 = inlined_call_operand.vmem [shape: f32[3,72,64], index: 13, kind: input, shape index: {}]
  %s14 = inlined_call_operand.vmem [shape: f32[3,104,32], index: 14, kind: input, shape index: {}]
  %s15 = inlined_call_operand.vmem [shape: f32[3,40,32], index: 15, kind: input, shape index: {}]
  %s16 = inlined_call_operand.vmem [shape: f32[3,40,32], index: 16, kind: input, shape index: {}]
  %s17 = inlined_call_operand.vmem [shape: f32[3,40,1], index: 17, kind: input, shape index: {}]
  %s18 = inlined_call_operand.hbm [shape: f32[4,16], index: 18, kind: output, shape index: {0}]
  %s19 = inlined_call_operand.hbm [shape: f32[4,4], index: 19, kind: output, shape index: {1}]
  %20 = xla_tuple %s18, %s19
  %s21 = sld [smem:[#allocation0]]
  $region90: #{tpu_custom_call.1} parent=0
    _
  %s23 = ssub.s32 1, %s21
  %s24 = scalar_select 0, %s23, %s21
  $region1: #{tpu_custom_call.1} parent=0
    #allocation2 [shape = 'u8[2048]{0}', space=vmem, size = 0x800, scoped, tag = 'output window, operand 0, single buffered']
    #allocation3 [shape = 's32[1]{0}', space=sflag, size = 0x4, scoped, tag = 'scoped memory for tpu_custom_call.1']
    #allocation4 [shape = 'u8[2048]{0}', space=vmem, size = 0x800, scoped, tag = 'output window, operand 1, single buffered']
    #allocation5 [shape = 's32[1]{0}', space=sflag, size = 0x4, scoped, tag = 'scoped memory for tpu_custom_call.1']
    %25 = vsyncpa [#allocation3], 0
    %26 = vsyncpa [#allocation5], 0
    // Predicated region
    $region2: #{tpu_custom_call.1} parent=1 // pred_check
      _
    $region3: #{tpu_custom_call.1} parent=1 // pred_check_branch
      %28 = sbr.rel (0) target = $region5
    $region4: #{tpu_custom_call.1} parent=1 // pred_region
      _
    $region5: #{tpu_custom_call.1} parent=1 // pred_fallthru
      _
    // Predicated region
    $region6: #{tpu_custom_call.1} parent=1 // pred_check
      _
    $region7: #{tpu_custom_call.1} parent=1 // pred_check_branch
      %30 = sbr.rel (0) target = $region9
    $region8: #{tpu_custom_call.1} parent=1 // pred_region
      _
    $region9: #{tpu_custom_call.1} parent=1 // pred_fallthru
      _
    // Predicated region
    $region10: #{tpu_custom_call.1} parent=1 // pred_check
      _
    $region11: #{tpu_custom_call.1} parent=1 // pred_check_branch
      %32 = sbr.rel (0) target = $region13
    $region12: #{tpu_custom_call.1} parent=1 // pred_region
      _
    $region13: #{tpu_custom_call.1} parent=1 // pred_fallthru
      _
    // Predicated region
    $region14: #{tpu_custom_call.1} parent=1 // pred_check
      _
    $region15: #{tpu_custom_call.1} parent=1 // pred_check_branch
      %34 = sbr.rel (0) target = $region17
    $region16: #{tpu_custom_call.1} parent=1 // pred_region
      _
    $region17: #{tpu_custom_call.1} parent=1 // pred_fallthru
      _
    // Predicated region
    $region18: #{tpu_custom_call.1} parent=1 // pred_check
      _
    $region19: #{tpu_custom_call.1} parent=1 // pred_check_branch
      %36 = sbr.rel (0) target = $region21
    $region20: #{tpu_custom_call.1} parent=1 // pred_region
      _
    $region21: #{tpu_custom_call.1} parent=1 // pred_fallthru
      _
    // Predicated region
    $region22: #{tpu_custom_call.1} parent=1 // pred_check
      _
    $region23: #{tpu_custom_call.1} parent=1 // pred_check_branch
      %38 = sbr.rel (0) target = $region25
    $region24: #{tpu_custom_call.1} parent=1 // pred_region
      _
    $region25: #{tpu_custom_call.1} parent=1 // pred_fallthru
      _
    // Predicated region
    $region26: #{tpu_custom_call.1} parent=1 // pred_check
      _
    $region27: #{tpu_custom_call.1} parent=1 // pred_check_branch
      %40 = sbr.rel (0) target = $region29
    $region28: #{tpu_custom_call.1} parent=1 // pred_region
      _
    $region29: #{tpu_custom_call.1} parent=1 // pred_fallthru
      _
    // Predicated region
    $region30: #{tpu_custom_call.1} parent=1 // pred_check
      _
    $region31: #{tpu_custom_call.1} parent=1 // pred_check_branch
      %42 = sbr.rel (0) target = $region33
    $region32: #{tpu_custom_call.1} parent=1 // pred_region
      _
    $region33: #{tpu_custom_call.1} parent=1 // pred_fallthru
      _
    // Predicated region
    $region34: #{tpu_custom_call.1} parent=1 // pred_check
      _
    $region35: #{tpu_custom_call.1} parent=1 // pred_check_branch
      %44 = sbr.rel (0) target = $region37
    $region36: #{tpu_custom_call.1} parent=1 // pred_region
      _
    $region37: #{tpu_custom_call.1} parent=1 // pred_fallthru
      _
    // Predicated region
    $region38: #{tpu_custom_call.1} parent=1 // pred_check
      _
    $region39: #{tpu_custom_call.1} parent=1 // pred_check_branch
      %46 = sbr.rel (0) target = $region41
    $region40: #{tpu_custom_call.1} parent=1 // pred_region
      _
    $region41: #{tpu_custom_call.1} parent=1 // pred_fallthru
      _
    // Predicated region
    $region42: #{tpu_custom_call.1} parent=1 // pred_check
      _
    $region43: #{tpu_custom_call.1} parent=1 // pred_check_branch
      %48 = sbr.rel (0) target = $region45
    $region44: #{tpu_custom_call.1} parent=1 // pred_region
      _
    $region45: #{tpu_custom_call.1} parent=1 // pred_fallthru
      _
    // Predicated region
    $region46: #{tpu_custom_call.1} parent=1 // pred_check
      _
    $region47: #{tpu_custom_call.1} parent=1 // pred_check_branch
      %50 = sbr.rel (0) target = $region49
    $region48: #{tpu_custom_call.1} parent=1 // pred_region
      _
    $region49: #{tpu_custom_call.1} parent=1 // pred_fallthru
      _
    // Predicated region
    $region50: #{tpu_custom_call.1} parent=1 // pred_check
      _
    $region51: #{tpu_custom_call.1} parent=1 // pred_check_branch
      %52 = sbr.rel (0) target = $region53
    $region52: #{tpu_custom_call.1} parent=1 // pred_region
      _
    $region53: #{tpu_custom_call.1} parent=1 // pred_fallthru
      _
    // Predicated region
    $region54: #{tpu_custom_call.1} parent=1 // pred_check
      _
    $region55: #{tpu_custom_call.1} parent=1 // pred_check_branch
      %54 = sbr.rel (0) target = $region57
    $region56: #{tpu_custom_call.1} parent=1 // pred_region
      _
    $region57: #{tpu_custom_call.1} parent=1 // pred_fallthru
      _
    // Predicated region
    $region58: #{tpu_custom_call.1} parent=1 // pred_check
      _
    $region59: #{tpu_custom_call.1} parent=1 // pred_check_branch
      %56 = sbr.rel (0) target = $region61
    $region60: #{tpu_custom_call.1} parent=1 // pred_region
      _
    $region61: #{tpu_custom_call.1} parent=1 // pred_fallthru
      _
    // Predicated region
    $region62: #{tpu_custom_call.1} parent=1 // pred_check
      _
    $region63: #{tpu_custom_call.1} parent=1 // pred_check_branch
      %58 = sbr.rel (0) target = $region65
    $region64: #{tpu_custom_call.1} parent=1 // pred_region
      _
    $region65: #{tpu_custom_call.1} parent=1 // pred_fallthru
      _
    // Predicated region
    $region66: #{tpu_custom_call.1} parent=1 // pred_check
      _
    $region67: #{tpu_custom_call.1} parent=1 // pred_check_branch
      %60 = sbr.rel (0) target = $region69
    $region68: #{tpu_custom_call.1} parent=1 // pred_region
      _
    $region69: #{tpu_custom_call.1} parent=1 // pred_fallthru
      _
    // Predicated region
    $region70: #{tpu_custom_call.1} parent=1 // pred_check
      _
    $region71: #{tpu_custom_call.1} parent=1 // pred_check_branch
      %62 = sbr.rel (0) target = $region73
    $region72: #{tpu_custom_call.1} parent=1 // pred_region
      _
    $region73: #{tpu_custom_call.1} parent=1 // pred_fallthru
      _
    %v64 = vld [vmem:[%s0] sm:$0xf]
    %v65 = vld [vmem:[%s0 + $0x4] sm:$0xf]
    %v66 = vld [vmem:[%s0 + $0x8] sm:$0xf]
    %v67 = vld [vmem:[%s0 + $0xc] sm:$0xf]
    %v68 = vld [vmem:[%s0 + $0x10] sm:$0x1]
    %v69 = vld [vmem:[%s1] sm:$0xf]
    %v70 = vld [vmem:[%s1 + $0x4] sm:$0xf]
    %v71 = vld [vmem:[%s1 + $0x8] sm:$0xf]
    %v72 = vld [vmem:[%s1 + $0xc] sm:$0xf]
    %v73 = vld [vmem:[%s1 + $0x10] sm:$0x1]
    %v74 = vld [vmem:[%s2] sm:$0xf]
    %v75 = vld [vmem:[%s2 + $0x4] sm:$0xf]
    %v76 = vld [vmem:[%s3] sm:$0xf]
    %v77 = vld [vmem:[%s3 + $0x4] sm:$0xf]
    %v78 = vld [vmem:[%s4] sm:$0xff]
    %v79 = vld [vmem:[%s4 + $0x8] sm:$0xff]
    %v80 = vld [vmem:[%s4 + $0x10] sm:$0xff]
    %v81 = vld [vmem:[%s4 + $0x18] sm:$0xff]
    %v82 = vld [vmem:[%s4 + $0x20] sm:$0x1]
    %v83 = vld [vmem:[%s5] sm:$0xff]
    %v84 = vld [vmem:[%s5 + $0x8] sm:$0xff]
    %v85 = vld [vmem:[%s6] sm:$0xff]
    %v86 = vld [vmem:[%s6 + $0x8] sm:$0xff]
    %v87 = vld [vmem:[%s7] sm:$0xff]
    %v88 = vld [vmem:[%s7 + $0x8] sm:$0xff]
    %v89 = vld [vmem:[%s8] sm:$0xff]
    %v90 = vld [vmem:[%s8 + $0x8] sm:$0xff]
    %v91 = vld [vmem:[%s16] sm:$0xff]
    %v92 = vld [vmem:[%s16 + $0x8] sm:$0xff]
    %v93 = vld [vmem:[%s16 + $0x10] sm:$0xff]
    %v94 = vld [vmem:[%s16 + $0x18] sm:$0xff]
    %v95 = vld [vmem:[%s16 + $0x20] sm:$0x1]
    %v96 = vlaneseq
    %v97 = vshrl.u32 %v96, 7
    %v98 = vsub.s32 0, %v97
    %v99 = vrot.slane %v95, %v98
    %vm100 = vcmask 261120
    %v102 = vsel %vm100, 0.0, 0
    %104 = vmatprep.subr.mxu0 0.0
    %105 = vmatpush1.msra.mxu0 %v91
    %106 = vmatprep.subr.mxu0 0.0
    %107 = vmatpush1.msra.mxu0 %v92
    %108 = vmatprep.subr.mxu0 0.0
    %109 = vmatpush1.msra.mxu0 %v93
    %110 = vmatprep.subr.mxu0 0.0
    %111 = vmatpush1.msra.mxu0 %v94
    %112 = vmatprep.subr.mxu0 0.0
    %113 = vmatpush1.msra.mxu0 0.0
    %114 = vmatprep.subr.mxu0 0.0
    %115 = vmatpush1.msra.mxu0 0.0
    %116 = vmatprep.subr.mxu0 0.0
    %117 = vmatpush1.msra.mxu0 0.0
    %118 = vmatprep.subr.mxu0 0.0
    %119 = vmatpush1.msra.mxu0 0.0
    %120 = vmatprep.subr.mxu0 0.0
    %121 = vmatpush1.msra.mxu0 0.0
    %122 = vmatprep.subr.mxu0 0.0
    %123 = vmatpush1.msra.mxu0 0.0
    %124 = vmatprep.subr.mxu0 0.0
    %125 = vmatpush1.msra.mxu0 0.0
    %126 = vmatprep.subr.mxu0 0.0
    %127 = vmatpush1.msra.mxu0 0.0
    %128 = vmatprep.subr.mxu0 0.0
    %129 = vmatpush1.msra.mxu0 0.0
    %130 = vmatprep.subr.mxu0 0.0
    %131 = vmatpush1.msra.mxu0 0.0
    %132 = vmatprep.subr.mxu0 0.0
    %133 = vmatpush1.msra.mxu0 0.0
    %134 = vmatprep.subr.mxu0 0.0
    %135 = vmatpush1.msra.mxu0 0.0
    %136 = vmatprep.subr.mxu0 0.0
    %137 = vmatpush1.msra.mxu0 0.0
    %138 = vmatprep.subr.mxu0 0.0
    %139 = vmatpush1.msra.mxu0 0.0
    %140 = vmatprep.subr.mxu0 0.0
    %141 = vmatpush1.msra.mxu0 0.0
    %142 = vmatprep.subr.mxu0 0.0
    %143 = vmatpush1.msra.mxu0 0.0
    %144 = vmatprep.subr.mxu0 0.0
    %145 = vmatpush1.msra.mxu0 0.0
    %146 = vmatprep.subr.mxu0 0.0
    %147 = vmatpush1.msra.mxu0 0.0
    %148 = vmatprep.subr.mxu0 0.0
    %149 = vmatpush1.msra.mxu0 0.0
    %150 = vmatprep.subr.mxu0 0.0
    %151 = vmatpush1.msra.mxu0 0.0
    %152 = vmatprep.subr.mxu0 0.0
    %153 = vmatpush1.msra.mxu0 0.0
    %154 = vmatprep.subr.mxu0 0.0
    %155 = vmatpush1.msra.mxu0 0.0
    %156 = vmatprep.subr.mxu0 0.0
    %157 = vmatpush1.msra.mxu0 0.0
    %158 = vmatprep.subr.mxu0 0.0
    %159 = vmatpush1.msra.mxu0 0.0
    %160 = vmatprep.subr.mxu0 0.0
    %161 = vmatpush1.msra.mxu0 0.0
    %162 = vmatprep.subr.mxu0 0.0
    %163 = vmatpush1.msra.mxu0 0.0
    %164 = vmatprep.subr.mxu0 0.0
    %165 = vmatpush1.msra.mxu0 0.0
    %166 = vmatprep.subr.mxu0 0.0
    %167 = vmatpush1.msra.mxu0 0.0
    %168 = vmatprep.mubr.f32.mxu0 0.0
    %169 = vmatmul.mubr.f32.gmra.mrb[0].mxu0 %v102
    %v170 = vpop.f32.mrb[0].mxu0
    %v171 = vadd.f32 %v99, %v170
    %v172 = vpop.f32.mrb[0].mxu0
    %173 = vmatprep.mubr.f32.mxu0 0.0
    %174 = vmatmul.mubr.f32.gmra.mrb[0].mxu0 %v102
    %v175 = vpop.f32.mrb[0].mxu0
    %v176 = vadd.f32 %v99, %v175
    %v177 = vpop.f32.mrb[0].mxu0
    %178 = vdwg.mxu0
    %v179 = vmax.f32 %v171, 0.0
    %v180 = vmax.f32 %v176, 0.0
    %v181 = vld [vmem:[%s17] sm:$0xff]
    %v182 = vld [vmem:[%s17 + $0x8] sm:$0xff]
    %v183 = vld [vmem:[%s17 + $0x10] sm:$0xff]
    %v184 = vld [vmem:[%s17 + $0x18] sm:$0xff]
    %v185 = vld [vmem:[%s17 + $0x20] sm:$0x1]
    %v186 = vlaneseq
    %v187 = vshrl.u32 %v186, 7
    %v188 = vsub.s32 0, %v187
    %v189 = vrot.slane %v185, %v188
    %v191 = vsel %vm100, %v179, 0
    %v194 = vsel %vm100, %v180, 0
    %196 = vmatprep.subr.mxu0 0.0
    %197 = vmatpush1.msra.mxu0 %v181
    %198 = vmatprep.subr.mxu0 0.0
    %199 = vmatpush1.msra.mxu0 %v182
    %200 = vmatprep.subr.mxu0 0.0
    %201 = vmatpush1.msra.mxu0 %v183
    %202 = vmatprep.subr.mxu0 0.0
    %203 = vmatpush1.msra.mxu0 %v184
    %204 = vmatprep.subr.mxu0 0.0
    %205 = vmatpush1.msra.mxu0 0.0
    %206 = vmatprep.subr.mxu0 0.0
    %207 = vmatpush1.msra.mxu0 0.0
    %208 = vmatprep.subr.mxu0 0.0
    %209 = vmatpush1.msra.mxu0 0.0
    %210 = vmatprep.subr.mxu0 0.0
    %211 = vmatpush1.msra.mxu0 0.0
    %212 = vmatprep.subr.mxu0 0.0
    %213 = vmatpush1.msra.mxu0 0.0
    %214 = vmatprep.subr.mxu0 0.0
    %215 = vmatpush1.msra.mxu0 0.0
    %216 = vmatprep.subr.mxu0 0.0
    %217 = vmatpush1.msra.mxu0 0.0
    %218 = vmatprep.subr.mxu0 0.0
    %219 = vmatpush1.msra.mxu0 0.0
    %220 = vmatprep.subr.mxu0 0.0
    %221 = vmatpush1.msra.mxu0 0.0
    %222 = vmatprep.subr.mxu0 0.0
    %223 = vmatpush1.msra.mxu0 0.0
    %224 = vmatprep.subr.mxu0 0.0
    %225 = vmatpush1.msra.mxu0 0.0
    %226 = vmatprep.subr.mxu0 0.0
    %227 = vmatpush1.msra.mxu0 0.0
    %228 = vmatprep.subr.mxu0 0.0
    %229 = vmatpush1.msra.mxu0 0.0
    %230 = vmatprep.subr.mxu0 0.0
    %231 = vmatpush1.msra.mxu0 0.0
    %232 = vmatprep.subr.mxu0 0.0
    %233 = vmatpush1.msra.mxu0 0.0
    %234 = vmatprep.subr.mxu0 0.0
    %235 = vmatpush1.msra.mxu0 0.0
    %236 = vmatprep.subr.mxu0 0.0
    %237 = vmatpush1.msra.mxu0 0.0
    %238 = vmatprep.subr.mxu0 0.0
    %239 = vmatpush1.msra.mxu0 0.0
    %240 = vmatprep.subr.mxu0 0.0
    %241 = vmatpush1.msra.mxu0 0.0
    %242 = vmatprep.subr.mxu0 0.0
    %243 = vmatpush1.msra.mxu0 0.0
    %244 = vmatprep.subr.mxu0 0.0
    %245 = vmatpush1.msra.mxu0 0.0
    %246 = vmatprep.subr.mxu0 0.0
    %247 = vmatpush1.msra.mxu0 0.0
    %248 = vmatprep.subr.mxu0 0.0
    %249 = vmatpush1.msra.mxu0 0.0
    %250 = vmatprep.subr.mxu0 0.0
    %251 = vmatpush1.msra.mxu0 0.0
    %252 = vmatprep.subr.mxu0 0.0
    %253 = vmatpush1.msra.mxu0 0.0
    %254 = vmatprep.subr.mxu0 0.0
    %255 = vmatpush1.msra.mxu0 0.0
    %256 = vmatprep.subr.mxu0 0.0
    %257 = vmatpush1.msra.mxu0 0.0
    %258 = vmatprep.subr.mxu0 0.0
    %259 = vmatpush1.msra.mxu0 0.0
    %260 = vmatprep.mubr.f32.mxu0 0.0
    %261 = vmatmul.mubr.f32.gmra.mrb[0].mxu0 %v191
    %v262 = vpop.f32.mrb[0].mxu0
    %v263 = vadd.f32 %v189, %v262
    %v264 = vpop.f32.mrb[0].mxu0
    %265 = vmatprep.mubr.f32.mxu0 0.0
    %266 = vmatmul.mubr.f32.gmra.mrb[0].mxu0 %v194
    %v267 = vpop.f32.mrb[0].mxu0
    %v268 = vadd.f32 %v189, %v267
    %v269 = vpop.f32.mrb[0].mxu0
    %270 = vdwg.mxu0
    %v271 = vld [vmem:[%s11] sm:$0xff]
    %v272 = vld [vmem:[%s11 + $0x8] sm:$0xff]
    %v273 = vld [vmem:[%s11 + $0x10] sm:$0xff]
    %v274 = vld [vmem:[%s11 + $0x18] sm:$0xff]
    %275 = vmatprep.subr.mxu0 0.0
    %276 = vmatpush1.msra.mxu0 %v271
    %277 = vmatprep.subr.mxu0 0.0
    %278 = vmatpush1.msra.mxu0 %v272
    %279 = vmatprep.subr.mxu0 0.0
    %280 = vmatpush1.msra.mxu0 %v273
    %281 = vmatprep.subr.mxu0 0.0
    %282 = vmatpush1.msra.mxu0 %v274
    %283 = vmatprep.subr.mxu0 0.0
    %284 = vmatpush1.msra.mxu0 0.0
    %285 = vmatprep.subr.mxu0 0.0
    %286 = vmatpush1.msra.mxu0 0.0
    %287 = vmatprep.subr.mxu0 0.0
    %288 = vmatpush1.msra.mxu0 0.0
    %289 = vmatprep.subr.mxu0 0.0
    %290 = vmatpush1.msra.mxu0 0.0
    %291 = vmatprep.subr.mxu0 0.0
    %292 = vmatpush1.msra.mxu0 0.0
    %293 = vmatprep.subr.mxu0 0.0
    %294 = vmatpush1.msra.mxu0 0.0
    %295 = vmatprep.subr.mxu0 0.0
    %296 = vmatpush1.msra.mxu0 0.0
    %297 = vmatprep.subr.mxu0 0.0
    %298 = vmatpush1.msra.mxu0 0.0
    %299 = vmatprep.subr.mxu0 0.0
    %300 = vmatpush1.msra.mxu0 0.0
    %301 = vmatprep.subr.mxu0 0.0
    %302 = vmatpush1.msra.mxu0 0.0
    %303 = vmatprep.subr.mxu0 0.0
    %304 = vmatpush1.msra.mxu0 0.0
    %305 = vmatprep.subr.mxu0 0.0
    %306 = vmatpush1.msra.mxu0 0.0
    %307 = vmatprep.subr.mxu0 0.0
    %308 = vmatpush1.msra.mxu0 0.0
    %309 = vmatprep.subr.mxu0 0.0
    %310 = vmatpush1.msra.mxu0 0.0
    %311 = vmatprep.subr.mxu0 0.0
    %312 = vmatpush1.msra.mxu0 0.0
    %313 = vmatprep.subr.mxu0 0.0
    %314 = vmatpush1.msra.mxu0 0.0
    %315 = vmatprep.subr.mxu0 0.0
    %316 = vmatpush1.msra.mxu0 0.0
    %317 = vmatprep.subr.mxu0 0.0
    %318 = vmatpush1.msra.mxu0 0.0
    %319 = vmatprep.subr.mxu0 0.0
    %320 = vmatpush1.msra.mxu0 0.0
    %321 = vmatprep.subr.mxu0 0.0
    %322 = vmatpush1.msra.mxu0 0.0
    %323 = vmatprep.subr.mxu0 0.0
    %324 = vmatpush1.msra.mxu0 0.0
    %325 = vmatprep.subr.mxu0 0.0
    %326 = vmatpush1.msra.mxu0 0.0
    %327 = vmatprep.subr.mxu0 0.0
    %328 = vmatpush1.msra.mxu0 0.0
    %329 = vmatprep.subr.mxu0 0.0
    %330 = vmatpush1.msra.mxu0 0.0
    %331 = vmatprep.subr.mxu0 0.0
    %332 = vmatpush1.msra.mxu0 0.0
    %333 = vmatprep.subr.mxu0 0.0
    %334 = vmatpush1.msra.mxu0 0.0
    %335 = vmatprep.subr.mxu0 0.0
    %336 = vmatpush1.msra.mxu0 0.0
    %337 = vmatprep.subr.mxu0 0.0
    %338 = vmatpush1.msra.mxu0 0.0
    %339 = vmatprep.mubr.f32.mxu0 0.0
    %340 = vmatmul.mubr.f32.gmra.mrb[0].mxu0 %v102
    %v341 = vpop.f32.mrb[0].mxu0
    %v342 = vadd.f32 0.0, %v341
    %v343 = vpop.f32.mrb[0].mxu0
    %344 = vmatprep.mubr.f32.mxu0 0.0
    %345 = vmatmul.mubr.f32.gmra.mrb[0].mxu0 %v102
    %v346 = vpop.f32.mrb[0].mxu0
    %v347 = vadd.f32 0.0, %v346
    %v348 = vpop.f32.mrb[0].mxu0
    %349 = vdwg.mxu0
    %v350 = vpack.c.bf16 %v347, %v342
    %v356 = vunpack.c.l.b16 %v64
    %v357 = vunpack.c.l.b16 %v65
    %v358 = vunpack.c.l.b16 %v66
    %v359 = vunpack.c.l.b16 %v67
    %v360 = vunpack.c.l.b16 %v68
    %v361 = vpack.c.b16 %v357, %v356
    %v362 = vpack.c.b16 %v359, %v358
    %v363 = vpack.c.b16 %v360, %v360
    %365 = vrot.lane.b32.xlu0 %v350, 64
    %v366 = vpop.permute.xlu0 %365
    %vm368 = vcmask 130048
    %v370 = vsel %vm368, %v361, 0
    %v373 = vsel %vm368, %v362, 0
    %v376 = vsel %vm368, %v363, 0
    %378 = vmatprep.subr.bf16.mxu0 0
    %379 = vmatpush1.bf16.msra.mxu0 %v366
    %380 = vmatprep.subr.bf16.mxu0 0
    %381 = vmatpush1.bf16.msra.mxu0 0
    %382 = vmatprep.subr.bf16.mxu0 0
    %383 = vmatpush1.bf16.msra.mxu0 0
    %384 = vmatprep.subr.bf16.mxu0 0
    %385 = vmatpush1.bf16.msra.mxu0 0
    %386 = vmatprep.subr.bf16.mxu0 0
    %387 = vmatpush1.bf16.msra.mxu0 0
    %388 = vmatprep.subr.bf16.mxu0 0
    %389 = vmatpush1.bf16.msra.mxu0 0
    %390 = vmatprep.subr.bf16.mxu0 0
    %391 = vmatpush1.bf16.msra.mxu0 0
    %392 = vmatprep.subr.bf16.mxu0 0
    %393 = vmatpush1.bf16.msra.mxu0 0
    %394 = vmatprep.subr.bf16.mxu0 0
    %395 = vmatpush1.bf16.msra.mxu0 0
    %396 = vmatprep.subr.bf16.mxu0 0
    %397 = vmatpush1.bf16.msra.mxu0 0
    %398 = vmatprep.subr.bf16.mxu0 0
    %399 = vmatpush1.bf16.msra.mxu0 0
    %400 = vmatprep.subr.bf16.mxu0 0
    %401 = vmatpush1.bf16.msra.mxu0 0
    %402 = vmatprep.subr.bf16.mxu0 0
    %403 = vmatpush1.bf16.msra.mxu0 0
    %404 = vmatprep.subr.bf16.mxu0 0
    %405 = vmatpush1.bf16.msra.mxu0 0
    %406 = vmatprep.subr.bf16.mxu0 0
    %407 = vmatpush1.bf16.msra.mxu0 0
    %408 = vmatprep.subr.bf16.mxu0 0
    %409 = vmatpush1.bf16.msra.mxu0 0
    %410 = vmatprep.mubr.bf16.mxu0 0
    %411 = vmatmul.mubr.bf16.gmra.mrb[0].mxu0 %v370
    %v412 = vpop.f32.mrb[0].mxu0
    %v413 = vadd.f32 0.0, %v412
    %v414 = vpop.f32.mrb[0].mxu0
    %v415 = vpop.f32.mrb[0].mxu0
    %v416 = vadd.f32 0.0, %v415
    %v417 = vpop.f32.mrb[0].mxu0
    %418 = vmatprep.mubr.bf16.mxu0 0
    %419 = vmatmul.mubr.bf16.gmra.mrb[0].mxu0 %v373
    %v420 = vpop.f32.mrb[0].mxu0
    %v421 = vadd.f32 0.0, %v420
    %v422 = vpop.f32.mrb[0].mxu0
    %v423 = vpop.f32.mrb[0].mxu0
    %v424 = vadd.f32 0.0, %v423
    %v425 = vpop.f32.mrb[0].mxu0
    %426 = vmatprep.mubr.bf16.mxu0 0
    %427 = vmatmul.mubr.bf16.gmra.mrb[0].mxu0 %v376
    %v428 = vpop.f32.mrb[0].mxu0
    %v429 = vadd.f32 0.0, %v428
    %v430 = vpop.f32.mrb[0].mxu0
    %v431 = vpop.f32.mrb[0].mxu0
    %v432 = vpop.f32.mrb[0].mxu0
    %433 = vdwg.mxu0
    %v439 = vunpack.c.l.b16 %v69
    %v440 = vunpack.c.l.b16 %v70
    %v441 = vunpack.c.l.b16 %v71
    %v442 = vunpack.c.l.b16 %v72
    %v443 = vunpack.c.l.b16 %v73
    %v444 = vpack.c.b16 %v440, %v439
    %v445 = vpack.c.b16 %v442, %v441
    %v446 = vpack.c.b16 %v443, %v443
    %v448 = vsel %vm368, %v444, 0
    %v451 = vsel %vm368, %v445, 0
    %v454 = vsel %vm368, %v446, 0
    %456 = vmatprep.subr.bf16.mxu0 0
    %457 = vmatpush1.bf16.msra.mxu0 %v350
    %458 = vmatprep.subr.bf16.mxu0 0
    %459 = vmatpush1.bf16.msra.mxu0 0
    %460 = vmatprep.subr.bf16.mxu0 0
    %461 = vmatpush1.bf16.msra.mxu0 0
    %462 = vmatprep.subr.bf16.mxu0 0
    %463 = vmatpush1.bf16.msra.mxu0 0
    %464 = vmatprep.subr.bf16.mxu0 0
    %465 = vmatpush1.bf16.msra.mxu0 0
    %466 = vmatprep.subr.bf16.mxu0 0
    %467 = vmatpush1.bf16.msra.mxu0 0
    %468 = vmatprep.subr.bf16.mxu0 0
    %469 = vmatpush1.bf16.msra.mxu0 0
    %470 = vmatprep.subr.bf16.mxu0 0
    %471 = vmatpush1.bf16.msra.mxu0 0
    %472 = vmatprep.subr.bf16.mxu0 0
    %473 = vmatpush1.bf16.msra.mxu0 0
    %474 = vmatprep.subr.bf16.mxu0 0
    %475 = vmatpush1.bf16.msra.mxu0 0
    %476 = vmatprep.subr.bf16.mxu0 0
    %477 = vmatpush1.bf16.msra.mxu0 0
    %478 = vmatprep.subr.bf16.mxu0 0
    %479 = vmatpush1.bf16.msra.mxu0 0
    %480 = vmatprep.subr.bf16.mxu0 0
    %481 = vmatpush1.bf16.msra.mxu0 0
    %482 = vmatprep.subr.bf16.mxu0 0
    %483 = vmatpush1.bf16.msra.mxu0 0
    %484 = vmatprep.subr.bf16.mxu0 0
    %485 = vmatpush1.bf16.msra.mxu0 0
    %486 = vmatprep.subr.bf16.mxu0 0
    %487 = vmatpush1.bf16.msra.mxu0 0
    %488 = vmatprep.mubr.bf16.mxu0 0
    %489 = vmatmul.mubr.bf16.gmra.mrb[0].mxu0 %v448
    %v490 = vpop.f32.mrb[0].mxu0
    %v491 = vadd.f32 %v413, %v490
    %v492 = vpop.f32.mrb[0].mxu0
    %v493 = vpop.f32.mrb[0].mxu0
    %v494 = vadd.f32 %v416, %v493
    %v495 = vpop.f32.mrb[0].mxu0
    %496 = vmatprep.mubr.bf16.mxu0 0
    %497 = vmatmul.mubr.bf16.gmra.mrb[0].mxu0 %v451
    %v498 = vpop.f32.mrb[0].mxu0
    %v499 = vadd.f32 %v421, %v498
    %v500 = vpop.f32.mrb[0].mxu0
    %v501 = vpop.f32.mrb[0].mxu0
    %v502 = vadd.f32 %v424, %v501
    %v503 = vpop.f32.mrb[0].mxu0
    %504 = vmatprep.mubr.bf16.mxu0 0
    %505 = vmatmul.mubr.bf16.gmra.mrb[0].mxu0 %v454
    %v506 = vpop.f32.mrb[0].mxu0
    %v507 = vadd.f32 %v429, %v506
    %v508 = vpop.f32.mrb[0].mxu0
    %v509 = vpop.f32.mrb[0].mxu0
    %v510 = vpop.f32.mrb[0].mxu0
    %511 = vdwg.mxu0
    %v512 = vld [vmem:[%s12] sm:$0xff]
    %vm513 = vcmask 64512
    %v515 = vsel %vm513, %v78, 0
    %v518 = vsel %vm513, %v79, 0
    %v521 = vsel %vm513, %v80, 0
    %v524 = vsel %vm513, %v81, 0
    %v527 = vsel %vm513, %v82, 0
    %529 = vmatprep.subr.mxu0 0.0
    %530 = vmatpush1.msra.mxu0 %v512
    %531 = vmatprep.subr.mxu0 0.0
    %532 = vmatpush1.msra.mxu0 0.0
    %533 = vmatprep.subr.mxu0 0.0
    %534 = vmatpush1.msra.mxu0 0.0
    %535 = vmatprep.subr.mxu0 0.0
    %536 = vmatpush1.msra.mxu0 0.0
    %537 = vmatprep.subr.mxu0 0.0
    %538 = vmatpush1.msra.mxu0 0.0
    %539 = vmatprep.subr.mxu0 0.0
    %540 = vmatpush1.msra.mxu0 0.0
    %541 = vmatprep.subr.mxu0 0.0
    %542 = vmatpush1.msra.mxu0 0.0
    %543 = vmatprep.subr.mxu0 0.0
    %544 = vmatpush1.msra.mxu0 0.0
    %545 = vmatprep.subr.mxu0 0.0
    %546 = vmatpush1.msra.mxu0 0.0
    %547 = vmatprep.subr.mxu0 0.0
    %548 = vmatpush1.msra.mxu0 0.0
    %549 = vmatprep.subr.mxu0 0.0
    %550 = vmatpush1.msra.mxu0 0.0
    %551 = vmatprep.subr.mxu0 0.0
    %552 = vmatpush1.msra.mxu0 0.0
    %553 = vmatprep.subr.mxu0 0.0
    %554 = vmatpush1.msra.mxu0 0.0
    %555 = vmatprep.subr.mxu0 0.0
    %556 = vmatpush1.msra.mxu0 0.0
    %557 = vmatprep.subr.mxu0 0.0
    %558 = vmatpush1.msra.mxu0 0.0
    %559 = vmatprep.subr.mxu0 0.0
    %560 = vmatpush1.msra.mxu0 0.0
    %561 = vmatprep.subr.mxu0 0.0
    %562 = vmatpush1.msra.mxu0 0.0
    %563 = vmatprep.subr.mxu0 0.0
    %564 = vmatpush1.msra.mxu0 0.0
    %565 = vmatprep.subr.mxu0 0.0
    %566 = vmatpush1.msra.mxu0 0.0
    %567 = vmatprep.subr.mxu0 0.0
    %568 = vmatpush1.msra.mxu0 0.0
    %569 = vmatprep.subr.mxu0 0.0
    %570 = vmatpush1.msra.mxu0 0.0
    %571 = vmatprep.subr.mxu0 0.0
    %572 = vmatpush1.msra.mxu0 0.0
    %573 = vmatprep.subr.mxu0 0.0
    %574 = vmatpush1.msra.mxu0 0.0
    %575 = vmatprep.subr.mxu0 0.0
    %576 = vmatpush1.msra.mxu0 0.0
    %577 = vmatprep.subr.mxu0 0.0
    %578 = vmatpush1.msra.mxu0 0.0
    %579 = vmatprep.subr.mxu0 0.0
    %580 = vmatpush1.msra.mxu0 0.0
    %581 = vmatprep.subr.mxu0 0.0
    %582 = vmatpush1.msra.mxu0 0.0
    %583 = vmatprep.subr.mxu0 0.0
    %584 = vmatpush1.msra.mxu0 0.0
    %585 = vmatprep.subr.mxu0 0.0
    %586 = vmatpush1.msra.mxu0 0.0
    %587 = vmatprep.subr.mxu0 0.0
    %588 = vmatpush1.msra.mxu0 0.0
    %589 = vmatprep.subr.mxu0 0.0
    %590 = vmatpush1.msra.mxu0 0.0
    %591 = vmatprep.subr.mxu0 0.0
    %592 = vmatpush1.msra.mxu0 0.0
    %593 = vmatprep.mubr.f32.mxu0 0.0
    %594 = vmatmul.mubr.f32.gmra.mrb[0].mxu0 %v515
    %v595 = vpop.f32.mrb[0].mxu0
    %v596 = vadd.f32 0.0, %v595
    %v597 = vpop.f32.mrb[0].mxu0
    %598 = vmatprep.mubr.f32.mxu0 0.0
    %599 = vmatmul.mubr.f32.gmra.mrb[0].mxu0 %v518
    %v600 = vpop.f32.mrb[0].mxu0
    %v601 = vadd.f32 0.0, %v600
    %v602 = vpop.f32.mrb[0].mxu0
    %603 = vmatprep.mubr.f32.mxu0 0.0
    %604 = vmatmul.mubr.f32.gmra.mrb[0].mxu0 %v521
    %v605 = vpop.f32.mrb[0].mxu0
    %v606 = vadd.f32 0.0, %v605
    %v607 = vpop.f32.mrb[0].mxu0
    %608 = vmatprep.mubr.f32.mxu0 0.0
    %609 = vmatmul.mubr.f32.gmra.mrb[0].mxu0 %v524
    %v610 = vpop.f32.mrb[0].mxu0
    %v611 = vadd.f32 0.0, %v610
    %v612 = vpop.f32.mrb[0].mxu0
    %613 = vmatprep.mubr.f32.mxu0 0.0
    %614 = vmatmul.mubr.f32.gmra.mrb[0].mxu0 %v527
    %v615 = vpop.f32.mrb[0].mxu0
    %v616 = vadd.f32 0.0, %v615
    %v617 = vpop.f32.mrb[0].mxu0
    %618 = vdwg.mxu0
    %v619 = vadd.f32 %v491, %v596
    %v620 = vadd.f32 %v494, %v601
    %v621 = vadd.f32 %v499, %v606
    %v622 = vadd.f32 %v502, %v611
    %v623 = vadd.f32 %v507, %v616
    %v624 = vmax.f32 %v619, 0.0
    %v625 = vmax.f32 %v620, 0.0
    %v626 = vmax.f32 %v621, 0.0
    %v627 = vmax.f32 %v622, 0.0
    %v628 = vmax.f32 %v623, 0.0
    %v629 = vld [vmem:[%s13] sm:$0xff]
    %v630 = vld [vmem:[%s13 + $0x8] sm:$0xff]
    %v631 = vld [vmem:[%s13 + $0x10] sm:$0xff]
    %v632 = vld [vmem:[%s13 + $0x18] sm:$0xff]
    %v633 = vld [vmem:[%s13 + $0x20] sm:$0xff]
    %v634 = vld [vmem:[%s13 + $0x28] sm:$0xff]
    %v635 = vld [vmem:[%s13 + $0x30] sm:$0xff]
    %v636 = vld [vmem:[%s13 + $0x38] sm:$0xff]
    %v637 = vld [vmem:[%s13 + $0x40] sm:$0x1]
    %v638 = vlaneseq
    %v639 = vshrl.u32 %v638, 7
    %v640 = vsub.s32 0, %v639
    %v641 = vrot.slane %v637, %v640
    %vm642 = vcmask 523264
    %v644 = vsel %vm642, %v624, 0
    %v647 = vsel %vm642, %v625, 0
    %v650 = vsel %vm642, %v626, 0
    %v653 = vsel %vm642, %v627, 0
    %v656 = vsel %vm642, %v628, 0
    %658 = vmatprep.subr.mxu0 0.0
    %659 = vmatpush1.msra.mxu0 %v629
    %660 = vmatprep.subr.mxu0 0.0
    %661 = vmatpush1.msra.mxu0 %v630
    %662 = vmatprep.subr.mxu0 0.0
    %663 = vmatpush1.msra.mxu0 %v631
    %664 = vmatprep.subr.mxu0 0.0
    %665 = vmatpush1.msra.mxu0 %v632
    %666 = vmatprep.subr.mxu0 0.0
    %667 = vmatpush1.msra.mxu0 %v633
    %668 = vmatprep.subr.mxu0 0.0
    %669 = vmatpush1.msra.mxu0 %v634
    %670 = vmatprep.subr.mxu0 0.0
    %671 = vmatpush1.msra.mxu0 %v635
    %672 = vmatprep.subr.mxu0 0.0
    %673 = vmatpush1.msra.mxu0 %v636
    %674 = vmatprep.subr.mxu0 0.0
    %675 = vmatpush1.msra.mxu0 0.0
    %676 = vmatprep.subr.mxu0 0.0
    %677 = vmatpush1.msra.mxu0 0.0
    %678 = vmatprep.subr.mxu0 0.0
    %679 = vmatpush1.msra.mxu0 0.0
    %680 = vmatprep.subr.mxu0 0.0
    %681 = vmatpush1.msra.mxu0 0.0
    %682 = vmatprep.subr.mxu0 0.0
    %683 = vmatpush1.msra.mxu0 0.0
    %684 = vmatprep.subr.mxu0 0.0
    %685 = vmatpush1.msra.mxu0 0.0
    %686 = vmatprep.subr.mxu0 0.0
    %687 = vmatpush1.msra.mxu0 0.0
    %688 = vmatprep.subr.mxu0 0.0
    %689 = vmatpush1.msra.mxu0 0.0
    %690 = vmatprep.subr.mxu0 0.0
    %691 = vmatpush1.msra.mxu0 0.0
    %692 = vmatprep.subr.mxu0 0.0
    %693 = vmatpush1.msra.mxu0 0.0
    %694 = vmatprep.subr.mxu0 0.0
    %695 = vmatpush1.msra.mxu0 0.0
    %696 = vmatprep.subr.mxu0 0.0
    %697 = vmatpush1.msra.mxu0 0.0
    %698 = vmatprep.subr.mxu0 0.0
    %699 = vmatpush1.msra.mxu0 0.0
    %700 = vmatprep.subr.mxu0 0.0
    %701 = vmatpush1.msra.mxu0 0.0
    %702 = vmatprep.subr.mxu0 0.0
    %703 = vmatpush1.msra.mxu0 0.0
    %704 = vmatprep.subr.mxu0 0.0
    %705 = vmatpush1.msra.mxu0 0.0
    %706 = vmatprep.subr.mxu0 0.0
    %707 = vmatpush1.msra.mxu0 0.0
    %708 = vmatprep.subr.mxu0 0.0
    %709 = vmatpush1.msra.mxu0 0.0
    %710 = vmatprep.subr.mxu0 0.0
    %711 = vmatpush1.msra.mxu0 0.0
    %712 = vmatprep.subr.mxu0 0.0
    %713 = vmatpush1.msra.mxu0 0.0
    %714 = vmatprep.subr.mxu0 0.0
    %715 = vmatpush1.msra.mxu0 0.0
    %716 = vmatprep.subr.mxu0 0.0
    %717 = vmatpush1.msra.mxu0 0.0
    %718 = vmatprep.subr.mxu0 0.0
    %719 = vmatpush1.msra.mxu0 0.0
    %720 = vmatprep.subr.mxu0 0.0
    %721 = vmatpush1.msra.mxu0 0.0
    %722 = vmatprep.mubr.f32.mxu0 0.0
    %723 = vmatmul.mubr.f32.gmra.mrb[0].mxu0 %v644
    %v724 = vpop.f32.mrb[0].mxu0
    %v725 = vadd.f32 %v641, %v724
    %v726 = vpop.f32.mrb[0].mxu0
    %727 = vmatprep.mubr.f32.mxu0 0.0
    %728 = vmatmul.mubr.f32.gmra.mrb[0].mxu0 %v647
    %v729 = vpop.f32.mrb[0].mxu0
    %v730 = vadd.f32 %v641, %v729
    %v731 = vpop.f32.mrb[0].mxu0
    %732 = vmatprep.mubr.f32.mxu0 0.0
    %733 = vmatmul.mubr.f32.gmra.mrb[0].mxu0 %v650
    %v734 = vpop.f32.mrb[0].mxu0
    %v735 = vadd.f32 %v641, %v734
    %v736 = vpop.f32.mrb[0].mxu0
    %737 = vmatprep.mubr.f32.mxu0 0.0
    %738 = vmatmul.mubr.f32.gmra.mrb[0].mxu0 %v653
    %v739 = vpop.f32.mrb[0].mxu0
    %v740 = vadd.f32 %v641, %v739
    %v741 = vpop.f32.mrb[0].mxu0
    %742 = vmatprep.mubr.f32.mxu0 0.0
    %743 = vmatmul.mubr.f32.gmra.mrb[0].mxu0 %v656
    %v744 = vpop.f32.mrb[0].mxu0
    %v745 = vadd.f32 %v641, %v744
    %v746 = vpop.f32.mrb[0].mxu0
    %747 = vdwg.mxu0
    %v748 = vpack.c.bf16 %v730, %v725
    %v749 = vpack.c.bf16 %v740, %v735
    %v750 = vpack.c.bf16 %v745, %v745
    %v753 = vunpack.c.l.b16 %v76
    %v754 = vunpack.c.l.b16 %v77
    %v755 = vpack.c.b16 %v754, %v753
    %vm756 = vcmask 269312
    %v758 = vsel %vm756, %v755, 0
    %vm760 = vcmask 1040384
    %v761 = vsel 0, 4294967295, 65535
    %v762 = vsel %vm760, %v761, 0
    %v764 = vand.u32 %v750, %v762
    %766 = vmatprep.subr.bf16.mxu0 0
    %767 = vmatpush1.bf16.msra.mxu0 %v748
    %768 = vmatprep.subr.bf16.mxu0 0
    %769 = vmatpush1.bf16.msra.mxu0 %v749
    %770 = vmatprep.subr.bf16.mxu0 0
    %771 = vmatpush1.bf16.msra.mxu0 %v764
    %772 = vmatprep.subr.bf16.mxu0 0
    %773 = vmatpush1.bf16.msra.mxu0 0
    %774 = vmatprep.subr.bf16.mxu0 0
    %775 = vmatpush1.bf16.msra.mxu0 0
    %776 = vmatprep.subr.bf16.mxu0 0
    %777 = vmatpush1.bf16.msra.mxu0 0
    %778 = vmatprep.subr.bf16.mxu0 0
    %779 = vmatpush1.bf16.msra.mxu0 0
    %780 = vmatprep.subr.bf16.mxu0 0
    %781 = vmatpush1.bf16.msra.mxu0 0
    %782 = vmatprep.subr.bf16.mxu0 0
    %783 = vmatpush1.bf16.msra.mxu0 0
    %784 = vmatprep.subr.bf16.mxu0 0
    %785 = vmatpush1.bf16.msra.mxu0 0
    %786 = vmatprep.subr.bf16.mxu0 0
    %787 = vmatpush1.bf16.msra.mxu0 0
    %788 = vmatprep.subr.bf16.mxu0 0
    %789 = vmatpush1.bf16.msra.mxu0 0
    %790 = vmatprep.subr.bf16.mxu0 0
    %791 = vmatpush1.bf16.msra.mxu0 0
    %792 = vmatprep.subr.bf16.mxu0 0
    %793 = vmatpush1.bf16.msra.mxu0 0
    %794 = vmatprep.subr.bf16.mxu0 0
    %795 = vmatpush1.bf16.msra.mxu0 0
    %796 = vmatprep.subr.bf16.mxu0 0
    %797 = vmatpush1.bf16.msra.mxu0 0
    %798 = vmatprep.mubr.bf16.mxu0 0
    %799 = vmatmul.mubr.bf16.gmra.mrb[0].mxu0 %v758
    %v800 = vpop.f32.mrb[0].mxu0
    %v801 = vadd.f32 0.0, %v800
    %v802 = vpop.f32.mrb[0].mxu0
    %v803 = vpop.f32.mrb[0].mxu0
    %v804 = vadd.f32 0.0, %v803
    %v805 = vpop.f32.mrb[0].mxu0
    %806 = vdwg.mxu0
    %v809 = vunpack.c.l.b16 %v74
    %v810 = vunpack.c.l.b16 %v75
    %v811 = vpack.c.b16 %v810, %v809
    %815 = vrot.lane.b32.xlu0 %v748, 96
    %v816 = vpop.permute.xlu0 %815
    %817 = vrot.lane.b32.xlu0 %v749, 96
    %v818 = vpop.permute.xlu0 %817
    %819 = vrot.lane.b32.xlu0 %v750, 96
    %v820 = vpop.permute.xlu0 %819
    %v824 = vsel %vm756, %v811, 0
    %v827 = vand.u32 %v820, %v762
    %829 = vmatprep.subr.bf16.mxu0 0
    %830 = vmatpush1.bf16.msra.mxu0 %v816
    %831 = vmatprep.subr.bf16.mxu0 0
    %832 = vmatpush1.bf16.msra.mxu0 %v818
    %833 = vmatprep.subr.bf16.mxu0 0
    %834 = vmatpush1.bf16.msra.mxu0 %v827
    %835 = vmatprep.subr.bf16.mxu0 0
    %836 = vmatpush1.bf16.msra.mxu0 0
    %837 = vmatprep.subr.bf16.mxu0 0
    %838 = vmatpush1.bf16.msra.mxu0 0
    %839 = vmatprep.subr.bf16.mxu0 0
    %840 = vmatpush1.bf16.msra.mxu0 0
    %841 = vmatprep.subr.bf16.mxu0 0
    %842 = vmatpush1.bf16.msra.mxu0 0
    %843 = vmatprep.subr.bf16.mxu0 0
    %844 = vmatpush1.bf16.msra.mxu0 0
    %845 = vmatprep.subr.bf16.mxu0 0
    %846 = vmatpush1.bf16.msra.mxu0 0
    %847 = vmatprep.subr.bf16.mxu0 0
    %848 = vmatpush1.bf16.msra.mxu0 0
    %849 = vmatprep.subr.bf16.mxu0 0
    %850 = vmatpush1.bf16.msra.mxu0 0
    %851 = vmatprep.subr.bf16.mxu0 0
    %852 = vmatpush1.bf16.msra.mxu0 0
    %853 = vmatprep.subr.bf16.mxu0 0
    %854 = vmatpush1.bf16.msra.mxu0 0
    %855 = vmatprep.subr.bf16.mxu0 0
    %856 = vmatpush1.bf16.msra.mxu0 0
    %857 = vmatprep.subr.bf16.mxu0 0
    %858 = vmatpush1.bf16.msra.mxu0 0
    %859 = vmatprep.subr.bf16.mxu0 0
    %860 = vmatpush1.bf16.msra.mxu0 0
    %861 = vmatprep.mubr.bf16.mxu0 0
    %862 = vmatmul.mubr.bf16.gmra.mrb[0].mxu0 %v824
    %v863 = vpop.f32.mrb[0].mxu0
    %v864 = vadd.f32 0.0, %v863
    %v865 = vpop.f32.mrb[0].mxu0
    %v866 = vpop.f32.mrb[0].mxu0
    %v867 = vadd.f32 0.0, %v866
    %v868 = vpop.f32.mrb[0].mxu0
    %869 = vdwg.mxu0
    %v870 = vld [vmem:[%s14] sm:$0xff]
    %v871 = vld [vmem:[%s14 + $0x8] sm:$0xff]
    %v872 = vld [vmem:[%s14 + $0x10] sm:$0xff]
    %v873 = vld [vmem:[%s14 + $0x18] sm:$0xff]
    %v874 = vld [vmem:[%s14 + $0x20] sm:$0xff]
    %v875 = vld [vmem:[%s14 + $0x28] sm:$0xff]
    %v876 = vld [vmem:[%s14 + $0x30] sm:$0xff]
    %v877 = vld [vmem:[%s14 + $0x38] sm:$0xff]
    %v879 = vsel %vm100, %v801, 0
    %v882 = vsel %vm100, %v804, 0
    %884 = vmatprep.subr.mxu0 0.0
    %885 = vmatpush1.msra.mxu0 %v874
    %886 = vmatprep.subr.mxu0 0.0
    %887 = vmatpush1.msra.mxu0 %v875
    %888 = vmatprep.subr.mxu0 0.0
    %889 = vmatpush1.msra.mxu0 %v876
    %890 = vmatprep.subr.mxu0 0.0
    %891 = vmatpush1.msra.mxu0 %v877
    %892 = vmatprep.subr.mxu0 0.0
    %893 = vmatpush1.msra.mxu0 0.0
    %894 = vmatprep.subr.mxu0 0.0
    %895 = vmatpush1.msra.mxu0 0.0
    %896 = vmatprep.subr.mxu0 0.0
    %897 = vmatpush1.msra.mxu0 0.0
    %898 = vmatprep.subr.mxu0 0.0
    %899 = vmatpush1.msra.mxu0 0.0
    %900 = vmatprep.subr.mxu0 0.0
    %901 = vmatpush1.msra.mxu0 0.0
    %902 = vmatprep.subr.mxu0 0.0
    %903 = vmatpush1.msra.mxu0 0.0
    %904 = vmatprep.subr.mxu0 0.0
    %905 = vmatpush1.msra.mxu0 0.0
    %906 = vmatprep.subr.mxu0 0.0
    %907 = vmatpush1.msra.mxu0 0.0
    %908 = vmatprep.subr.mxu0 0.0
    %909 = vmatpush1.msra.mxu0 0.0
    %910 = vmatprep.subr.mxu0 0.0
    %911 = vmatpush1.msra.mxu0 0.0
    %912 = vmatprep.subr.mxu0 0.0
    %913 = vmatpush1.msra.mxu0 0.0
    %914 = vmatprep.subr.mxu0 0.0
    %915 = vmatpush1.msra.mxu0 0.0
    %916 = vmatprep.subr.mxu0 0.0
    %917 = vmatpush1.msra.mxu0 0.0
    %918 = vmatprep.subr.mxu0 0.0
    %919 = vmatpush1.msra.mxu0 0.0
    %920 = vmatprep.subr.mxu0 0.0
    %921 = vmatpush1.msra.mxu0 0.0
    %922 = vmatprep.subr.mxu0 0.0
    %923 = vmatpush1.msra.mxu0 0.0
    %924 = vmatprep.subr.mxu0 0.0
    %925 = vmatpush1.msra.mxu0 0.0
    %926 = vmatprep.subr.mxu0 0.0
    %927 = vmatpush1.msra.mxu0 0.0
    %928 = vmatprep.subr.mxu0 0.0
    %929 = vmatpush1.msra.mxu0 0.0
    %930 = vmatprep.subr.mxu0 0.0
    %931 = vmatpush1.msra.mxu0 0.0
    %932 = vmatprep.subr.mxu0 0.0
    %933 = vmatpush1.msra.mxu0 0.0
    %934 = vmatprep.subr.mxu0 0.0
    %935 = vmatpush1.msra.mxu0 0.0
    %936 = vmatprep.subr.mxu0 0.0
    %937 = vmatpush1.msra.mxu0 0.0
    %938 = vmatprep.subr.mxu0 0.0
    %939 = vmatpush1.msra.mxu0 0.0
    %940 = vmatprep.subr.mxu0 0.0
    %941 = vmatpush1.msra.mxu0 0.0
    %942 = vmatprep.subr.mxu0 0.0
    %943 = vmatpush1.msra.mxu0 0.0
    %944 = vmatprep.subr.mxu0 0.0
    %945 = vmatpush1.msra.mxu0 0.0
    %946 = vmatprep.subr.mxu0 0.0
    %947 = vmatpush1.msra.mxu0 0.0
    %948 = vmatprep.mubr.f32.mxu0 0.0
    %949 = vmatmul.mubr.f32.gmra.mrb[0].mxu0 %v879
    %v950 = vpop.f32.mrb[0].mxu0
    %v951 = vadd.f32 0.0, %v950
    %v952 = vpop.f32.mrb[0].mxu0
    %953 = vmatprep.mubr.f32.mxu0 0.0
    %954 = vmatmul.mubr.f32.gmra.mrb[0].mxu0 %v882
    %v955 = vpop.f32.mrb[0].mxu0
    %v956 = vadd.f32 0.0, %v955
    %v957 = vpop.f32.mrb[0].mxu0
    %958 = vdwg.mxu0
    %959 = vmatprep.subr.mxu0 0.0
    %960 = vmatpush1.msra.mxu0 %v870
    %961 = vmatprep.subr.mxu0 0.0
    %962 = vmatpush1.msra.mxu0 %v871
    %963 = vmatprep.subr.mxu0 0.0
    %964 = vmatpush1.msra.mxu0 %v872
    %965 = vmatprep.subr.mxu0 0.0
    %966 = vmatpush1.msra.mxu0 %v873
    %967 = vmatprep.subr.mxu0 0.0
    %968 = vmatpush1.msra.mxu0 0.0
    %969 = vmatprep.subr.mxu0 0.0
    %970 = vmatpush1.msra.mxu0 0.0
    %971 = vmatprep.subr.mxu0 0.0
    %972 = vmatpush1.msra.mxu0 0.0
    %973 = vmatprep.subr.mxu0 0.0
    %974 = vmatpush1.msra.mxu0 0.0
    %975 = vmatprep.subr.mxu0 0.0
    %976 = vmatpush1.msra.mxu0 0.0
    %977 = vmatprep.subr.mxu0 0.0
    %978 = vmatpush1.msra.mxu0 0.0
    %979 = vmatprep.subr.mxu0 0.0
    %980 = vmatpush1.msra.mxu0 0.0
    %981 = vmatprep.subr.mxu0 0.0
    %982 = vmatpush1.msra.mxu0 0.0
    %983 = vmatprep.subr.mxu0 0.0
    %984 = vmatpush1.msra.mxu0 0.0
    %985 = vmatprep.subr.mxu0 0.0
    %986 = vmatpush1.msra.mxu0 0.0
    %987 = vmatprep.subr.mxu0 0.0
    %988 = vmatpush1.msra.mxu0 0.0
    %989 = vmatprep.subr.mxu0 0.0
    %990 = vmatpush1.msra.mxu0 0.0
    %991 = vmatprep.subr.mxu0 0.0
    %992 = vmatpush1.msra.mxu0 0.0
    %993 = vmatprep.subr.mxu0 0.0
    %994 = vmatpush1.msra.mxu0 0.0
    %995 = vmatprep.subr.mxu0 0.0
    %996 = vmatpush1.msra.mxu0 0.0
    %997 = vmatprep.subr.mxu0 0.0
    %998 = vmatpush1.msra.mxu0 0.0
    %999 = vmatprep.subr.mxu0 0.0
    %1000 = vmatpush1.msra.mxu0 0.0
    %1001 = vmatprep.subr.mxu0 0.0
    %1002 = vmatpush1.msra.mxu0 0.0
    %1003 = vmatprep.subr.mxu0 0.0
    %1004 = vmatpush1.msra.mxu0 0.0
    %1005 = vmatprep.subr.mxu0 0.0
    %1006 = vmatpush1.msra.mxu0 0.0
    %1007 = vmatprep.subr.mxu0 0.0
    %1008 = vmatpush1.msra.mxu0 0.0
    %1009 = vmatprep.subr.mxu0 0.0
    %1010 = vmatpush1.msra.mxu0 0.0
    %1011 = vmatprep.subr.mxu0 0.0
    %1012 = vmatpush1.msra.mxu0 0.0
    %1013 = vmatprep.subr.mxu0 0.0
    %1014 = vmatpush1.msra.mxu0 0.0
    %1015 = vmatprep.subr.mxu0 0.0
    %1016 = vmatpush1.msra.mxu0 0.0
    %1017 = vmatprep.subr.mxu0 0.0
    %1018 = vmatpush1.msra.mxu0 0.0
    %1019 = vmatprep.subr.mxu0 0.0
    %1020 = vmatpush1.msra.mxu0 0.0
    %1021 = vmatprep.subr.mxu0 0.0
    %1022 = vmatpush1.msra.mxu0 0.0
    %1023 = vmatprep.mubr.f32.mxu0 0.0
    %1024 = vmatmul.mubr.f32.gmra.mrb[0].mxu0 %v102
    %v1025 = vpop.f32.mrb[0].mxu0
    %v1026 = vadd.f32 %v951, %v1025
    %v1027 = vpop.f32.mrb[0].mxu0
    %1028 = vmatprep.mubr.f32.mxu0 0.0
    %1029 = vmatmul.mubr.f32.gmra.mrb[0].mxu0 %v102
    %v1030 = vpop.f32.mrb[0].mxu0
    %v1031 = vadd.f32 %v956, %v1030
    %v1032 = vpop.f32.mrb[0].mxu0
    %1033 = vdwg.mxu0
    %v1034 = vld [vmem:[%s14 + $0x40] sm:$0xff]
    %v1035 = vld [vmem:[%s14 + $0x48] sm:$0xff]
    %v1036 = vld [vmem:[%s14 + $0x50] sm:$0xff]
    %v1037 = vld [vmem:[%s14 + $0x58] sm:$0xff]
    %v1039 = vsel %vm100, %v864, 0
    %v1042 = vsel %vm100, %v867, 0
    %1044 = vmatprep.subr.mxu0 0.0
    %1045 = vmatpush1.msra.mxu0 %v1034
    %1046 = vmatprep.subr.mxu0 0.0
    %1047 = vmatpush1.msra.mxu0 %v1035
    %1048 = vmatprep.subr.mxu0 0.0
    %1049 = vmatpush1.msra.mxu0 %v1036
    %1050 = vmatprep.subr.mxu0 0.0
    %1051 = vmatpush1.msra.mxu0 %v1037
    %1052 = vmatprep.subr.mxu0 0.0
    %1053 = vmatpush1.msra.mxu0 0.0
    %1054 = vmatprep.subr.mxu0 0.0
    %1055 = vmatpush1.msra.mxu0 0.0
    %1056 = vmatprep.subr.mxu0 0.0
    %1057 = vmatpush1.msra.mxu0 0.0
    %1058 = vmatprep.subr.mxu0 0.0
    %1059 = vmatpush1.msra.mxu0 0.0
    %1060 = vmatprep.subr.mxu0 0.0
    %1061 = vmatpush1.msra.mxu0 0.0
    %1062 = vmatprep.subr.mxu0 0.0
    %1063 = vmatpush1.msra.mxu0 0.0
    %1064 = vmatprep.subr.mxu0 0.0
    %1065 = vmatpush1.msra.mxu0 0.0
    %1066 = vmatprep.subr.mxu0 0.0
    %1067 = vmatpush1.msra.mxu0 0.0
    %1068 = vmatprep.subr.mxu0 0.0
    %1069 = vmatpush1.msra.mxu0 0.0
    %1070 = vmatprep.subr.mxu0 0.0
    %1071 = vmatpush1.msra.mxu0 0.0
    %1072 = vmatprep.subr.mxu0 0.0
    %1073 = vmatpush1.msra.mxu0 0.0
    %1074 = vmatprep.subr.mxu0 0.0
    %1075 = vmatpush1.msra.mxu0 0.0
    %1076 = vmatprep.subr.mxu0 0.0
    %1077 = vmatpush1.msra.mxu0 0.0
    %1078 = vmatprep.subr.mxu0 0.0
    %1079 = vmatpush1.msra.mxu0 0.0
    %1080 = vmatprep.subr.mxu0 0.0
    %1081 = vmatpush1.msra.mxu0 0.0
    %1082 = vmatprep.subr.mxu0 0.0
    %1083 = vmatpush1.msra.mxu0 0.0
    %1084 = vmatprep.subr.mxu0 0.0
    %1085 = vmatpush1.msra.mxu0 0.0
    %1086 = vmatprep.subr.mxu0 0.0
    %1087 = vmatpush1.msra.mxu0 0.0
    %1088 = vmatprep.subr.mxu0 0.0
    %1089 = vmatpush1.msra.mxu0 0.0
    %1090 = vmatprep.subr.mxu0 0.0
    %1091 = vmatpush1.msra.mxu0 0.0
    %1092 = vmatprep.subr.mxu0 0.0
    %1093 = vmatpush1.msra.mxu0 0.0
    %1094 = vmatprep.subr.mxu0 0.0
    %1095 = vmatpush1.msra.mxu0 0.0
    %1096 = vmatprep.subr.mxu0 0.0
    %1097 = vmatpush1.msra.mxu0 0.0
    %1098 = vmatprep.subr.mxu0 0.0
    %1099 = vmatpush1.msra.mxu0 0.0
    %1100 = vmatprep.subr.mxu0 0.0
    %1101 = vmatpush1.msra.mxu0 0.0
    %1102 = vmatprep.subr.mxu0 0.0
    %1103 = vmatpush1.msra.mxu0 0.0
    %1104 = vmatprep.subr.mxu0 0.0
    %1105 = vmatpush1.msra.mxu0 0.0
    %1106 = vmatprep.subr.mxu0 0.0
    %1107 = vmatpush1.msra.mxu0 0.0
    %1108 = vmatprep.mubr.f32.mxu0 0.0
    %1109 = vmatmul.mubr.f32.gmra.mrb[0].mxu0 %v1039
    %v1110 = vpop.f32.mrb[0].mxu0
    %v1111 = vadd.f32 0.0, %v1110
    %v1112 = vpop.f32.mrb[0].mxu0
    %1113 = vmatprep.mubr.f32.mxu0 0.0
    %1114 = vmatmul.mubr.f32.gmra.mrb[0].mxu0 %v1042
    %v1115 = vpop.f32.mrb[0].mxu0
    %v1116 = vadd.f32 0.0, %v1115
    %v1117 = vpop.f32.mrb[0].mxu0
    %1118 = vdwg.mxu0
    %v1119 = vadd.f32 %v1026, %v1111
    %v1120 = vadd.f32 %v1031, %v1116
    %v1121 = vld [vmem:[%s14 + $0x60] sm:$0xff]
    %v1123 = vsel %vm513, %v83, 0
    %v1126 = vsel %vm513, %v84, 0
    %1128 = vmatprep.subr.mxu0 0.0
    %1129 = vmatpush1.msra.mxu0 %v1121
    %1130 = vmatprep.subr.mxu0 0.0
    %1131 = vmatpush1.msra.mxu0 0.0
    %1132 = vmatprep.subr.mxu0 0.0
    %1133 = vmatpush1.msra.mxu0 0.0
    %1134 = vmatprep.subr.mxu0 0.0
    %1135 = vmatpush1.msra.mxu0 0.0
    %1136 = vmatprep.subr.mxu0 0.0
    %1137 = vmatpush1.msra.mxu0 0.0
    %1138 = vmatprep.subr.mxu0 0.0
    %1139 = vmatpush1.msra.mxu0 0.0
    %1140 = vmatprep.subr.mxu0 0.0
    %1141 = vmatpush1.msra.mxu0 0.0
    %1142 = vmatprep.subr.mxu0 0.0
    %1143 = vmatpush1.msra.mxu0 0.0
    %1144 = vmatprep.subr.mxu0 0.0
    %1145 = vmatpush1.msra.mxu0 0.0
    %1146 = vmatprep.subr.mxu0 0.0
    %1147 = vmatpush1.msra.mxu0 0.0
    %1148 = vmatprep.subr.mxu0 0.0
    %1149 = vmatpush1.msra.mxu0 0.0
    %1150 = vmatprep.subr.mxu0 0.0
    %1151 = vmatpush1.msra.mxu0 0.0
    %1152 = vmatprep.subr.mxu0 0.0
    %1153 = vmatpush1.msra.mxu0 0.0
    %1154 = vmatprep.subr.mxu0 0.0
    %1155 = vmatpush1.msra.mxu0 0.0
    %1156 = vmatprep.subr.mxu0 0.0
    %1157 = vmatpush1.msra.mxu0 0.0
    %1158 = vmatprep.subr.mxu0 0.0
    %1159 = vmatpush1.msra.mxu0 0.0
    %1160 = vmatprep.subr.mxu0 0.0
    %1161 = vmatpush1.msra.mxu0 0.0
    %1162 = vmatprep.subr.mxu0 0.0
    %1163 = vmatpush1.msra.mxu0 0.0
    %1164 = vmatprep.subr.mxu0 0.0
    %1165 = vmatpush1.msra.mxu0 0.0
    %1166 = vmatprep.subr.mxu0 0.0
    %1167 = vmatpush1.msra.mxu0 0.0
    %1168 = vmatprep.subr.mxu0 0.0
    %1169 = vmatpush1.msra.mxu0 0.0
    %1170 = vmatprep.subr.mxu0 0.0
    %1171 = vmatpush1.msra.mxu0 0.0
    %1172 = vmatprep.subr.mxu0 0.0
    %1173 = vmatpush1.msra.mxu0 0.0
    %1174 = vmatprep.subr.mxu0 0.0
    %1175 = vmatpush1.msra.mxu0 0.0
    %1176 = vmatprep.subr.mxu0 0.0
    %1177 = vmatpush1.msra.mxu0 0.0
    %1178 = vmatprep.subr.mxu0 0.0
    %1179 = vmatpush1.msra.mxu0 0.0
    %1180 = vmatprep.subr.mxu0 0.0
    %1181 = vmatpush1.msra.mxu0 0.0
    %1182 = vmatprep.subr.mxu0 0.0
    %1183 = vmatpush1.msra.mxu0 0.0
    %1184 = vmatprep.subr.mxu0 0.0
    %1185 = vmatpush1.msra.mxu0 0.0
    %1186 = vmatprep.subr.mxu0 0.0
    %1187 = vmatpush1.msra.mxu0 0.0
    %1188 = vmatprep.subr.mxu0 0.0
    %1189 = vmatpush1.msra.mxu0 0.0
    %1190 = vmatprep.subr.mxu0 0.0
    %1191 = vmatpush1.msra.mxu0 0.0
    %1192 = vmatprep.mubr.f32.mxu0 0.0
    %1193 = vmatmul.mubr.f32.gmra.mrb[0].mxu0 %v1123
    %v1194 = vpop.f32.mrb[0].mxu0
    %v1195 = vadd.f32 0.0, %v1194
    %v1196 = vpop.f32.mrb[0].mxu0
    %1197 = vmatprep.mubr.f32.mxu0 0.0
    %1198 = vmatmul.mubr.f32.gmra.mrb[0].mxu0 %v1126
    %v1199 = vpop.f32.mrb[0].mxu0
    %v1200 = vadd.f32 0.0, %v1199
    %v1201 = vpop.f32.mrb[0].mxu0
    %1202 = vdwg.mxu0
    %v1203 = vadd.f32 %v1119, %v1195
    %v1204 = vadd.f32 %v1120, %v1200
    %v1205 = vmax.f32 %v1203, 0.0
    %v1206 = vmax.f32 %v1204, 0.0
    %v1207 = vld [vmem:[%s15] sm:$0xff]
    %v1208 = vld [vmem:[%s15 + $0x8] sm:$0xff]
    %v1209 = vld [vmem:[%s15 + $0x10] sm:$0xff]
    %v1210 = vld [vmem:[%s15 + $0x18] sm:$0xff]
    %v1211 = vld [vmem:[%s15 + $0x20] sm:$0x1]
    %v1212 = vlaneseq
    %v1213 = vshrl.u32 %v1212, 7
    %v1214 = vsub.s32 0, %v1213
    %v1215 = vrot.slane %v1211, %v1214
    %v1217 = vsel %vm100, %v1205, 0
    %v1220 = vsel %vm100, %v1206, 0
    %1222 = vmatprep.subr.mxu0 0.0
    %1223 = vmatpush1.msra.mxu0 %v1207
    %1224 = vmatprep.subr.mxu0 0.0
    %1225 = vmatpush1.msra.mxu0 %v1208
    %1226 = vmatprep.subr.mxu0 0.0
    %1227 = vmatpush1.msra.mxu0 %v1209
    %1228 = vmatprep.subr.mxu0 0.0
    %1229 = vmatpush1.msra.mxu0 %v1210
    %1230 = vmatprep.subr.mxu0 0.0
    %1231 = vmatpush1.msra.mxu0 0.0
    %1232 = vmatprep.subr.mxu0 0.0
    %1233 = vmatpush1.msra.mxu0 0.0
    %1234 = vmatprep.subr.mxu0 0.0
    %1235 = vmatpush1.msra.mxu0 0.0
    %1236 = vmatprep.subr.mxu0 0.0
    %1237 = vmatpush1.msra.mxu0 0.0
    %1238 = vmatprep.subr.mxu0 0.0
    %1239 = vmatpush1.msra.mxu0 0.0
    %1240 = vmatprep.subr.mxu0 0.0
    %1241 = vmatpush1.msra.mxu0 0.0
    %1242 = vmatprep.subr.mxu0 0.0
    %1243 = vmatpush1.msra.mxu0 0.0
    %1244 = vmatprep.subr.mxu0 0.0
    %1245 = vmatpush1.msra.mxu0 0.0
    %1246 = vmatprep.subr.mxu0 0.0
    %1247 = vmatpush1.msra.mxu0 0.0
    %1248 = vmatprep.subr.mxu0 0.0
    %1249 = vmatpush1.msra.mxu0 0.0
    %1250 = vmatprep.subr.mxu0 0.0
    %1251 = vmatpush1.msra.mxu0 0.0
    %1252 = vmatprep.subr.mxu0 0.0
    %1253 = vmatpush1.msra.mxu0 0.0
    %1254 = vmatprep.subr.mxu0 0.0
    %1255 = vmatpush1.msra.mxu0 0.0
    %1256 = vmatprep.subr.mxu0 0.0
    %1257 = vmatpush1.msra.mxu0 0.0
    %1258 = vmatprep.subr.mxu0 0.0
    %1259 = vmatpush1.msra.mxu0 0.0
    %1260 = vmatprep.subr.mxu0 0.0
    %1261 = vmatpush1.msra.mxu0 0.0
    %1262 = vmatprep.subr.mxu0 0.0
    %1263 = vmatpush1.msra.mxu0 0.0
    %1264 = vmatprep.subr.mxu0 0.0
    %1265 = vmatpush1.msra.mxu0 0.0
    %1266 = vmatprep.subr.mxu0 0.0
    %1267 = vmatpush1.msra.mxu0 0.0
    %1268 = vmatprep.subr.mxu0 0.0
    %1269 = vmatpush1.msra.mxu0 0.0
    %1270 = vmatprep.subr.mxu0 0.0
    %1271 = vmatpush1.msra.mxu0 0.0
    %1272 = vmatprep.subr.mxu0 0.0
    %1273 = vmatpush1.msra.mxu0 0.0
    %1274 = vmatprep.subr.mxu0 0.0
    %1275 = vmatpush1.msra.mxu0 0.0
    %1276 = vmatprep.subr.mxu0 0.0
    %1277 = vmatpush1.msra.mxu0 0.0
    %1278 = vmatprep.subr.mxu0 0.0
    %1279 = vmatpush1.msra.mxu0 0.0
    %1280 = vmatprep.subr.mxu0 0.0
    %1281 = vmatpush1.msra.mxu0 0.0
    %1282 = vmatprep.subr.mxu0 0.0
    %1283 = vmatpush1.msra.mxu0 0.0
    %1284 = vmatprep.subr.mxu0 0.0
    %1285 = vmatpush1.msra.mxu0 0.0
    %1286 = vmatprep.mubr.f32.mxu0 0.0
    %1287 = vmatmul.mubr.f32.gmra.mrb[0].mxu0 %v1217
    %v1288 = vpop.f32.mrb[0].mxu0
    %v1289 = vadd.f32 %v1215, %v1288
    %v1290 = vpop.f32.mrb[0].mxu0
    %1291 = vmatprep.mubr.f32.mxu0 0.0
    %1292 = vmatmul.mubr.f32.gmra.mrb[0].mxu0 %v1220
    %v1293 = vpop.f32.mrb[0].mxu0
    %v1294 = vadd.f32 %v1215, %v1293
    %v1295 = vpop.f32.mrb[0].mxu0
    %1296 = vdwg.mxu0
    %v1297 = vmul.f32 %v1289, 0.001
    %v1298 = vmul.f32 %v1294, 0.001
    %v1299 = vadd.f32 %v1297, 0.0
    %v1300 = vadd.f32 %v1298, 0.0
    %v1302 = vsel %vm100, %v1299, 0
    %v1305 = vsel %vm100, %v1300, 0
    %1307 = vmatprep.subr.mxu0 0.0
    %1308 = vmatpush1.msra.mxu0 %v91
    %1309 = vmatprep.subr.mxu0 0.0
    %1310 = vmatpush1.msra.mxu0 %v92
    %1311 = vmatprep.subr.mxu0 0.0
    %1312 = vmatpush1.msra.mxu0 %v93
    %1313 = vmatprep.subr.mxu0 0.0
    %1314 = vmatpush1.msra.mxu0 %v94
    %1315 = vmatprep.subr.mxu0 0.0
    %1316 = vmatpush1.msra.mxu0 0.0
    %1317 = vmatprep.subr.mxu0 0.0
    %1318 = vmatpush1.msra.mxu0 0.0
    %1319 = vmatprep.subr.mxu0 0.0
    %1320 = vmatpush1.msra.mxu0 0.0
    %1321 = vmatprep.subr.mxu0 0.0
    %1322 = vmatpush1.msra.mxu0 0.0
    %1323 = vmatprep.subr.mxu0 0.0
    %1324 = vmatpush1.msra.mxu0 0.0
    %1325 = vmatprep.subr.mxu0 0.0
    %1326 = vmatpush1.msra.mxu0 0.0
    %1327 = vmatprep.subr.mxu0 0.0
    %1328 = vmatpush1.msra.mxu0 0.0
    %1329 = vmatprep.subr.mxu0 0.0
    %1330 = vmatpush1.msra.mxu0 0.0
    %1331 = vmatprep.subr.mxu0 0.0
    %1332 = vmatpush1.msra.mxu0 0.0
    %1333 = vmatprep.subr.mxu0 0.0
    %1334 = vmatpush1.msra.mxu0 0.0
    %1335 = vmatprep.subr.mxu0 0.0
    %1336 = vmatpush1.msra.mxu0 0.0
    %1337 = vmatprep.subr.mxu0 0.0
    %1338 = vmatpush1.msra.mxu0 0.0
    %1339 = vmatprep.subr.mxu0 0.0
    %1340 = vmatpush1.msra.mxu0 0.0
    %1341 = vmatprep.subr.mxu0 0.0
    %1342 = vmatpush1.msra.mxu0 0.0
    %1343 = vmatprep.subr.mxu0 0.0
    %1344 = vmatpush1.msra.mxu0 0.0
    %1345 = vmatprep.subr.mxu0 0.0
    %1346 = vmatpush1.msra.mxu0 0.0
    %1347 = vmatprep.subr.mxu0 0.0
    %1348 = vmatpush1.msra.mxu0 0.0
    %1349 = vmatprep.subr.mxu0 0.0
    %1350 = vmatpush1.msra.mxu0 0.0
    %1351 = vmatprep.subr.mxu0 0.0
    %1352 = vmatpush1.msra.mxu0 0.0
    %1353 = vmatprep.subr.mxu0 0.0
    %1354 = vmatpush1.msra.mxu0 0.0
    %1355 = vmatprep.subr.mxu0 0.0
    %1356 = vmatpush1.msra.mxu0 0.0
    %1357 = vmatprep.subr.mxu0 0.0
    %1358 = vmatpush1.msra.mxu0 0.0
    %1359 = vmatprep.subr.mxu0 0.0
    %1360 = vmatpush1.msra.mxu0 0.0
    %1361 = vmatprep.subr.mxu0 0.0
    %1362 = vmatpush1.msra.mxu0 0.0
    %1363 = vmatprep.subr.mxu0 0.0
    %1364 = vmatpush1.msra.mxu0 0.0
    %1365 = vmatprep.subr.mxu0 0.0
    %1366 = vmatpush1.msra.mxu0 0.0
    %1367 = vmatprep.subr.mxu0 0.0
    %1368 = vmatpush1.msra.mxu0 0.0
    %1369 = vmatprep.subr.mxu0 0.0
    %1370 = vmatpush1.msra.mxu0 0.0
    %1371 = vmatprep.mubr.f32.mxu0 0.0
    %1372 = vmatmul.mubr.f32.gmra.mrb[0].mxu0 %v1302
    %v1373 = vpop.f32.mrb[0].mxu0
    %v1374 = vadd.f32 %v99, %v1373
    %v1375 = vpop.f32.mrb[0].mxu0
    %1376 = vmatprep.mubr.f32.mxu0 0.0
    %1377 = vmatmul.mubr.f32.gmra.mrb[0].mxu0 %v1305
    %v1378 = vpop.f32.mrb[0].mxu0
    %v1379 = vadd.f32 %v99, %v1378
    %v1380 = vpop.f32.mrb[0].mxu0
    %1381 = vdwg.mxu0
    %v1382 = vmax.f32 %v1374, 0.0
    %v1383 = vmax.f32 %v1379, 0.0
    %v1385 = vsel %vm100, %v1382, 0
    %v1388 = vsel %vm100, %v1383, 0
    %1390 = vmatprep.subr.mxu0 0.0
    %1391 = vmatpush1.msra.mxu0 %v181
    %1392 = vmatprep.subr.mxu0 0.0
    %1393 = vmatpush1.msra.mxu0 %v182
    %1394 = vmatprep.subr.mxu0 0.0
    %1395 = vmatpush1.msra.mxu0 %v183
    %1396 = vmatprep.subr.mxu0 0.0
    %1397 = vmatpush1.msra.mxu0 %v184
    %1398 = vmatprep.subr.mxu0 0.0
    %1399 = vmatpush1.msra.mxu0 0.0
    %1400 = vmatprep.subr.mxu0 0.0
    %1401 = vmatpush1.msra.mxu0 0.0
    %1402 = vmatprep.subr.mxu0 0.0
    %1403 = vmatpush1.msra.mxu0 0.0
    %1404 = vmatprep.subr.mxu0 0.0
    %1405 = vmatpush1.msra.mxu0 0.0
    %1406 = vmatprep.subr.mxu0 0.0
    %1407 = vmatpush1.msra.mxu0 0.0
    %1408 = vmatprep.subr.mxu0 0.0
    %1409 = vmatpush1.msra.mxu0 0.0
    %1410 = vmatprep.subr.mxu0 0.0
    %1411 = vmatpush1.msra.mxu0 0.0
    %1412 = vmatprep.subr.mxu0 0.0
    %1413 = vmatpush1.msra.mxu0 0.0
    %1414 = vmatprep.subr.mxu0 0.0
    %1415 = vmatpush1.msra.mxu0 0.0
    %1416 = vmatprep.subr.mxu0 0.0
    %1417 = vmatpush1.msra.mxu0 0.0
    %1418 = vmatprep.subr.mxu0 0.0
    %1419 = vmatpush1.msra.mxu0 0.0
    %1420 = vmatprep.subr.mxu0 0.0
    %1421 = vmatpush1.msra.mxu0 0.0
    %1422 = vmatprep.subr.mxu0 0.0
    %1423 = vmatpush1.msra.mxu0 0.0
    %1424 = vmatprep.subr.mxu0 0.0
    %1425 = vmatpush1.msra.mxu0 0.0
    %1426 = vmatprep.subr.mxu0 0.0
    %1427 = vmatpush1.msra.mxu0 0.0
    %1428 = vmatprep.subr.mxu0 0.0
    %1429 = vmatpush1.msra.mxu0 0.0
    %1430 = vmatprep.subr.mxu0 0.0
    %1431 = vmatpush1.msra.mxu0 0.0
    %1432 = vmatprep.subr.mxu0 0.0
    %1433 = vmatpush1.msra.mxu0 0.0
    %1434 = vmatprep.subr.mxu0 0.0
    %1435 = vmatpush1.msra.mxu0 0.0
    %1436 = vmatprep.subr.mxu0 0.0
    %1437 = vmatpush1.msra.mxu0 0.0
    %1438 = vmatprep.subr.mxu0 0.0
    %1439 = vmatpush1.msra.mxu0 0.0
    %1440 = vmatprep.subr.mxu0 0.0
    %1441 = vmatpush1.msra.mxu0 0.0
    %1442 = vmatprep.subr.mxu0 0.0
    %1443 = vmatpush1.msra.mxu0 0.0
    %1444 = vmatprep.subr.mxu0 0.0
    %1445 = vmatpush1.msra.mxu0 0.0
    %1446 = vmatprep.subr.mxu0 0.0
    %1447 = vmatpush1.msra.mxu0 0.0
    %1448 = vmatprep.subr.mxu0 0.0
    %1449 = vmatpush1.msra.mxu0 0.0
    %1450 = vmatprep.subr.mxu0 0.0
    %1451 = vmatpush1.msra.mxu0 0.0
    %1452 = vmatprep.subr.mxu0 0.0
    %1453 = vmatpush1.msra.mxu0 0.0
    %1454 = vmatprep.mubr.f32.mxu0 0.0
    %1455 = vmatmul.mubr.f32.gmra.mrb[0].mxu0 %v1385
    %v1456 = vpop.f32.mrb[0].mxu0
    %v1457 = vadd.f32 %v189, %v1456
    %v1458 = vpop.f32.mrb[0].mxu0
    %1459 = vmatprep.mubr.f32.mxu0 0.0
    %1460 = vmatmul.mubr.f32.gmra.mrb[0].mxu0 %v1388
    %v1461 = vpop.f32.mrb[0].mxu0
    %v1462 = vadd.f32 %v189, %v1461
    %v1463 = vpop.f32.mrb[0].mxu0
    %1464 = vdwg.mxu0
    %s1465 = scalar_lea.vmem %s11, 32
    %v1466 = vld [vmem:[%s1465] sm:$0xff]
    %v1467 = vld [vmem:[%s1465 + $0x8] sm:$0xff]
    %v1468 = vld [vmem:[%s1465 + $0x10] sm:$0xff]
    %v1469 = vld [vmem:[%s1465 + $0x18] sm:$0xff]
    %1470 = vmatprep.subr.mxu0 0.0
    %1471 = vmatpush1.msra.mxu0 %v1466
    %1472 = vmatprep.subr.mxu0 0.0
    %1473 = vmatpush1.msra.mxu0 %v1467
    %1474 = vmatprep.subr.mxu0 0.0
    %1475 = vmatpush1.msra.mxu0 %v1468
    %1476 = vmatprep.subr.mxu0 0.0
    %1477 = vmatpush1.msra.mxu0 %v1469
    %1478 = vmatprep.subr.mxu0 0.0
    %1479 = vmatpush1.msra.mxu0 0.0
    %1480 = vmatprep.subr.mxu0 0.0
    %1481 = vmatpush1.msra.mxu0 0.0
    %1482 = vmatprep.subr.mxu0 0.0
    %1483 = vmatpush1.msra.mxu0 0.0
    %1484 = vmatprep.subr.mxu0 0.0
    %1485 = vmatpush1.msra.mxu0 0.0
    %1486 = vmatprep.subr.mxu0 0.0
    %1487 = vmatpush1.msra.mxu0 0.0
    %1488 = vmatprep.subr.mxu0 0.0
    %1489 = vmatpush1.msra.mxu0 0.0
    %1490 = vmatprep.subr.mxu0 0.0
    %1491 = vmatpush1.msra.mxu0 0.0
    %1492 = vmatprep.subr.mxu0 0.0
    %1493 = vmatpush1.msra.mxu0 0.0
    %1494 = vmatprep.subr.mxu0 0.0
    %1495 = vmatpush1.msra.mxu0 0.0
    %1496 = vmatprep.subr.mxu0 0.0
    %1497 = vmatpush1.msra.mxu0 0.0
    %1498 = vmatprep.subr.mxu0 0.0
    %1499 = vmatpush1.msra.mxu0 0.0
    %1500 = vmatprep.subr.mxu0 0.0
    %1501 = vmatpush1.msra.mxu0 0.0
    %1502 = vmatprep.subr.mxu0 0.0
    %1503 = vmatpush1.msra.mxu0 0.0
    %1504 = vmatprep.subr.mxu0 0.0
    %1505 = vmatpush1.msra.mxu0 0.0
    %1506 = vmatprep.subr.mxu0 0.0
    %1507 = vmatpush1.msra.mxu0 0.0
    %1508 = vmatprep.subr.mxu0 0.0
    %1509 = vmatpush1.msra.mxu0 0.0
    %1510 = vmatprep.subr.mxu0 0.0
    %1511 = vmatpush1.msra.mxu0 0.0
    %1512 = vmatprep.subr.mxu0 0.0
    %1513 = vmatpush1.msra.mxu0 0.0
    %1514 = vmatprep.subr.mxu0 0.0
    %1515 = vmatpush1.msra.mxu0 0.0
    %1516 = vmatprep.subr.mxu0 0.0
    %1517 = vmatpush1.msra.mxu0 0.0
    %1518 = vmatprep.subr.mxu0 0.0
    %1519 = vmatpush1.msra.mxu0 0.0
    %1520 = vmatprep.subr.mxu0 0.0
    %1521 = vmatpush1.msra.mxu0 0.0
    %1522 = vmatprep.subr.mxu0 0.0
    %1523 = vmatpush1.msra.mxu0 0.0
    %1524 = vmatprep.subr.mxu0 0.0
    %1525 = vmatpush1.msra.mxu0 0.0
    %1526 = vmatprep.subr.mxu0 0.0
    %1527 = vmatpush1.msra.mxu0 0.0
    %1528 = vmatprep.subr.mxu0 0.0
    %1529 = vmatpush1.msra.mxu0 0.0
    %1530 = vmatprep.subr.mxu0 0.0
    %1531 = vmatpush1.msra.mxu0 0.0
    %1532 = vmatprep.subr.mxu0 0.0
    %1533 = vmatpush1.msra.mxu0 0.0
    %1534 = vmatprep.mubr.f32.mxu0 0.0
    %1535 = vmatmul.mubr.f32.gmra.mrb[0].mxu0 %v1302
    %v1536 = vpop.f32.mrb[0].mxu0
    %v1537 = vadd.f32 0.0, %v1536
    %v1538 = vpop.f32.mrb[0].mxu0
    %1539 = vmatprep.mubr.f32.mxu0 0.0
    %1540 = vmatmul.mubr.f32.gmra.mrb[0].mxu0 %v1305
    %v1541 = vpop.f32.mrb[0].mxu0
    %v1542 = vadd.f32 0.0, %v1541
    %v1543 = vpop.f32.mrb[0].mxu0
    %1544 = vdwg.mxu0
    %v1545 = vpack.c.bf16 %v1542, %v1537
    %1547 = vrot.lane.b32.xlu0 %v1545, 64
    %v1548 = vpop.permute.xlu0 %1547
    %1550 = vmatprep.subr.bf16.mxu0 0
    %1551 = vmatpush1.bf16.msra.mxu0 %v1548
    %1552 = vmatprep.subr.bf16.mxu0 0
    %1553 = vmatpush1.bf16.msra.mxu0 0
    %1554 = vmatprep.subr.bf16.mxu0 0
    %1555 = vmatpush1.bf16.msra.mxu0 0
    %1556 = vmatprep.subr.bf16.mxu0 0
    %1557 = vmatpush1.bf16.msra.mxu0 0
    %1558 = vmatprep.subr.bf16.mxu0 0
    %1559 = vmatpush1.bf16.msra.mxu0 0
    %1560 = vmatprep.subr.bf16.mxu0 0
    %1561 = vmatpush1.bf16.msra.mxu0 0
    %1562 = vmatprep.subr.bf16.mxu0 0
    %1563 = vmatpush1.bf16.msra.mxu0 0
    %1564 = vmatprep.subr.bf16.mxu0 0
    %1565 = vmatpush1.bf16.msra.mxu0 0
    %1566 = vmatprep.subr.bf16.mxu0 0
    %1567 = vmatpush1.bf16.msra.mxu0 0
    %1568 = vmatprep.subr.bf16.mxu0 0
    %1569 = vmatpush1.bf16.msra.mxu0 0
    %1570 = vmatprep.subr.bf16.mxu0 0
    %1571 = vmatpush1.bf16.msra.mxu0 0
    %1572 = vmatprep.subr.bf16.mxu0 0
    %1573 = vmatpush1.bf16.msra.mxu0 0
    %1574 = vmatprep.subr.bf16.mxu0 0
    %1575 = vmatpush1.bf16.msra.mxu0 0
    %1576 = vmatprep.subr.bf16.mxu0 0
    %1577 = vmatpush1.bf16.msra.mxu0 0
    %1578 = vmatprep.subr.bf16.mxu0 0
    %1579 = vmatpush1.bf16.msra.mxu0 0
    %1580 = vmatprep.subr.bf16.mxu0 0
    %1581 = vmatpush1.bf16.msra.mxu0 0
    %1582 = vmatprep.mubr.bf16.mxu0 0
    %1583 = vmatmul.mubr.bf16.gmra.mrb[0].mxu0 %v370
    %v1584 = vpop.f32.mrb[0].mxu0
    %v1585 = vadd.f32 0.0, %v1584
    %v1586 = vpop.f32.mrb[0].mxu0
    %v1587 = vpop.f32.mrb[0].mxu0
    %v1588 = vadd.f32 0.0, %v1587
    %v1589 = vpop.f32.mrb[0].mxu0
    %1590 = vmatprep.mubr.bf16.mxu0 0
    %1591 = vmatmul.mubr.bf16.gmra.mrb[0].mxu0 %v373
    %v1592 = vpop.f32.mrb[0].mxu0
    %v1593 = vadd.f32 0.0, %v1592
    %v1594 = vpop.f32.mrb[0].mxu0
    %v1595 = vpop.f32.mrb[0].mxu0
    %v1596 = vadd.f32 0.0, %v1595
    %v1597 = vpop.f32.mrb[0].mxu0
    %1598 = vmatprep.mubr.bf16.mxu0 0
    %1599 = vmatmul.mubr.bf16.gmra.mrb[0].mxu0 %v376
    %v1600 = vpop.f32.mrb[0].mxu0
    %v1601 = vadd.f32 0.0, %v1600
    %v1602 = vpop.f32.mrb[0].mxu0
    %v1603 = vpop.f32.mrb[0].mxu0
    %v1604 = vpop.f32.mrb[0].mxu0
    %1605 = vdwg.mxu0
    %1606 = vmatprep.subr.bf16.mxu0 0
    %1607 = vmatpush1.bf16.msra.mxu0 %v1545
    %1608 = vmatprep.subr.bf16.mxu0 0
    %1609 = vmatpush1.bf16.msra.mxu0 0
    %1610 = vmatprep.subr.bf16.mxu0 0
    %1611 = vmatpush1.bf16.msra.mxu0 0
    %1612 = vmatprep.subr.bf16.mxu0 0
    %1613 = vmatpush1.bf16.msra.mxu0 0
    %1614 = vmatprep.subr.bf16.mxu0 0
    %1615 = vmatpush1.bf16.msra.mxu0 0
    %1616 = vmatprep.subr.bf16.mxu0 0
    %1617 = vmatpush1.bf16.msra.mxu0 0
    %1618 = vmatprep.subr.bf16.mxu0 0
    %1619 = vmatpush1.bf16.msra.mxu0 0
    %1620 = vmatprep.subr.bf16.mxu0 0
    %1621 = vmatpush1.bf16.msra.mxu0 0
    %1622 = vmatprep.subr.bf16.mxu0 0
    %1623 = vmatpush1.bf16.msra.mxu0 0
    %1624 = vmatprep.subr.bf16.mxu0 0
    %1625 = vmatpush1.bf16.msra.mxu0 0
    %1626 = vmatprep.subr.bf16.mxu0 0
    %1627 = vmatpush1.bf16.msra.mxu0 0
    %1628 = vmatprep.subr.bf16.mxu0 0
    %1629 = vmatpush1.bf16.msra.mxu0 0
    %1630 = vmatprep.subr.bf16.mxu0 0
    %1631 = vmatpush1.bf16.msra.mxu0 0
    %1632 = vmatprep.subr.bf16.mxu0 0
    %1633 = vmatpush1.bf16.msra.mxu0 0
    %1634 = vmatprep.subr.bf16.mxu0 0
    %1635 = vmatpush1.bf16.msra.mxu0 0
    %1636 = vmatprep.subr.bf16.mxu0 0
    %1637 = vmatpush1.bf16.msra.mxu0 0
    %1638 = vmatprep.mubr.bf16.mxu0 0
    %1639 = vmatmul.mubr.bf16.gmra.mrb[0].mxu0 %v448
    %v1640 = vpop.f32.mrb[0].mxu0
    %v1641 = vadd.f32 %v1585, %v1640
    %v1642 = vpop.f32.mrb[0].mxu0
    %v1643 = vpop.f32.mrb[0].mxu0
    %v1644 = vadd.f32 %v1588, %v1643
    %v1645 = vpop.f32.mrb[0].mxu0
    %1646 = vmatprep.mubr.bf16.mxu0 0
    %1647 = vmatmul.mubr.bf16.gmra.mrb[0].mxu0 %v451
    %v1648 = vpop.f32.mrb[0].mxu0
    %v1649 = vadd.f32 %v1593, %v1648
    %v1650 = vpop.f32.mrb[0].mxu0
    %v1651 = vpop.f32.mrb[0].mxu0
    %v1652 = vadd.f32 %v1596, %v1651
    %v1653 = vpop.f32.mrb[0].mxu0
    %1654 = vmatprep.mubr.bf16.mxu0 0
    %1655 = vmatmul.mubr.bf16.gmra.mrb[0].mxu0 %v454
    %v1656 = vpop.f32.mrb[0].mxu0
    %v1657 = vadd.f32 %v1601, %v1656
    %v1658 = vpop.f32.mrb[0].mxu0
    %v1659 = vpop.f32.mrb[0].mxu0
    %v1660 = vpop.f32.mrb[0].mxu0
    %1661 = vdwg.mxu0
    %s1662 = scalar_lea.vmem %s12, 8
    %v1663 = vld [vmem:[%s1662] sm:$0xff]
    %1664 = vmatprep.subr.mxu0 0.0
    %1665 = vmatpush1.msra.mxu0 %v1663
    %1666 = vmatprep.subr.mxu0 0.0
    %1667 = vmatpush1.msra.mxu0 0.0
    %1668 = vmatprep.subr.mxu0 0.0
    %1669 = vmatpush1.msra.mxu0 0.0
    %1670 = vmatprep.subr.mxu0 0.0
    %1671 = vmatpush1.msra.mxu0 0.0
    %1672 = vmatprep.subr.mxu0 0.0
    %1673 = vmatpush1.msra.mxu0 0.0
    %1674 = vmatprep.subr.mxu0 0.0
    %1675 = vmatpush1.msra.mxu0 0.0
    %1676 = vmatprep.subr.mxu0 0.0
    %1677 = vmatpush1.msra.mxu0 0.0
    %1678 = vmatprep.subr.mxu0 0.0
    %1679 = vmatpush1.msra.mxu0 0.0
    %1680 = vmatprep.subr.mxu0 0.0
    %1681 = vmatpush1.msra.mxu0 0.0
    %1682 = vmatprep.subr.mxu0 0.0
    %1683 = vmatpush1.msra.mxu0 0.0
    %1684 = vmatprep.subr.mxu0 0.0
    %1685 = vmatpush1.msra.mxu0 0.0
    %1686 = vmatprep.subr.mxu0 0.0
    %1687 = vmatpush1.msra.mxu0 0.0
    %1688 = vmatprep.subr.mxu0 0.0
    %1689 = vmatpush1.msra.mxu0 0.0
    %1690 = vmatprep.subr.mxu0 0.0
    %1691 = vmatpush1.msra.mxu0 0.0
    %1692 = vmatprep.subr.mxu0 0.0
    %1693 = vmatpush1.msra.mxu0 0.0
    %1694 = vmatprep.subr.mxu0 0.0
    %1695 = vmatpush1.msra.mxu0 0.0
    %1696 = vmatprep.subr.mxu0 0.0
    %1697 = vmatpush1.msra.mxu0 0.0
    %1698 = vmatprep.subr.mxu0 0.0
    %1699 = vmatpush1.msra.mxu0 0.0
    %1700 = vmatprep.subr.mxu0 0.0
    %1701 = vmatpush1.msra.mxu0 0.0
    %1702 = vmatprep.subr.mxu0 0.0
    %1703 = vmatpush1.msra.mxu0 0.0
    %1704 = vmatprep.subr.mxu0 0.0
    %1705 = vmatpush1.msra.mxu0 0.0
    %1706 = vmatprep.subr.mxu0 0.0
    %1707 = vmatpush1.msra.mxu0 0.0
    %1708 = vmatprep.subr.mxu0 0.0
    %1709 = vmatpush1.msra.mxu0 0.0
    %1710 = vmatprep.subr.mxu0 0.0
    %1711 = vmatpush1.msra.mxu0 0.0
    %1712 = vmatprep.subr.mxu0 0.0
    %1713 = vmatpush1.msra.mxu0 0.0
    %1714 = vmatprep.subr.mxu0 0.0
    %1715 = vmatpush1.msra.mxu0 0.0
    %1716 = vmatprep.subr.mxu0 0.0
    %1717 = vmatpush1.msra.mxu0 0.0
    %1718 = vmatprep.subr.mxu0 0.0
    %1719 = vmatpush1.msra.mxu0 0.0
    %1720 = vmatprep.subr.mxu0 0.0
    %1721 = vmatpush1.msra.mxu0 0.0
    %1722 = vmatprep.subr.mxu0 0.0
    %1723 = vmatpush1.msra.mxu0 0.0
    %1724 = vmatprep.subr.mxu0 0.0
    %1725 = vmatpush1.msra.mxu0 0.0
    %1726 = vmatprep.subr.mxu0 0.0
    %1727 = vmatpush1.msra.mxu0 0.0
    %1728 = vmatprep.mubr.f32.mxu0 0.0
    %1729 = vmatmul.mubr.f32.gmra.mrb[0].mxu0 %v515
    %v1730 = vpop.f32.mrb[0].mxu0
    %v1731 = vadd.f32 0.0, %v1730
    %v1732 = vpop.f32.mrb[0].mxu0
    %1733 = vmatprep.mubr.f32.mxu0 0.0
    %1734 = vmatmul.mubr.f32.gmra.mrb[0].mxu0 %v518
    %v1735 = vpop.f32.mrb[0].mxu0
    %v1736 = vadd.f32 0.0, %v1735
    %v1737 = vpop.f32.mrb[0].mxu0
    %1738 = vmatprep.mubr.f32.mxu0 0.0
    %1739 = vmatmul.mubr.f32.gmra.mrb[0].mxu0 %v521
    %v1740 = vpop.f32.mrb[0].mxu0
    %v1741 = vadd.f32 0.0, %v1740
    %v1742 = vpop.f32.mrb[0].mxu0
    %1743 = vmatprep.mubr.f32.mxu0 0.0
    %1744 = vmatmul.mubr.f32.gmra.mrb[0].mxu0 %v524
    %v1745 = vpop.f32.mrb[0].mxu0
    %v1746 = vadd.f32 0.0, %v1745
    %v1747 = vpop.f32.mrb[0].mxu0
    %1748 = vmatprep.mubr.f32.mxu0 0.0
    %1749 = vmatmul.mubr.f32.gmra.mrb[0].mxu0 %v527
    %v1750 = vpop.f32.mrb[0].mxu0
    %v1751 = vadd.f32 0.0, %v1750
    %v1752 = vpop.f32.mrb[0].mxu0
    %1753 = vdwg.mxu0
    %v1754 = vadd.f32 %v1641, %v1731
    %v1755 = vadd.f32 %v1644, %v1736
    %v1756 = vadd.f32 %v1649, %v1741
    %v1757 = vadd.f32 %v1652, %v1746
    %v1758 = vadd.f32 %v1657, %v1751
    %v1759 = vmax.f32 %v1754, 0.0
    %v1760 = vmax.f32 %v1755, 0.0
    %v1761 = vmax.f32 %v1756, 0.0
    %v1762 = vmax.f32 %v1757, 0.0
    %v1763 = vmax.f32 %v1758, 0.0
    %s1764 = scalar_lea.vmem %s13, 72
    %v1765 = vld [vmem:[%s1764] sm:$0xff]
    %v1766 = vld [vmem:[%s1764 + $0x8] sm:$0xff]
    %v1767 = vld [vmem:[%s1764 + $0x10] sm:$0xff]
    %v1768 = vld [vmem:[%s1764 + $0x18] sm:$0xff]
    %v1769 = vld [vmem:[%s1764 + $0x20] sm:$0xff]
    %v1770 = vld [vmem:[%s1764 + $0x28] sm:$0xff]
    %v1771 = vld [vmem:[%s1764 + $0x30] sm:$0xff]
    %v1772 = vld [vmem:[%s1764 + $0x38] sm:$0xff]
    %v1773 = vld [vmem:[%s1764 + $0x40] sm:$0x1]
    %v1774 = vlaneseq
    %v1775 = vshrl.u32 %v1774, 7
    %v1776 = vsub.s32 0, %v1775
    %v1777 = vrot.slane %v1773, %v1776
    %v1779 = vsel %vm642, %v1759, 0
    %v1782 = vsel %vm642, %v1760, 0
    %v1785 = vsel %vm642, %v1761, 0
    %v1788 = vsel %vm642, %v1762, 0
    %v1791 = vsel %vm642, %v1763, 0
    %1793 = vmatprep.subr.mxu0 0.0
    %1794 = vmatpush1.msra.mxu0 %v1765
    %1795 = vmatprep.subr.mxu0 0.0
    %1796 = vmatpush1.msra.mxu0 %v1766
    %1797 = vmatprep.subr.mxu0 0.0
    %1798 = vmatpush1.msra.mxu0 %v1767
    %1799 = vmatprep.subr.mxu0 0.0
    %1800 = vmatpush1.msra.mxu0 %v1768
    %1801 = vmatprep.subr.mxu0 0.0
    %1802 = vmatpush1.msra.mxu0 %v1769
    %1803 = vmatprep.subr.mxu0 0.0
    %1804 = vmatpush1.msra.mxu0 %v1770
    %1805 = vmatprep.subr.mxu0 0.0
    %1806 = vmatpush1.msra.mxu0 %v1771
    %1807 = vmatprep.subr.mxu0 0.0
    %1808 = vmatpush1.msra.mxu0 %v1772
    %1809 = vmatprep.subr.mxu0 0.0
    %1810 = vmatpush1.msra.mxu0 0.0
    %1811 = vmatprep.subr.mxu0 0.0
    %1812 = vmatpush1.msra.mxu0 0.0
    %1813 = vmatprep.subr.mxu0 0.0
    %1814 = vmatpush1.msra.mxu0 0.0
    %1815 = vmatprep.subr.mxu0 0.0
    %1816 = vmatpush1.msra.mxu0 0.0
    %1817 = vmatprep.subr.mxu0 0.0
    %1818 = vmatpush1.msra.mxu0 0.0
    %1819 = vmatprep.subr.mxu0 0.0
    %1820 = vmatpush1.msra.mxu0 0.0
    %1821 = vmatprep.subr.mxu0 0.0
    %1822 = vmatpush1.msra.mxu0 0.0
    %1823 = vmatprep.subr.mxu0 0.0
    %1824 = vmatpush1.msra.mxu0 0.0
    %1825 = vmatprep.subr.mxu0 0.0
    %1826 = vmatpush1.msra.mxu0 0.0
    %1827 = vmatprep.subr.mxu0 0.0
    %1828 = vmatpush1.msra.mxu0 0.0
    %1829 = vmatprep.subr.mxu0 0.0
    %1830 = vmatpush1.msra.mxu0 0.0
    %1831 = vmatprep.subr.mxu0 0.0
    %1832 = vmatpush1.msra.mxu0 0.0
    %1833 = vmatprep.subr.mxu0 0.0
    %1834 = vmatpush1.msra.mxu0 0.0
    %1835 = vmatprep.subr.mxu0 0.0
    %1836 = vmatpush1.msra.mxu0 0.0
    %1837 = vmatprep.subr.mxu0 0.0
    %1838 = vmatpush1.msra.mxu0 0.0
    %1839 = vmatprep.subr.mxu0 0.0
    %1840 = vmatpush1.msra.mxu0 0.0
    %1841 = vmatprep.subr.mxu0 0.0
    %1842 = vmatpush1.msra.mxu0 0.0
    %1843 = vmatprep.subr.mxu0 0.0
    %1844 = vmatpush1.msra.mxu0 0.0
    %1845 = vmatprep.subr.mxu0 0.0
    %1846 = vmatpush1.msra.mxu0 0.0
    %1847 = vmatprep.subr.mxu0 0.0
    %1848 = vmatpush1.msra.mxu0 0.0
    %1849 = vmatprep.subr.mxu0 0.0
    %1850 = vmatpush1.msra.mxu0 0.0
    %1851 = vmatprep.subr.mxu0 0.0
    %1852 = vmatpush1.msra.mxu0 0.0
    %1853 = vmatprep.subr.mxu0 0.0
    %1854 = vmatpush1.msra.mxu0 0.0
    %1855 = vmatprep.subr.mxu0 0.0
    %1856 = vmatpush1.msra.mxu0 0.0
    %1857 = vmatprep.mubr.f32.mxu0 0.0
    %1858 = vmatmul.mubr.f32.gmra.mrb[0].mxu0 %v1779
    %v1859 = vpop.f32.mrb[0].mxu0
    %v1860 = vadd.f32 %v1777, %v1859
    %v1861 = vpop.f32.mrb[0].mxu0
    %1862 = vmatprep.mubr.f32.mxu0 0.0
    %1863 = vmatmul.mubr.f32.gmra.mrb[0].mxu0 %v1782
    %v1864 = vpop.f32.mrb[0].mxu0
    %v1865 = vadd.f32 %v1777, %v1864
    %v1866 = vpop.f32.mrb[0].mxu0
    %1867 = vmatprep.mubr.f32.mxu0 0.0
    %1868 = vmatmul.mubr.f32.gmra.mrb[0].mxu0 %v1785
    %v1869 = vpop.f32.mrb[0].mxu0
    %v1870 = vadd.f32 %v1777, %v1869
    %v1871 = vpop.f32.mrb[0].mxu0
    %1872 = vmatprep.mubr.f32.mxu0 0.0
    %1873 = vmatmul.mubr.f32.gmra.mrb[0].mxu0 %v1788
    %v1874 = vpop.f32.mrb[0].mxu0
    %v1875 = vadd.f32 %v1777, %v1874
    %v1876 = vpop.f32.mrb[0].mxu0
    %1877 = vmatprep.mubr.f32.mxu0 0.0
    %1878 = vmatmul.mubr.f32.gmra.mrb[0].mxu0 %v1791
    %v1879 = vpop.f32.mrb[0].mxu0
    %v1880 = vadd.f32 %v1777, %v1879
    %v1881 = vpop.f32.mrb[0].mxu0
    %1882 = vdwg.mxu0
    %v1883 = vpack.c.bf16 %v1865, %v1860
    %v1884 = vpack.c.bf16 %v1875, %v1870
    %v1885 = vpack.c.bf16 %v1880, %v1880
    %v1887 = vand.u32 %v1885, %v762
    %1889 = vmatprep.subr.bf16.mxu0 0
    %1890 = vmatpush1.bf16.msra.mxu0 %v1883
    %1891 = vmatprep.subr.bf16.mxu0 0
    %1892 = vmatpush1.bf16.msra.mxu0 %v1884
    %1893 = vmatprep.subr.bf16.mxu0 0
    %1894 = vmatpush1.bf16.msra.mxu0 %v1887
    %1895 = vmatprep.subr.bf16.mxu0 0
    %1896 = vmatpush1.bf16.msra.mxu0 0
    %1897 = vmatprep.subr.bf16.mxu0 0
    %1898 = vmatpush1.bf16.msra.mxu0 0
    %1899 = vmatprep.subr.bf16.mxu0 0
    %1900 = vmatpush1.bf16.msra.mxu0 0
    %1901 = vmatprep.subr.bf16.mxu0 0
    %1902 = vmatpush1.bf16.msra.mxu0 0
    %1903 = vmatprep.subr.bf16.mxu0 0
    %1904 = vmatpush1.bf16.msra.mxu0 0
    %1905 = vmatprep.subr.bf16.mxu0 0
    %1906 = vmatpush1.bf16.msra.mxu0 0
    %1907 = vmatprep.subr.bf16.mxu0 0
    %1908 = vmatpush1.bf16.msra.mxu0 0
    %1909 = vmatprep.subr.bf16.mxu0 0
    %1910 = vmatpush1.bf16.msra.mxu0 0
    %1911 = vmatprep.subr.bf16.mxu0 0
    %1912 = vmatpush1.bf16.msra.mxu0 0
    %1913 = vmatprep.subr.bf16.mxu0 0
    %1914 = vmatpush1.bf16.msra.mxu0 0
    %1915 = vmatprep.subr.bf16.mxu0 0
    %1916 = vmatpush1.bf16.msra.mxu0 0
    %1917 = vmatprep.subr.bf16.mxu0 0
    %1918 = vmatpush1.bf16.msra.mxu0 0
    %1919 = vmatprep.subr.bf16.mxu0 0
    %1920 = vmatpush1.bf16.msra.mxu0 0
    %1921 = vmatprep.mubr.bf16.mxu0 0
    %1922 = vmatmul.mubr.bf16.gmra.mrb[0].mxu0 %v758
    %v1923 = vpop.f32.mrb[0].mxu0
    %v1924 = vadd.f32 0.0, %v1923
    %v1925 = vpop.f32.mrb[0].mxu0
    %v1926 = vpop.f32.mrb[0].mxu0
    %v1927 = vadd.f32 0.0, %v1926
    %v1928 = vpop.f32.mrb[0].mxu0
    %1929 = vdwg.mxu0
    %1933 = vrot.lane.b32.xlu0 %v1883, 96
    %v1934 = vpop.permute.xlu0 %1933
    %1935 = vrot.lane.b32.xlu0 %v1884, 96
    %v1936 = vpop.permute.xlu0 %1935
    %1937 = vrot.lane.b32.xlu0 %v1885, 96
    %v1938 = vpop.permute.xlu0 %1937
    %v1942 = vand.u32 %v1938, %v762
    %1944 = vmatprep.subr.bf16.mxu0 0
    %1945 = vmatpush1.bf16.msra.mxu0 %v1934
    %1946 = vmatprep.subr.bf16.mxu0 0
    %1947 = vmatpush1.bf16.msra.mxu0 %v1936
    %1948 = vmatprep.subr.bf16.mxu0 0
    %1949 = vmatpush1.bf16.msra.mxu0 %v1942
    %1950 = vmatprep.subr.bf16.mxu0 0
    %1951 = vmatpush1.bf16.msra.mxu0 0
    %1952 = vmatprep.subr.bf16.mxu0 0
    %1953 = vmatpush1.bf16.msra.mxu0 0
    %1954 = vmatprep.subr.bf16.mxu0 0
    %1955 = vmatpush1.bf16.msra.mxu0 0
    %1956 = vmatprep.subr.bf16.mxu0 0
    %1957 = vmatpush1.bf16.msra.mxu0 0
    %1958 = vmatprep.subr.bf16.mxu0 0
    %1959 = vmatpush1.bf16.msra.mxu0 0
    %1960 = vmatprep.subr.bf16.mxu0 0
    %1961 = vmatpush1.bf16.msra.mxu0 0
    %1962 = vmatprep.subr.bf16.mxu0 0
    %1963 = vmatpush1.bf16.msra.mxu0 0
    %1964 = vmatprep.subr.bf16.mxu0 0
    %1965 = vmatpush1.bf16.msra.mxu0 0
    %1966 = vmatprep.subr.bf16.mxu0 0
    %1967 = vmatpush1.bf16.msra.mxu0 0
    %1968 = vmatprep.subr.bf16.mxu0 0
    %1969 = vmatpush1.bf16.msra.mxu0 0
    %1970 = vmatprep.subr.bf16.mxu0 0
    %1971 = vmatpush1.bf16.msra.mxu0 0
    %1972 = vmatprep.subr.bf16.mxu0 0
    %1973 = vmatpush1.bf16.msra.mxu0 0
    %1974 = vmatprep.subr.bf16.mxu0 0
    %1975 = vmatpush1.bf16.msra.mxu0 0
    %1976 = vmatprep.mubr.bf16.mxu0 0
    %1977 = vmatmul.mubr.bf16.gmra.mrb[0].mxu0 %v824
    %v1978 = vpop.f32.mrb[0].mxu0
    %v1979 = vadd.f32 0.0, %v1978
    %v1980 = vpop.f32.mrb[0].mxu0
    %v1981 = vpop.f32.mrb[0].mxu0
    %v1982 = vadd.f32 0.0, %v1981
    %v1983 = vpop.f32.mrb[0].mxu0
    %1984 = vdwg.mxu0
    %s1985 = scalar_lea.vmem %s14, 104
    %v1986 = vld [vmem:[%s1985] sm:$0xff]
    %v1987 = vld [vmem:[%s1985 + $0x8] sm:$0xff]
    %v1988 = vld [vmem:[%s1985 + $0x10] sm:$0xff]
    %v1989 = vld [vmem:[%s1985 + $0x18] sm:$0xff]
    %v1990 = vld [vmem:[%s1985 + $0x20] sm:$0xff]
    %v1991 = vld [vmem:[%s1985 + $0x28] sm:$0xff]
    %v1992 = vld [vmem:[%s1985 + $0x30] sm:$0xff]
    %v1993 = vld [vmem:[%s1985 + $0x38] sm:$0xff]
    %v1995 = vsel %vm100, %v1924, 0
    %v1998 = vsel %vm100, %v1927, 0
    %2000 = vmatprep.subr.mxu0 0.0
    %2001 = vmatpush1.msra.mxu0 %v1990
    %2002 = vmatprep.subr.mxu0 0.0
    %2003 = vmatpush1.msra.mxu0 %v1991
    %2004 = vmatprep.subr.mxu0 0.0
    %2005 = vmatpush1.msra.mxu0 %v1992
    %2006 = vmatprep.subr.mxu0 0.0
    %2007 = vmatpush1.msra.mxu0 %v1993
    %2008 = vmatprep.subr.mxu0 0.0
    %2009 = vmatpush1.msra.mxu0 0.0
    %2010 = vmatprep.subr.mxu0 0.0
    %2011 = vmatpush1.msra.mxu0 0.0
    %2012 = vmatprep.subr.mxu0 0.0
    %2013 = vmatpush1.msra.mxu0 0.0
    %2014 = vmatprep.subr.mxu0 0.0
    %2015 = vmatpush1.msra.mxu0 0.0
    %2016 = vmatprep.subr.mxu0 0.0
    %2017 = vmatpush1.msra.mxu0 0.0
    %2018 = vmatprep.subr.mxu0 0.0
    %2019 = vmatpush1.msra.mxu0 0.0
    %2020 = vmatprep.subr.mxu0 0.0
    %2021 = vmatpush1.msra.mxu0 0.0
    %2022 = vmatprep.subr.mxu0 0.0
    %2023 = vmatpush1.msra.mxu0 0.0
    %2024 = vmatprep.subr.mxu0 0.0
    %2025 = vmatpush1.msra.mxu0 0.0
    %2026 = vmatprep.subr.mxu0 0.0
    %2027 = vmatpush1.msra.mxu0 0.0
    %2028 = vmatprep.subr.mxu0 0.0
    %2029 = vmatpush1.msra.mxu0 0.0
    %2030 = vmatprep.subr.mxu0 0.0
    %2031 = vmatpush1.msra.mxu0 0.0
    %2032 = vmatprep.subr.mxu0 0.0
    %2033 = vmatpush1.msra.mxu0 0.0
    %2034 = vmatprep.subr.mxu0 0.0
    %2035 = vmatpush1.msra.mxu0 0.0
    %2036 = vmatprep.subr.mxu0 0.0
    %2037 = vmatpush1.msra.mxu0 0.0
    %2038 = vmatprep.subr.mxu0 0.0
    %2039 = vmatpush1.msra.mxu0 0.0
    %2040 = vmatprep.subr.mxu0 0.0
    %2041 = vmatpush1.msra.mxu0 0.0
    %2042 = vmatprep.subr.mxu0 0.0
    %2043 = vmatpush1.msra.mxu0 0.0
    %2044 = vmatprep.subr.mxu0 0.0
    %2045 = vmatpush1.msra.mxu0 0.0
    %2046 = vmatprep.subr.mxu0 0.0
    %2047 = vmatpush1.msra.mxu0 0.0
    %2048 = vmatprep.subr.mxu0 0.0
    %2049 = vmatpush1.msra.mxu0 0.0
    %2050 = vmatprep.subr.mxu0 0.0
    %2051 = vmatpush1.msra.mxu0 0.0
    %2052 = vmatprep.subr.mxu0 0.0
    %2053 = vmatpush1.msra.mxu0 0.0
    %2054 = vmatprep.subr.mxu0 0.0
    %2055 = vmatpush1.msra.mxu0 0.0
    %2056 = vmatprep.subr.mxu0 0.0
    %2057 = vmatpush1.msra.mxu0 0.0
    %2058 = vmatprep.subr.mxu0 0.0
    %2059 = vmatpush1.msra.mxu0 0.0
    %2060 = vmatprep.subr.mxu0 0.0
    %2061 = vmatpush1.msra.mxu0 0.0
    %2062 = vmatprep.subr.mxu0 0.0
    %2063 = vmatpush1.msra.mxu0 0.0
    %2064 = vmatprep.mubr.f32.mxu0 0.0
    %2065 = vmatmul.mubr.f32.gmra.mrb[0].mxu0 %v1995
    %v2066 = vpop.f32.mrb[0].mxu0
    %v2067 = vadd.f32 0.0, %v2066
    %v2068 = vpop.f32.mrb[0].mxu0
    %2069 = vmatprep.mubr.f32.mxu0 0.0
    %2070 = vmatmul.mubr.f32.gmra.mrb[0].mxu0 %v1998
    %v2071 = vpop.f32.mrb[0].mxu0
    %v2072 = vadd.f32 0.0, %v2071
    %v2073 = vpop.f32.mrb[0].mxu0
    %2074 = vdwg.mxu0
    %2075 = vmatprep.subr.mxu0 0.0
    %2076 = vmatpush1.msra.mxu0 %v1986
    %2077 = vmatprep.subr.mxu0 0.0
    %2078 = vmatpush1.msra.mxu0 %v1987
    %2079 = vmatprep.subr.mxu0 0.0
    %2080 = vmatpush1.msra.mxu0 %v1988
    %2081 = vmatprep.subr.mxu0 0.0
    %2082 = vmatpush1.msra.mxu0 %v1989
    %2083 = vmatprep.subr.mxu0 0.0
    %2084 = vmatpush1.msra.mxu0 0.0
    %2085 = vmatprep.subr.mxu0 0.0
    %2086 = vmatpush1.msra.mxu0 0.0
    %2087 = vmatprep.subr.mxu0 0.0
    %2088 = vmatpush1.msra.mxu0 0.0
    %2089 = vmatprep.subr.mxu0 0.0
    %2090 = vmatpush1.msra.mxu0 0.0
    %2091 = vmatprep.subr.mxu0 0.0
    %2092 = vmatpush1.msra.mxu0 0.0
    %2093 = vmatprep.subr.mxu0 0.0
    %2094 = vmatpush1.msra.mxu0 0.0
    %2095 = vmatprep.subr.mxu0 0.0
    %2096 = vmatpush1.msra.mxu0 0.0
    %2097 = vmatprep.subr.mxu0 0.0
    %2098 = vmatpush1.msra.mxu0 0.0
    %2099 = vmatprep.subr.mxu0 0.0
    %2100 = vmatpush1.msra.mxu0 0.0
    %2101 = vmatprep.subr.mxu0 0.0
    %2102 = vmatpush1.msra.mxu0 0.0
    %2103 = vmatprep.subr.mxu0 0.0
    %2104 = vmatpush1.msra.mxu0 0.0
    %2105 = vmatprep.subr.mxu0 0.0
    %2106 = vmatpush1.msra.mxu0 0.0
    %2107 = vmatprep.subr.mxu0 0.0
    %2108 = vmatpush1.msra.mxu0 0.0
    %2109 = vmatprep.subr.mxu0 0.0
    %2110 = vmatpush1.msra.mxu0 0.0
    %2111 = vmatprep.subr.mxu0 0.0
    %2112 = vmatpush1.msra.mxu0 0.0
    %2113 = vmatprep.subr.mxu0 0.0
    %2114 = vmatpush1.msra.mxu0 0.0
    %2115 = vmatprep.subr.mxu0 0.0
    %2116 = vmatpush1.msra.mxu0 0.0
    %2117 = vmatprep.subr.mxu0 0.0
    %2118 = vmatpush1.msra.mxu0 0.0
    %2119 = vmatprep.subr.mxu0 0.0
    %2120 = vmatpush1.msra.mxu0 0.0
    %2121 = vmatprep.subr.mxu0 0.0
    %2122 = vmatpush1.msra.mxu0 0.0
    %2123 = vmatprep.subr.mxu0 0.0
    %2124 = vmatpush1.msra.mxu0 0.0
    %2125 = vmatprep.subr.mxu0 0.0
    %2126 = vmatpush1.msra.mxu0 0.0
    %2127 = vmatprep.subr.mxu0 0.0
    %2128 = vmatpush1.msra.mxu0 0.0
    %2129 = vmatprep.subr.mxu0 0.0
    %2130 = vmatpush1.msra.mxu0 0.0
    %2131 = vmatprep.subr.mxu0 0.0
    %2132 = vmatpush1.msra.mxu0 0.0
    %2133 = vmatprep.subr.mxu0 0.0
    %2134 = vmatpush1.msra.mxu0 0.0
    %2135 = vmatprep.subr.mxu0 0.0
    %2136 = vmatpush1.msra.mxu0 0.0
    %2137 = vmatprep.subr.mxu0 0.0
    %2138 = vmatpush1.msra.mxu0 0.0
    %2139 = vmatprep.mubr.f32.mxu0 0.0
    %2140 = vmatmul.mubr.f32.gmra.mrb[0].mxu0 %v1302
    %v2141 = vpop.f32.mrb[0].mxu0
    %v2142 = vadd.f32 %v2067, %v2141
    %v2143 = vpop.f32.mrb[0].mxu0
    %2144 = vmatprep.mubr.f32.mxu0 0.0
    %2145 = vmatmul.mubr.f32.gmra.mrb[0].mxu0 %v1305
    %v2146 = vpop.f32.mrb[0].mxu0
    %v2147 = vadd.f32 %v2072, %v2146
    %v2148 = vpop.f32.mrb[0].mxu0
    %2149 = vdwg.mxu0
    %v2150 = vld [vmem:[%s1985 + $0x40] sm:$0xff]
    %v2151 = vld [vmem:[%s1985 + $0x48] sm:$0xff]
    %v2152 = vld [vmem:[%s1985 + $0x50] sm:$0xff]
    %v2153 = vld [vmem:[%s1985 + $0x58] sm:$0xff]
    %v2155 = vsel %vm100, %v1979, 0
    %v2158 = vsel %vm100, %v1982, 0
    %2160 = vmatprep.subr.mxu0 0.0
    %2161 = vmatpush1.msra.mxu0 %v2150
    %2162 = vmatprep.subr.mxu0 0.0
    %2163 = vmatpush1.msra.mxu0 %v2151
    %2164 = vmatprep.subr.mxu0 0.0
    %2165 = vmatpush1.msra.mxu0 %v2152
    %2166 = vmatprep.subr.mxu0 0.0
    %2167 = vmatpush1.msra.mxu0 %v2153
    %2168 = vmatprep.subr.mxu0 0.0
    %2169 = vmatpush1.msra.mxu0 0.0
    %2170 = vmatprep.subr.mxu0 0.0
    %2171 = vmatpush1.msra.mxu0 0.0
    %2172 = vmatprep.subr.mxu0 0.0
    %2173 = vmatpush1.msra.mxu0 0.0
    %2174 = vmatprep.subr.mxu0 0.0
    %2175 = vmatpush1.msra.mxu0 0.0
    %2176 = vmatprep.subr.mxu0 0.0
    %2177 = vmatpush1.msra.mxu0 0.0
    %2178 = vmatprep.subr.mxu0 0.0
    %2179 = vmatpush1.msra.mxu0 0.0
    %2180 = vmatprep.subr.mxu0 0.0
    %2181 = vmatpush1.msra.mxu0 0.0
    %2182 = vmatprep.subr.mxu0 0.0
    %2183 = vmatpush1.msra.mxu0 0.0
    %2184 = vmatprep.subr.mxu0 0.0
    %2185 = vmatpush1.msra.mxu0 0.0
    %2186 = vmatprep.subr.mxu0 0.0
    %2187 = vmatpush1.msra.mxu0 0.0
    %2188 = vmatprep.subr.mxu0 0.0
    %2189 = vmatpush1.msra.mxu0 0.0
    %2190 = vmatprep.subr.mxu0 0.0
    %2191 = vmatpush1.msra.mxu0 0.0
    %2192 = vmatprep.subr.mxu0 0.0
    %2193 = vmatpush1.msra.mxu0 0.0
    %2194 = vmatprep.subr.mxu0 0.0
    %2195 = vmatpush1.msra.mxu0 0.0
    %2196 = vmatprep.subr.mxu0 0.0
    %2197 = vmatpush1.msra.mxu0 0.0
    %2198 = vmatprep.subr.mxu0 0.0
    %2199 = vmatpush1.msra.mxu0 0.0
    %2200 = vmatprep.subr.mxu0 0.0
    %2201 = vmatpush1.msra.mxu0 0.0
    %2202 = vmatprep.subr.mxu0 0.0
    %2203 = vmatpush1.msra.mxu0 0.0
    %2204 = vmatprep.subr.mxu0 0.0
    %2205 = vmatpush1.msra.mxu0 0.0
    %2206 = vmatprep.subr.mxu0 0.0
    %2207 = vmatpush1.msra.mxu0 0.0
    %2208 = vmatprep.subr.mxu0 0.0
    %2209 = vmatpush1.msra.mxu0 0.0
    %2210 = vmatprep.subr.mxu0 0.0
    %2211 = vmatpush1.msra.mxu0 0.0
    %2212 = vmatprep.subr.mxu0 0.0
    %2213 = vmatpush1.msra.mxu0 0.0
    %2214 = vmatprep.subr.mxu0 0.0
    %2215 = vmatpush1.msra.mxu0 0.0
    %2216 = vmatprep.subr.mxu0 0.0
    %2217 = vmatpush1.msra.mxu0 0.0
    %2218 = vmatprep.subr.mxu0 0.0
    %2219 = vmatpush1.msra.mxu0 0.0
    %2220 = vmatprep.subr.mxu0 0.0
    %2221 = vmatpush1.msra.mxu0 0.0
    %2222 = vmatprep.subr.mxu0 0.0
    %2223 = vmatpush1.msra.mxu0 0.0
    %2224 = vmatprep.mubr.f32.mxu0 0.0
    %2225 = vmatmul.mubr.f32.gmra.mrb[0].mxu0 %v2155
    %v2226 = vpop.f32.mrb[0].mxu0
    %v2227 = vadd.f32 0.0, %v2226
    %v2228 = vpop.f32.mrb[0].mxu0
    %2229 = vmatprep.mubr.f32.mxu0 0.0
    %2230 = vmatmul.mubr.f32.gmra.mrb[0].mxu0 %v2158
    %v2231 = vpop.f32.mrb[0].mxu0
    %v2232 = vadd.f32 0.0, %v2231
    %v2233 = vpop.f32.mrb[0].mxu0
    %2234 = vdwg.mxu0
    %v2235 = vadd.f32 %v2142, %v2227
    %v2236 = vadd.f32 %v2147, %v2232
    %v2237 = vld [vmem:[%s1985 + $0x60] sm:$0xff]
    %2238 = vmatprep.subr.mxu0 0.0
    %2239 = vmatpush1.msra.mxu0 %v2237
    %2240 = vmatprep.subr.mxu0 0.0
    %2241 = vmatpush1.msra.mxu0 0.0
    %2242 = vmatprep.subr.mxu0 0.0
    %2243 = vmatpush1.msra.mxu0 0.0
    %2244 = vmatprep.subr.mxu0 0.0
    %2245 = vmatpush1.msra.mxu0 0.0
    %2246 = vmatprep.subr.mxu0 0.0
    %2247 = vmatpush1.msra.mxu0 0.0
    %2248 = vmatprep.subr.mxu0 0.0
    %2249 = vmatpush1.msra.mxu0 0.0
    %2250 = vmatprep.subr.mxu0 0.0
    %2251 = vmatpush1.msra.mxu0 0.0
    %2252 = vmatprep.subr.mxu0 0.0
    %2253 = vmatpush1.msra.mxu0 0.0
    %2254 = vmatprep.subr.mxu0 0.0
    %2255 = vmatpush1.msra.mxu0 0.0
    %2256 = vmatprep.subr.mxu0 0.0
    %2257 = vmatpush1.msra.mxu0 0.0
    %2258 = vmatprep.subr.mxu0 0.0
    %2259 = vmatpush1.msra.mxu0 0.0
    %2260 = vmatprep.subr.mxu0 0.0
    %2261 = vmatpush1.msra.mxu0 0.0
    %2262 = vmatprep.subr.mxu0 0.0
    %2263 = vmatpush1.msra.mxu0 0.0
    %2264 = vmatprep.subr.mxu0 0.0
    %2265 = vmatpush1.msra.mxu0 0.0
    %2266 = vmatprep.subr.mxu0 0.0
    %2267 = vmatpush1.msra.mxu0 0.0
    %2268 = vmatprep.subr.mxu0 0.0
    %2269 = vmatpush1.msra.mxu0 0.0
    %2270 = vmatprep.subr.mxu0 0.0
    %2271 = vmatpush1.msra.mxu0 0.0
    %2272 = vmatprep.subr.mxu0 0.0
    %2273 = vmatpush1.msra.mxu0 0.0
    %2274 = vmatprep.subr.mxu0 0.0
    %2275 = vmatpush1.msra.mxu0 0.0
    %2276 = vmatprep.subr.mxu0 0.0
    %2277 = vmatpush1.msra.mxu0 0.0
    %2278 = vmatprep.subr.mxu0 0.0
    %2279 = vmatpush1.msra.mxu0 0.0
    %2280 = vmatprep.subr.mxu0 0.0
    %2281 = vmatpush1.msra.mxu0 0.0
    %2282 = vmatprep.subr.mxu0 0.0
    %2283 = vmatpush1.msra.mxu0 0.0
    %2284 = vmatprep.subr.mxu0 0.0
    %2285 = vmatpush1.msra.mxu0 0.0
    %2286 = vmatprep.subr.mxu0 0.0
    %2287 = vmatpush1.msra.mxu0 0.0
    %2288 = vmatprep.subr.mxu0 0.0
    %2289 = vmatpush1.msra.mxu0 0.0
    %2290 = vmatprep.subr.mxu0 0.0
    %2291 = vmatpush1.msra.mxu0 0.0
    %2292 = vmatprep.subr.mxu0 0.0
    %2293 = vmatpush1.msra.mxu0 0.0
    %2294 = vmatprep.subr.mxu0 0.0
    %2295 = vmatpush1.msra.mxu0 0.0
    %2296 = vmatprep.subr.mxu0 0.0
    %2297 = vmatpush1.msra.mxu0 0.0
    %2298 = vmatprep.subr.mxu0 0.0
    %2299 = vmatpush1.msra.mxu0 0.0
    %2300 = vmatprep.subr.mxu0 0.0
    %2301 = vmatpush1.msra.mxu0 0.0
    %2302 = vmatprep.mubr.f32.mxu0 0.0
    %2303 = vmatmul.mubr.f32.gmra.mrb[0].mxu0 %v1123
    %v2304 = vpop.f32.mrb[0].mxu0
    %v2305 = vadd.f32 0.0, %v2304
    %v2306 = vpop.f32.mrb[0].mxu0
    %2307 = vmatprep.mubr.f32.mxu0 0.0
    %2308 = vmatmul.mubr.f32.gmra.mrb[0].mxu0 %v1126
    %v2309 = vpop.f32.mrb[0].mxu0
    %v2310 = vadd.f32 0.0, %v2309
    %v2311 = vpop.f32.mrb[0].mxu0
    %2312 = vdwg.mxu0
    %v2313 = vadd.f32 %v2235, %v2305
    %v2314 = vadd.f32 %v2236, %v2310
    %v2315 = vmax.f32 %v2313, 0.0
    %v2316 = vmax.f32 %v2314, 0.0
    %s2317 = scalar_lea.vmem %s15, 40
    %v2318 = vld [vmem:[%s2317] sm:$0xff]
    %v2319 = vld [vmem:[%s2317 + $0x8] sm:$0xff]
    %v2320 = vld [vmem:[%s2317 + $0x10] sm:$0xff]
    %v2321 = vld [vmem:[%s2317 + $0x18] sm:$0xff]
    %v2322 = vld [vmem:[%s2317 + $0x20] sm:$0x1]
    %v2323 = vlaneseq
    %v2324 = vshrl.u32 %v2323, 7
    %v2325 = vsub.s32 0, %v2324
    %v2326 = vrot.slane %v2322, %v2325
    %v2328 = vsel %vm100, %v2315, 0
    %v2331 = vsel %vm100, %v2316, 0
    %2333 = vmatprep.subr.mxu0 0.0
    %2334 = vmatpush1.msra.mxu0 %v2318
    %2335 = vmatprep.subr.mxu0 0.0
    %2336 = vmatpush1.msra.mxu0 %v2319
    %2337 = vmatprep.subr.mxu0 0.0
    %2338 = vmatpush1.msra.mxu0 %v2320
    %2339 = vmatprep.subr.mxu0 0.0
    %2340 = vmatpush1.msra.mxu0 %v2321
    %2341 = vmatprep.subr.mxu0 0.0
    %2342 = vmatpush1.msra.mxu0 0.0
    %2343 = vmatprep.subr.mxu0 0.0
    %2344 = vmatpush1.msra.mxu0 0.0
    %2345 = vmatprep.subr.mxu0 0.0
    %2346 = vmatpush1.msra.mxu0 0.0
    %2347 = vmatprep.subr.mxu0 0.0
    %2348 = vmatpush1.msra.mxu0 0.0
    %2349 = vmatprep.subr.mxu0 0.0
    %2350 = vmatpush1.msra.mxu0 0.0
    %2351 = vmatprep.subr.mxu0 0.0
    %2352 = vmatpush1.msra.mxu0 0.0
    %2353 = vmatprep.subr.mxu0 0.0
    %2354 = vmatpush1.msra.mxu0 0.0
    %2355 = vmatprep.subr.mxu0 0.0
    %2356 = vmatpush1.msra.mxu0 0.0
    %2357 = vmatprep.subr.mxu0 0.0
    %2358 = vmatpush1.msra.mxu0 0.0
    %2359 = vmatprep.subr.mxu0 0.0
    %2360 = vmatpush1.msra.mxu0 0.0
    %2361 = vmatprep.subr.mxu0 0.0
    %2362 = vmatpush1.msra.mxu0 0.0
    %2363 = vmatprep.subr.mxu0 0.0
    %2364 = vmatpush1.msra.mxu0 0.0
    %2365 = vmatprep.subr.mxu0 0.0
    %2366 = vmatpush1.msra.mxu0 0.0
    %2367 = vmatprep.subr.mxu0 0.0
    %2368 = vmatpush1.msra.mxu0 0.0
    %2369 = vmatprep.subr.mxu0 0.0
    %2370 = vmatpush1.msra.mxu0 0.0
    %2371 = vmatprep.subr.mxu0 0.0
    %2372 = vmatpush1.msra.mxu0 0.0
    %2373 = vmatprep.subr.mxu0 0.0
    %2374 = vmatpush1.msra.mxu0 0.0
    %2375 = vmatprep.subr.mxu0 0.0
    %2376 = vmatpush1.msra.mxu0 0.0
    %2377 = vmatprep.subr.mxu0 0.0
    %2378 = vmatpush1.msra.mxu0 0.0
    %2379 = vmatprep.subr.mxu0 0.0
    %2380 = vmatpush1.msra.mxu0 0.0
    %2381 = vmatprep.subr.mxu0 0.0
    %2382 = vmatpush1.msra.mxu0 0.0
    %2383 = vmatprep.subr.mxu0 0.0
    %2384 = vmatpush1.msra.mxu0 0.0
    %2385 = vmatprep.subr.mxu0 0.0
    %2386 = vmatpush1.msra.mxu0 0.0
    %2387 = vmatprep.subr.mxu0 0.0
    %2388 = vmatpush1.msra.mxu0 0.0
    %2389 = vmatprep.subr.mxu0 0.0
    %2390 = vmatpush1.msra.mxu0 0.0
    %2391 = vmatprep.subr.mxu0 0.0
    %2392 = vmatpush1.msra.mxu0 0.0
    %2393 = vmatprep.subr.mxu0 0.0
    %2394 = vmatpush1.msra.mxu0 0.0
    %2395 = vmatprep.subr.mxu0 0.0
    %2396 = vmatpush1.msra.mxu0 0.0
    %2397 = vmatprep.mubr.f32.mxu0 0.0
    %2398 = vmatmul.mubr.f32.gmra.mrb[0].mxu0 %v2328
    %v2399 = vpop.f32.mrb[0].mxu0
    %v2400 = vadd.f32 %v2326, %v2399
    %v2401 = vpop.f32.mrb[0].mxu0
    %2402 = vmatprep.mubr.f32.mxu0 0.0
    %2403 = vmatmul.mubr.f32.gmra.mrb[0].mxu0 %v2331
    %v2404 = vpop.f32.mrb[0].mxu0
    %v2405 = vadd.f32 %v2326, %v2404
    %v2406 = vpop.f32.mrb[0].mxu0
    %2407 = vdwg.mxu0
    %v2408 = vmul.f32 %v2400, 0.001
    %v2409 = vmul.f32 %v2405, 0.001
    %v2410 = vadd.f32 %v1299, %v2408
    %v2411 = vadd.f32 %v1300, %v2409
    %s2412 = scalar_lea.vmem %s16, 40
    %v2413 = vld [vmem:[%s2412] sm:$0xff]
    %v2414 = vld [vmem:[%s2412 + $0x8] sm:$0xff]
    %v2415 = vld [vmem:[%s2412 + $0x10] sm:$0xff]
    %v2416 = vld [vmem:[%s2412 + $0x18] sm:$0xff]
    %v2417 = vld [vmem:[%s2412 + $0x20] sm:$0x1]
    %v2418 = vlaneseq
    %v2419 = vshrl.u32 %v2418, 7
    %v2420 = vsub.s32 0, %v2419
    %v2421 = vrot.slane %v2417, %v2420
    %v2423 = vsel %vm100, %v2410, 0
    %v2426 = vsel %vm100, %v2411, 0
    %2428 = vmatprep.subr.mxu0 0.0
    %2429 = vmatpush1.msra.mxu0 %v2413
    %2430 = vmatprep.subr.mxu0 0.0
    %2431 = vmatpush1.msra.mxu0 %v2414
    %2432 = vmatprep.subr.mxu0 0.0
    %2433 = vmatpush1.msra.mxu0 %v2415
    %2434 = vmatprep.subr.mxu0 0.0
    %2435 = vmatpush1.msra.mxu0 %v2416
    %2436 = vmatprep.subr.mxu0 0.0
    %2437 = vmatpush1.msra.mxu0 0.0
    %2438 = vmatprep.subr.mxu0 0.0
    %2439 = vmatpush1.msra.mxu0 0.0
    %2440 = vmatprep.subr.mxu0 0.0
    %2441 = vmatpush1.msra.mxu0 0.0
    %2442 = vmatprep.subr.mxu0 0.0
    %2443 = vmatpush1.msra.mxu0 0.0
    %2444 = vmatprep.subr.mxu0 0.0
    %2445 = vmatpush1.msra.mxu0 0.0
    %2446 = vmatprep.subr.mxu0 0.0
    %2447 = vmatpush1.msra.mxu0 0.0
    %2448 = vmatprep.subr.mxu0 0.0
    %2449 = vmatpush1.msra.mxu0 0.0
    %2450 = vmatprep.subr.mxu0 0.0
    %2451 = vmatpush1.msra.mxu0 0.0
    %2452 = vmatprep.subr.mxu0 0.0
    %2453 = vmatpush1.msra.mxu0 0.0
    %2454 = vmatprep.subr.mxu0 0.0
    %2455 = vmatpush1.msra.mxu0 0.0
    %2456 = vmatprep.subr.mxu0 0.0
    %2457 = vmatpush1.msra.mxu0 0.0
    %2458 = vmatprep.subr.mxu0 0.0
    %2459 = vmatpush1.msra.mxu0 0.0
    %2460 = vmatprep.subr.mxu0 0.0
    %2461 = vmatpush1.msra.mxu0 0.0
    %2462 = vmatprep.subr.mxu0 0.0
    %2463 = vmatpush1.msra.mxu0 0.0
    %2464 = vmatprep.subr.mxu0 0.0
    %2465 = vmatpush1.msra.mxu0 0.0
    %2466 = vmatprep.subr.mxu0 0.0
    %2467 = vmatpush1.msra.mxu0 0.0
    %2468 = vmatprep.subr.mxu0 0.0
    %2469 = vmatpush1.msra.mxu0 0.0
    %2470 = vmatprep.subr.mxu0 0.0
    %2471 = vmatpush1.msra.mxu0 0.0
    %2472 = vmatprep.subr.mxu0 0.0
    %2473 = vmatpush1.msra.mxu0 0.0
    %2474 = vmatprep.subr.mxu0 0.0
    %2475 = vmatpush1.msra.mxu0 0.0
    %2476 = vmatprep.subr.mxu0 0.0
    %2477 = vmatpush1.msra.mxu0 0.0
    %2478 = vmatprep.subr.mxu0 0.0
    %2479 = vmatpush1.msra.mxu0 0.0
    %2480 = vmatprep.subr.mxu0 0.0
    %2481 = vmatpush1.msra.mxu0 0.0
    %2482 = vmatprep.subr.mxu0 0.0
    %2483 = vmatpush1.msra.mxu0 0.0
    %2484 = vmatprep.subr.mxu0 0.0
    %2485 = vmatpush1.msra.mxu0 0.0
    %2486 = vmatprep.subr.mxu0 0.0
    %2487 = vmatpush1.msra.mxu0 0.0
    %2488 = vmatprep.subr.mxu0 0.0
    %2489 = vmatpush1.msra.mxu0 0.0
    %2490 = vmatprep.subr.mxu0 0.0
    %2491 = vmatpush1.msra.mxu0 0.0
    %2492 = vmatprep.mubr.f32.mxu0 0.0
    %2493 = vmatmul.mubr.f32.gmra.mrb[0].mxu0 %v2423
    %v2494 = vpop.f32.mrb[0].mxu0
    %v2495 = vadd.f32 %v2421, %v2494
    %v2496 = vpop.f32.mrb[0].mxu0
    %2497 = vmatprep.mubr.f32.mxu0 0.0
    %2498 = vmatmul.mubr.f32.gmra.mrb[0].mxu0 %v2426
    %v2499 = vpop.f32.mrb[0].mxu0
    %v2500 = vadd.f32 %v2421, %v2499
    %v2501 = vpop.f32.mrb[0].mxu0
    %2502 = vdwg.mxu0
    %v2503 = vmax.f32 %v2495, 0.0
    %v2504 = vmax.f32 %v2500, 0.0
    %s2505 = scalar_lea.vmem %s17, 40
    %v2506 = vld [vmem:[%s2505] sm:$0xff]
    %v2507 = vld [vmem:[%s2505 + $0x8] sm:$0xff]
    %v2508 = vld [vmem:[%s2505 + $0x10] sm:$0xff]
    %v2509 = vld [vmem:[%s2505 + $0x18] sm:$0xff]
    %v2510 = vld [vmem:[%s2505 + $0x20] sm:$0x1]
    %v2511 = vlaneseq
    %v2512 = vshrl.u32 %v2511, 7
    %v2513 = vsub.s32 0, %v2512
    %v2514 = vrot.slane %v2510, %v2513
    %v2516 = vsel %vm100, %v2503, 0
    %v2519 = vsel %vm100, %v2504, 0
    %2521 = vmatprep.subr.mxu0 0.0
    %2522 = vmatpush1.msra.mxu0 %v2506
    %2523 = vmatprep.subr.mxu0 0.0
    %2524 = vmatpush1.msra.mxu0 %v2507
    %2525 = vmatprep.subr.mxu0 0.0
    %2526 = vmatpush1.msra.mxu0 %v2508
    %2527 = vmatprep.subr.mxu0 0.0
    %2528 = vmatpush1.msra.mxu0 %v2509
    %2529 = vmatprep.subr.mxu0 0.0
    %2530 = vmatpush1.msra.mxu0 0.0
    %2531 = vmatprep.subr.mxu0 0.0
    %2532 = vmatpush1.msra.mxu0 0.0
    %2533 = vmatprep.subr.mxu0 0.0
    %2534 = vmatpush1.msra.mxu0 0.0
    %2535 = vmatprep.subr.mxu0 0.0
    %2536 = vmatpush1.msra.mxu0 0.0
    %2537 = vmatprep.subr.mxu0 0.0
    %2538 = vmatpush1.msra.mxu0 0.0
    %2539 = vmatprep.subr.mxu0 0.0
    %2540 = vmatpush1.msra.mxu0 0.0
    %2541 = vmatprep.subr.mxu0 0.0
    %2542 = vmatpush1.msra.mxu0 0.0
    %2543 = vmatprep.subr.mxu0 0.0
    %2544 = vmatpush1.msra.mxu0 0.0
    %2545 = vmatprep.subr.mxu0 0.0
    %2546 = vmatpush1.msra.mxu0 0.0
    %2547 = vmatprep.subr.mxu0 0.0
    %2548 = vmatpush1.msra.mxu0 0.0
    %2549 = vmatprep.subr.mxu0 0.0
    %2550 = vmatpush1.msra.mxu0 0.0
    %2551 = vmatprep.subr.mxu0 0.0
    %2552 = vmatpush1.msra.mxu0 0.0
    %2553 = vmatprep.subr.mxu0 0.0
    %2554 = vmatpush1.msra.mxu0 0.0
    %2555 = vmatprep.subr.mxu0 0.0
    %2556 = vmatpush1.msra.mxu0 0.0
    %2557 = vmatprep.subr.mxu0 0.0
    %2558 = vmatpush1.msra.mxu0 0.0
    %2559 = vmatprep.subr.mxu0 0.0
    %2560 = vmatpush1.msra.mxu0 0.0
    %2561 = vmatprep.subr.mxu0 0.0
    %2562 = vmatpush1.msra.mxu0 0.0
    %2563 = vmatprep.subr.mxu0 0.0
    %2564 = vmatpush1.msra.mxu0 0.0
    %2565 = vmatprep.subr.mxu0 0.0
    %2566 = vmatpush1.msra.mxu0 0.0
    %2567 = vmatprep.subr.mxu0 0.0
    %2568 = vmatpush1.msra.mxu0 0.0
    %2569 = vmatprep.subr.mxu0 0.0
    %2570 = vmatpush1.msra.mxu0 0.0
    %2571 = vmatprep.subr.mxu0 0.0
    %2572 = vmatpush1.msra.mxu0 0.0
    %2573 = vmatprep.subr.mxu0 0.0
    %2574 = vmatpush1.msra.mxu0 0.0
    %2575 = vmatprep.subr.mxu0 0.0
    %2576 = vmatpush1.msra.mxu0 0.0
    %2577 = vmatprep.subr.mxu0 0.0
    %2578 = vmatpush1.msra.mxu0 0.0
    %2579 = vmatprep.subr.mxu0 0.0
    %2580 = vmatpush1.msra.mxu0 0.0
    %2581 = vmatprep.subr.mxu0 0.0
    %2582 = vmatpush1.msra.mxu0 0.0
    %2583 = vmatprep.subr.mxu0 0.0
    %2584 = vmatpush1.msra.mxu0 0.0
    %2585 = vmatprep.mubr.f32.mxu0 0.0
    %2586 = vmatmul.mubr.f32.gmra.mrb[0].mxu0 %v2516
    %v2587 = vpop.f32.mrb[0].mxu0
    %v2588 = vadd.f32 %v2514, %v2587
    %v2589 = vpop.f32.mrb[0].mxu0
    %2590 = vmatprep.mubr.f32.mxu0 0.0
    %2591 = vmatmul.mubr.f32.gmra.mrb[0].mxu0 %v2519
    %v2592 = vpop.f32.mrb[0].mxu0
    %v2593 = vadd.f32 %v2514, %v2592
    %v2594 = vpop.f32.mrb[0].mxu0
    %2595 = vdwg.mxu0
    %s2596 = scalar_lea.vmem %s11, 64
    %v2597 = vld [vmem:[%s2596] sm:$0xff]
    %v2598 = vld [vmem:[%s2596 + $0x8] sm:$0xff]
    %v2599 = vld [vmem:[%s2596 + $0x10] sm:$0xff]
    %v2600 = vld [vmem:[%s2596 + $0x18] sm:$0xff]
    %2601 = vmatprep.subr.mxu0 0.0
    %2602 = vmatpush1.msra.mxu0 %v2597
    %2603 = vmatprep.subr.mxu0 0.0
    %2604 = vmatpush1.msra.mxu0 %v2598
    %2605 = vmatprep.subr.mxu0 0.0
    %2606 = vmatpush1.msra.mxu0 %v2599
    %2607 = vmatprep.subr.mxu0 0.0
    %2608 = vmatpush1.msra.mxu0 %v2600
    %2609 = vmatprep.subr.mxu0 0.0
    %2610 = vmatpush1.msra.mxu0 0.0
    %2611 = vmatprep.subr.mxu0 0.0
    %2612 = vmatpush1.msra.mxu0 0.0
    %2613 = vmatprep.subr.mxu0 0.0
    %2614 = vmatpush1.msra.mxu0 0.0
    %2615 = vmatprep.subr.mxu0 0.0
    %2616 = vmatpush1.msra.mxu0 0.0
    %2617 = vmatprep.subr.mxu0 0.0
    %2618 = vmatpush1.msra.mxu0 0.0
    %2619 = vmatprep.subr.mxu0 0.0
    %2620 = vmatpush1.msra.mxu0 0.0
    %2621 = vmatprep.subr.mxu0 0.0
    %2622 = vmatpush1.msra.mxu0 0.0
    %2623 = vmatprep.subr.mxu0 0.0
    %2624 = vmatpush1.msra.mxu0 0.0
    %2625 = vmatprep.subr.mxu0 0.0
    %2626 = vmatpush1.msra.mxu0 0.0
    %2627 = vmatprep.subr.mxu0 0.0
    %2628 = vmatpush1.msra.mxu0 0.0
    %2629 = vmatprep.subr.mxu0 0.0
    %2630 = vmatpush1.msra.mxu0 0.0
    %2631 = vmatprep.subr.mxu0 0.0
    %2632 = vmatpush1.msra.mxu0 0.0
    %2633 = vmatprep.subr.mxu0 0.0
    %2634 = vmatpush1.msra.mxu0 0.0
    %2635 = vmatprep.subr.mxu0 0.0
    %2636 = vmatpush1.msra.mxu0 0.0
    %2637 = vmatprep.subr.mxu0 0.0
    %2638 = vmatpush1.msra.mxu0 0.0
    %2639 = vmatprep.subr.mxu0 0.0
    %2640 = vmatpush1.msra.mxu0 0.0
    %2641 = vmatprep.subr.mxu0 0.0
    %2642 = vmatpush1.msra.mxu0 0.0
    %2643 = vmatprep.subr.mxu0 0.0
    %2644 = vmatpush1.msra.mxu0 0.0
    %2645 = vmatprep.subr.mxu0 0.0
    %2646 = vmatpush1.msra.mxu0 0.0
    %2647 = vmatprep.subr.mxu0 0.0
    %2648 = vmatpush1.msra.mxu0 0.0
    %2649 = vmatprep.subr.mxu0 0.0
    %2650 = vmatpush1.msra.mxu0 0.0
    %2651 = vmatprep.subr.mxu0 0.0
    %2652 = vmatpush1.msra.mxu0 0.0
    %2653 = vmatprep.subr.mxu0 0.0
    %2654 = vmatpush1.msra.mxu0 0.0
    %2655 = vmatprep.subr.mxu0 0.0
    %2656 = vmatpush1.msra.mxu0 0.0
    %2657 = vmatprep.subr.mxu0 0.0
    %2658 = vmatpush1.msra.mxu0 0.0
    %2659 = vmatprep.subr.mxu0 0.0
    %2660 = vmatpush1.msra.mxu0 0.0
    %2661 = vmatprep.subr.mxu0 0.0
    %2662 = vmatpush1.msra.mxu0 0.0
    %2663 = vmatprep.subr.mxu0 0.0
    %2664 = vmatpush1.msra.mxu0 0.0
    %2665 = vmatprep.mubr.f32.mxu0 0.0
    %2666 = vmatmul.mubr.f32.gmra.mrb[0].mxu0 %v2423
    %v2667 = vpop.f32.mrb[0].mxu0
    %v2668 = vadd.f32 0.0, %v2667
    %v2669 = vpop.f32.mrb[0].mxu0
    %2670 = vmatprep.mubr.f32.mxu0 0.0
    %2671 = vmatmul.mubr.f32.gmra.mrb[0].mxu0 %v2426
    %v2672 = vpop.f32.mrb[0].mxu0
    %v2673 = vadd.f32 0.0, %v2672
    %v2674 = vpop.f32.mrb[0].mxu0
    %2675 = vdwg.mxu0
    %v2676 = vpack.c.bf16 %v2673, %v2668
    %2678 = vrot.lane.b32.xlu0 %v2676, 64
    %v2679 = vpop.permute.xlu0 %2678
    %2681 = vmatprep.subr.bf16.mxu0 0
    %2682 = vmatpush1.bf16.msra.mxu0 %v2679
    %2683 = vmatprep.subr.bf16.mxu0 0
    %2684 = vmatpush1.bf16.msra.mxu0 0
    %2685 = vmatprep.subr.bf16.mxu0 0
    %2686 = vmatpush1.bf16.msra.mxu0 0
    %2687 = vmatprep.subr.bf16.mxu0 0
    %2688 = vmatpush1.bf16.msra.mxu0 0
    %2689 = vmatprep.subr.bf16.mxu0 0
    %2690 = vmatpush1.bf16.msra.mxu0 0
    %2691 = vmatprep.subr.bf16.mxu0 0
    %2692 = vmatpush1.bf16.msra.mxu0 0
    %2693 = vmatprep.subr.bf16.mxu0 0
    %2694 = vmatpush1.bf16.msra.mxu0 0
    %2695 = vmatprep.subr.bf16.mxu0 0
    %2696 = vmatpush1.bf16.msra.mxu0 0
    %2697 = vmatprep.subr.bf16.mxu0 0
    %2698 = vmatpush1.bf16.msra.mxu0 0
    %2699 = vmatprep.subr.bf16.mxu0 0
    %2700 = vmatpush1.bf16.msra.mxu0 0
    %2701 = vmatprep.subr.bf16.mxu0 0
    %2702 = vmatpush1.bf16.msra.mxu0 0
    %2703 = vmatprep.subr.bf16.mxu0 0
    %2704 = vmatpush1.bf16.msra.mxu0 0
    %2705 = vmatprep.subr.bf16.mxu0 0
    %2706 = vmatpush1.bf16.msra.mxu0 0
    %2707 = vmatprep.subr.bf16.mxu0 0
    %2708 = vmatpush1.bf16.msra.mxu0 0
    %2709 = vmatprep.subr.bf16.mxu0 0
    %2710 = vmatpush1.bf16.msra.mxu0 0
    %2711 = vmatprep.subr.bf16.mxu0 0
    %2712 = vmatpush1.bf16.msra.mxu0 0
    %2713 = vmatprep.mubr.bf16.mxu0 0
    %2714 = vmatmul.mubr.bf16.gmra.mrb[0].mxu0 %v370
    %v2715 = vpop.f32.mrb[0].mxu0
    %v2716 = vadd.f32 0.0, %v2715
    %v2717 = vpop.f32.mrb[0].mxu0
    %v2718 = vpop.f32.mrb[0].mxu0
    %v2719 = vadd.f32 0.0, %v2718
    %v2720 = vpop.f32.mrb[0].mxu0
    %2721 = vmatprep.mubr.bf16.mxu0 0
    %2722 = vmatmul.mubr.bf16.gmra.mrb[0].mxu0 %v373
    %v2723 = vpop.f32.mrb[0].mxu0
    %v2724 = vadd.f32 0.0, %v2723
    %v2725 = vpop.f32.mrb[0].mxu0
    %v2726 = vpop.f32.mrb[0].mxu0
    %v2727 = vadd.f32 0.0, %v2726
    %v2728 = vpop.f32.mrb[0].mxu0
    %2729 = vmatprep.mubr.bf16.mxu0 0
    %2730 = vmatmul.mubr.bf16.gmra.mrb[0].mxu0 %v376
    %v2731 = vpop.f32.mrb[0].mxu0
    %v2732 = vadd.f32 0.0, %v2731
    %v2733 = vpop.f32.mrb[0].mxu0
    %v2734 = vpop.f32.mrb[0].mxu0
    %v2735 = vpop.f32.mrb[0].mxu0
    %2736 = vdwg.mxu0
    %2737 = vmatprep.subr.bf16.mxu0 0
    %2738 = vmatpush1.bf16.msra.mxu0 %v2676
    %2739 = vmatprep.subr.bf16.mxu0 0
    %2740 = vmatpush1.bf16.msra.mxu0 0
    %2741 = vmatprep.subr.bf16.mxu0 0
    %2742 = vmatpush1.bf16.msra.mxu0 0
    %2743 = vmatprep.subr.bf16.mxu0 0
    %2744 = vmatpush1.bf16.msra.mxu0 0
    %2745 = vmatprep.subr.bf16.mxu0 0
    %2746 = vmatpush1.bf16.msra.mxu0 0
    %2747 = vmatprep.subr.bf16.mxu0 0
    %2748 = vmatpush1.bf16.msra.mxu0 0
    %2749 = vmatprep.subr.bf16.mxu0 0
    %2750 = vmatpush1.bf16.msra.mxu0 0
    %2751 = vmatprep.subr.bf16.mxu0 0
    %2752 = vmatpush1.bf16.msra.mxu0 0
    %2753 = vmatprep.subr.bf16.mxu0 0
    %2754 = vmatpush1.bf16.msra.mxu0 0
    %2755 = vmatprep.subr.bf16.mxu0 0
    %2756 = vmatpush1.bf16.msra.mxu0 0
    %2757 = vmatprep.subr.bf16.mxu0 0
    %2758 = vmatpush1.bf16.msra.mxu0 0
    %2759 = vmatprep.subr.bf16.mxu0 0
    %2760 = vmatpush1.bf16.msra.mxu0 0
    %2761 = vmatprep.subr.bf16.mxu0 0
    %2762 = vmatpush1.bf16.msra.mxu0 0
    %2763 = vmatprep.subr.bf16.mxu0 0
    %2764 = vmatpush1.bf16.msra.mxu0 0
    %2765 = vmatprep.subr.bf16.mxu0 0
    %2766 = vmatpush1.bf16.msra.mxu0 0
    %2767 = vmatprep.subr.bf16.mxu0 0
    %2768 = vmatpush1.bf16.msra.mxu0 0
    %2769 = vmatprep.mubr.bf16.mxu0 0
    %2770 = vmatmul.mubr.bf16.gmra.mrb[0].mxu0 %v448
    %v2771 = vpop.f32.mrb[0].mxu0
    %v2772 = vadd.f32 %v2716, %v2771
    %v2773 = vpop.f32.mrb[0].mxu0
    %v2774 = vpop.f32.mrb[0].mxu0
    %v2775 = vadd.f32 %v2719, %v2774
    %v2776 = vpop.f32.mrb[0].mxu0
    %2777 = vmatprep.mubr.bf16.mxu0 0
    %2778 = vmatmul.mubr.bf16.gmra.mrb[0].mxu0 %v451
    %v2779 = vpop.f32.mrb[0].mxu0
    %v2780 = vadd.f32 %v2724, %v2779
    %v2781 = vpop.f32.mrb[0].mxu0
    %v2782 = vpop.f32.mrb[0].mxu0
    %v2783 = vadd.f32 %v2727, %v2782
    %v2784 = vpop.f32.mrb[0].mxu0
    %2785 = vmatprep.mubr.bf16.mxu0 0
    %2786 = vmatmul.mubr.bf16.gmra.mrb[0].mxu0 %v454
    %v2787 = vpop.f32.mrb[0].mxu0
    %v2788 = vadd.f32 %v2732, %v2787
    %v2789 = vpop.f32.mrb[0].mxu0
    %v2790 = vpop.f32.mrb[0].mxu0
    %v2791 = vpop.f32.mrb[0].mxu0
    %2792 = vdwg.mxu0
    %s2793 = scalar_lea.vmem %s12, 16
    %v2794 = vld [vmem:[%s2793] sm:$0xff]
    %2795 = vmatprep.subr.mxu0 0.0
    %2796 = vmatpush1.msra.mxu0 %v2794
    %2797 = vmatprep.subr.mxu0 0.0
    %2798 = vmatpush1.msra.mxu0 0.0
    %2799 = vmatprep.subr.mxu0 0.0
    %2800 = vmatpush1.msra.mxu0 0.0
    %2801 = vmatprep.subr.mxu0 0.0
    %2802 = vmatpush1.msra.mxu0 0.0
    %2803 = vmatprep.subr.mxu0 0.0
    %2804 = vmatpush1.msra.mxu0 0.0
    %2805 = vmatprep.subr.mxu0 0.0
    %2806 = vmatpush1.msra.mxu0 0.0
    %2807 = vmatprep.subr.mxu0 0.0
    %2808 = vmatpush1.msra.mxu0 0.0
    %2809 = vmatprep.subr.mxu0 0.0
    %2810 = vmatpush1.msra.mxu0 0.0
    %2811 = vmatprep.subr.mxu0 0.0
    %2812 = vmatpush1.msra.mxu0 0.0
    %2813 = vmatprep.subr.mxu0 0.0
    %2814 = vmatpush1.msra.mxu0 0.0
    %2815 = vmatprep.subr.mxu0 0.0
    %2816 = vmatpush1.msra.mxu0 0.0
    %2817 = vmatprep.subr.mxu0 0.0
    %2818 = vmatpush1.msra.mxu0 0.0
    %2819 = vmatprep.subr.mxu0 0.0
    %2820 = vmatpush1.msra.mxu0 0.0
    %2821 = vmatprep.subr.mxu0 0.0
    %2822 = vmatpush1.msra.mxu0 0.0
    %2823 = vmatprep.subr.mxu0 0.0
    %2824 = vmatpush1.msra.mxu0 0.0
    %2825 = vmatprep.subr.mxu0 0.0
    %2826 = vmatpush1.msra.mxu0 0.0
    %2827 = vmatprep.subr.mxu0 0.0
    %2828 = vmatpush1.msra.mxu0 0.0
    %2829 = vmatprep.subr.mxu0 0.0
    %2830 = vmatpush1.msra.mxu0 0.0
    %2831 = vmatprep.subr.mxu0 0.0
    %2832 = vmatpush1.msra.mxu0 0.0
    %2833 = vmatprep.subr.mxu0 0.0
    %2834 = vmatpush1.msra.mxu0 0.0
    %2835 = vmatprep.subr.mxu0 0.0
    %2836 = vmatpush1.msra.mxu0 0.0
    %2837 = vmatprep.subr.mxu0 0.0
    %2838 = vmatpush1.msra.mxu0 0.0
    %2839 = vmatprep.subr.mxu0 0.0
    %2840 = vmatpush1.msra.mxu0 0.0
    %2841 = vmatprep.subr.mxu0 0.0
    %2842 = vmatpush1.msra.mxu0 0.0
    %2843 = vmatprep.subr.mxu0 0.0
    %2844 = vmatpush1.msra.mxu0 0.0
    %2845 = vmatprep.subr.mxu0 0.0
    %2846 = vmatpush1.msra.mxu0 0.0
    %2847 = vmatprep.subr.mxu0 0.0
    %2848 = vmatpush1.msra.mxu0 0.0
    %2849 = vmatprep.subr.mxu0 0.0
    %2850 = vmatpush1.msra.mxu0 0.0
    %2851 = vmatprep.subr.mxu0 0.0
    %2852 = vmatpush1.msra.mxu0 0.0
    %2853 = vmatprep.subr.mxu0 0.0
    %2854 = vmatpush1.msra.mxu0 0.0
    %2855 = vmatprep.subr.mxu0 0.0
    %2856 = vmatpush1.msra.mxu0 0.0
    %2857 = vmatprep.subr.mxu0 0.0
    %2858 = vmatpush1.msra.mxu0 0.0
    %2859 = vmatprep.mubr.f32.mxu0 0.0
    %2860 = vmatmul.mubr.f32.gmra.mrb[0].mxu0 %v515
    %v2861 = vpop.f32.mrb[0].mxu0
    %v2862 = vadd.f32 0.0, %v2861
    %v2863 = vpop.f32.mrb[0].mxu0
    %2864 = vmatprep.mubr.f32.mxu0 0.0
    %2865 = vmatmul.mubr.f32.gmra.mrb[0].mxu0 %v518
    %v2866 = vpop.f32.mrb[0].mxu0
    %v2867 = vadd.f32 0.0, %v2866
    %v2868 = vpop.f32.mrb[0].mxu0
    %2869 = vmatprep.mubr.f32.mxu0 0.0
    %2870 = vmatmul.mubr.f32.gmra.mrb[0].mxu0 %v521
    %v2871 = vpop.f32.mrb[0].mxu0
    %v2872 = vadd.f32 0.0, %v2871
    %v2873 = vpop.f32.mrb[0].mxu0
    %2874 = vmatprep.mubr.f32.mxu0 0.0
    %2875 = vmatmul.mubr.f32.gmra.mrb[0].mxu0 %v524
    %v2876 = vpop.f32.mrb[0].mxu0
    %v2877 = vadd.f32 0.0, %v2876
    %v2878 = vpop.f32.mrb[0].mxu0
    %2879 = vmatprep.mubr.f32.mxu0 0.0
    %2880 = vmatmul.mubr.f32.gmra.mrb[0].mxu0 %v527
    %v2881 = vpop.f32.mrb[0].mxu0
    %v2882 = vadd.f32 0.0, %v2881
    %v2883 = vpop.f32.mrb[0].mxu0
    %2884 = vdwg.mxu0
    %v2885 = vadd.f32 %v2772, %v2862
    %v2886 = vadd.f32 %v2775, %v2867
    %v2887 = vadd.f32 %v2780, %v2872
    %v2888 = vadd.f32 %v2783, %v2877
    %v2889 = vadd.f32 %v2788, %v2882
    %v2890 = vmax.f32 %v2885, 0.0
    %v2891 = vmax.f32 %v2886, 0.0
    %v2892 = vmax.f32 %v2887, 0.0
    %v2893 = vmax.f32 %v2888, 0.0
    %v2894 = vmax.f32 %v2889, 0.0
    %s2895 = scalar_lea.vmem %s13, 144
    %v2896 = vld [vmem:[%s2895] sm:$0xff]
    %v2897 = vld [vmem:[%s2895 + $0x8] sm:$0xff]
    %v2898 = vld [vmem:[%s2895 + $0x10] sm:$0xff]
    %v2899 = vld [vmem:[%s2895 + $0x18] sm:$0xff]
    %v2900 = vld [vmem:[%s2895 + $0x20] sm:$0xff]
    %v2901 = vld [vmem:[%s2895 + $0x28] sm:$0xff]
    %v2902 = vld [vmem:[%s2895 + $0x30] sm:$0xff]
    %v2903 = vld [vmem:[%s2895 + $0x38] sm:$0xff]
    %v2904 = vld [vmem:[%s2895 + $0x40] sm:$0x1]
    %v2905 = vlaneseq
    %v2906 = vshrl.u32 %v2905, 7
    %v2907 = vsub.s32 0, %v2906
    %v2908 = vrot.slane %v2904, %v2907
    %v2910 = vsel %vm642, %v2890, 0
    %v2913 = vsel %vm642, %v2891, 0
    %v2916 = vsel %vm642, %v2892, 0
    %v2919 = vsel %vm642, %v2893, 0
    %v2922 = vsel %vm642, %v2894, 0
    %2924 = vmatprep.subr.mxu0 0.0
    %2925 = vmatpush1.msra.mxu0 %v2896
    %2926 = vmatprep.subr.mxu0 0.0
    %2927 = vmatpush1.msra.mxu0 %v2897
    %2928 = vmatprep.subr.mxu0 0.0
    %2929 = vmatpush1.msra.mxu0 %v2898
    %2930 = vmatprep.subr.mxu0 0.0
    %2931 = vmatpush1.msra.mxu0 %v2899
    %2932 = vmatprep.subr.mxu0 0.0
    %2933 = vmatpush1.msra.mxu0 %v2900
    %2934 = vmatprep.subr.mxu0 0.0
    %2935 = vmatpush1.msra.mxu0 %v2901
    %2936 = vmatprep.subr.mxu0 0.0
    %2937 = vmatpush1.msra.mxu0 %v2902
    %2938 = vmatprep.subr.mxu0 0.0
    %2939 = vmatpush1.msra.mxu0 %v2903
    %2940 = vmatprep.subr.mxu0 0.0
    %2941 = vmatpush1.msra.mxu0 0.0
    %2942 = vmatprep.subr.mxu0 0.0
    %2943 = vmatpush1.msra.mxu0 0.0
    %2944 = vmatprep.subr.mxu0 0.0
    %2945 = vmatpush1.msra.mxu0 0.0
    %2946 = vmatprep.subr.mxu0 0.0
    %2947 = vmatpush1.msra.mxu0 0.0
    %2948 = vmatprep.subr.mxu0 0.0
    %2949 = vmatpush1.msra.mxu0 0.0
    %2950 = vmatprep.subr.mxu0 0.0
    %2951 = vmatpush1.msra.mxu0 0.0
    %2952 = vmatprep.subr.mxu0 0.0
    %2953 = vmatpush1.msra.mxu0 0.0
    %2954 = vmatprep.subr.mxu0 0.0
    %2955 = vmatpush1.msra.mxu0 0.0
    %2956 = vmatprep.subr.mxu0 0.0
    %2957 = vmatpush1.msra.mxu0 0.0
    %2958 = vmatprep.subr.mxu0 0.0
    %2959 = vmatpush1.msra.mxu0 0.0
    %2960 = vmatprep.subr.mxu0 0.0
    %2961 = vmatpush1.msra.mxu0 0.0
    %2962 = vmatprep.subr.mxu0 0.0
    %2963 = vmatpush1.msra.mxu0 0.0
    %2964 = vmatprep.subr.mxu0 0.0
    %2965 = vmatpush1.msra.mxu0 0.0
    %2966 = vmatprep.subr.mxu0 0.0
    %2967 = vmatpush1.msra.mxu0 0.0
    %2968 = vmatprep.subr.mxu0 0.0
    %2969 = vmatpush1.msra.mxu0 0.0
    %2970 = vmatprep.subr.mxu0 0.0
    %2971 = vmatpush1.msra.mxu0 0.0
    %2972 = vmatprep.subr.mxu0 0.0
    %2973 = vmatpush1.msra.mxu0 0.0
    %2974 = vmatprep.subr.mxu0 0.0
    %2975 = vmatpush1.msra.mxu0 0.0
    %2976 = vmatprep.subr.mxu0 0.0
    %2977 = vmatpush1.msra.mxu0 0.0
    %2978 = vmatprep.subr.mxu0 0.0
    %2979 = vmatpush1.msra.mxu0 0.0
    %2980 = vmatprep.subr.mxu0 0.0
    %2981 = vmatpush1.msra.mxu0 0.0
    %2982 = vmatprep.subr.mxu0 0.0
    %2983 = vmatpush1.msra.mxu0 0.0
    %2984 = vmatprep.subr.mxu0 0.0
    %2985 = vmatpush1.msra.mxu0 0.0
    %2986 = vmatprep.subr.mxu0 0.0
    %2987 = vmatpush1.msra.mxu0 0.0
    %2988 = vmatprep.mubr.f32.mxu0 0.0
    %2989 = vmatmul.mubr.f32.gmra.mrb[0].mxu0 %v2910
    %v2990 = vpop.f32.mrb[0].mxu0
    %v2991 = vadd.f32 %v2908, %v2990
    %v2992 = vpop.f32.mrb[0].mxu0
    %2993 = vmatprep.mubr.f32.mxu0 0.0
    %2994 = vmatmul.mubr.f32.gmra.mrb[0].mxu0 %v2913
    %v2995 = vpop.f32.mrb[0].mxu0
    %v2996 = vadd.f32 %v2908, %v2995
    %v2997 = vpop.f32.mrb[0].mxu0
    %2998 = vmatprep.mubr.f32.mxu0 0.0
    %2999 = vmatmul.mubr.f32.gmra.mrb[0].mxu0 %v2916
    %v3000 = vpop.f32.mrb[0].mxu0
    %v3001 = vadd.f32 %v2908, %v3000
    %v3002 = vpop.f32.mrb[0].mxu0
    %3003 = vmatprep.mubr.f32.mxu0 0.0
    %3004 = vmatmul.mubr.f32.gmra.mrb[0].mxu0 %v2919
    %v3005 = vpop.f32.mrb[0].mxu0
    %v3006 = vadd.f32 %v2908, %v3005
    %v3007 = vpop.f32.mrb[0].mxu0
    %3008 = vmatprep.mubr.f32.mxu0 0.0
    %3009 = vmatmul.mubr.f32.gmra.mrb[0].mxu0 %v2922
    %v3010 = vpop.f32.mrb[0].mxu0
    %v3011 = vadd.f32 %v2908, %v3010
    %v3012 = vpop.f32.mrb[0].mxu0
    %3013 = vdwg.mxu0
    %v3014 = vpack.c.bf16 %v2996, %v2991
    %v3015 = vpack.c.bf16 %v3006, %v3001
    %v3016 = vpack.c.bf16 %v3011, %v3011
    %v3018 = vand.u32 %v3016, %v762
    %3020 = vmatprep.subr.bf16.mxu0 0
    %3021 = vmatpush1.bf16.msra.mxu0 %v3014
    %3022 = vmatprep.subr.bf16.mxu0 0
    %3023 = vmatpush1.bf16.msra.mxu0 %v3015
    %3024 = vmatprep.subr.bf16.mxu0 0
    %3025 = vmatpush1.bf16.msra.mxu0 %v3018
    %3026 = vmatprep.subr.bf16.mxu0 0
    %3027 = vmatpush1.bf16.msra.mxu0 0
    %3028 = vmatprep.subr.bf16.mxu0 0
    %3029 = vmatpush1.bf16.msra.mxu0 0
    %3030 = vmatprep.subr.bf16.mxu0 0
    %3031 = vmatpush1.bf16.msra.mxu0 0
    %3032 = vmatprep.subr.bf16.mxu0 0
    %3033 = vmatpush1.bf16.msra.mxu0 0
    %3034 = vmatprep.subr.bf16.mxu0 0
    %3035 = vmatpush1.bf16.msra.mxu0 0
    %3036 = vmatprep.subr.bf16.mxu0 0
    %3037 = vmatpush1.bf16.msra.mxu0 0
    %3038 = vmatprep.subr.bf16.mxu0 0
    %3039 = vmatpush1.bf16.msra.mxu0 0
    %3040 = vmatprep.subr.bf16.mxu0 0
    %3041 = vmatpush1.bf16.msra.mxu0 0
    %3042 = vmatprep.subr.bf16.mxu0 0
    %3043 = vmatpush1.bf16.msra.mxu0 0
    %3044 = vmatprep.subr.bf16.mxu0 0
    %3045 = vmatpush1.bf16.msra.mxu0 0
    %3046 = vmatprep.subr.bf16.mxu0 0
    %3047 = vmatpush1.bf16.msra.mxu0 0
    %3048 = vmatprep.subr.bf16.mxu0 0
    %3049 = vmatpush1.bf16.msra.mxu0 0
    %3050 = vmatprep.subr.bf16.mxu0 0
    %3051 = vmatpush1.bf16.msra.mxu0 0
    %3052 = vmatprep.mubr.bf16.mxu0 0
    %3053 = vmatmul.mubr.bf16.gmra.mrb[0].mxu0 %v758
    %v3054 = vpop.f32.mrb[0].mxu0
    %v3055 = vadd.f32 0.0, %v3054
    %v3056 = vpop.f32.mrb[0].mxu0
    %v3057 = vpop.f32.mrb[0].mxu0
    %v3058 = vadd.f32 0.0, %v3057
    %v3059 = vpop.f32.mrb[0].mxu0
    %3060 = vdwg.mxu0
    %3064 = vrot.lane.b32.xlu0 %v3014, 96
    %v3065 = vpop.permute.xlu0 %3064
    %3066 = vrot.lane.b32.xlu0 %v3015, 96
    %v3067 = vpop.permute.xlu0 %3066
    %3068 = vrot.lane.b32.xlu0 %v3016, 96
    %v3069 = vpop.permute.xlu0 %3068
    %v3073 = vand.u32 %v3069, %v762
    %3075 = vmatprep.subr.bf16.mxu0 0
    %3076 = vmatpush1.bf16.msra.mxu0 %v3065
    %3077 = vmatprep.subr.bf16.mxu0 0
    %3078 = vmatpush1.bf16.msra.mxu0 %v3067
    %3079 = vmatprep.subr.bf16.mxu0 0
    %3080 = vmatpush1.bf16.msra.mxu0 %v3073
    %3081 = vmatprep.subr.bf16.mxu0 0
    %3082 = vmatpush1.bf16.msra.mxu0 0
    %3083 = vmatprep.subr.bf16.mxu0 0
    %3084 = vmatpush1.bf16.msra.mxu0 0
    %3085 = vmatprep.subr.bf16.mxu0 0
    %3086 = vmatpush1.bf16.msra.mxu0 0
    %3087 = vmatprep.subr.bf16.mxu0 0
    %3088 = vmatpush1.bf16.msra.mxu0 0
    %3089 = vmatprep.subr.bf16.mxu0 0
    %3090 = vmatpush1.bf16.msra.mxu0 0
    %3091 = vmatprep.subr.bf16.mxu0 0
    %3092 = vmatpush1.bf16.msra.mxu0 0
    %3093 = vmatprep.subr.bf16.mxu0 0
    %3094 = vmatpush1.bf16.msra.mxu0 0
    %3095 = vmatprep.subr.bf16.mxu0 0
    %3096 = vmatpush1.bf16.msra.mxu0 0
    %3097 = vmatprep.subr.bf16.mxu0 0
    %3098 = vmatpush1.bf16.msra.mxu0 0
    %3099 = vmatprep.subr.bf16.mxu0 0
    %3100 = vmatpush1.bf16.msra.mxu0 0
    %3101 = vmatprep.subr.bf16.mxu0 0
    %3102 = vmatpush1.bf16.msra.mxu0 0
    %3103 = vmatprep.subr.bf16.mxu0 0
    %3104 = vmatpush1.bf16.msra.mxu0 0
    %3105 = vmatprep.subr.bf16.mxu0 0
    %3106 = vmatpush1.bf16.msra.mxu0 0
    %3107 = vmatprep.mubr.bf16.mxu0 0
    %3108 = vmatmul.mubr.bf16.gmra.mrb[0].mxu0 %v824
    %v3109 = vpop.f32.mrb[0].mxu0
    %v3110 = vadd.f32 0.0, %v3109
    %v3111 = vpop.f32.mrb[0].mxu0
    %v3112 = vpop.f32.mrb[0].mxu0
    %v3113 = vadd.f32 0.0, %v3112
    %v3114 = vpop.f32.mrb[0].mxu0
    %3115 = vdwg.mxu0
    %s3116 = scalar_lea.vmem %s14, 208
    %v3117 = vld [vmem:[%s3116] sm:$0xff]
    %v3118 = vld [vmem:[%s3116 + $0x8] sm:$0xff]
    %v3119 = vld [vmem:[%s3116 + $0x10] sm:$0xff]
    %v3120 = vld [vmem:[%s3116 + $0x18] sm:$0xff]
    %v3121 = vld [vmem:[%s3116 + $0x20] sm:$0xff]
    %v3122 = vld [vmem:[%s3116 + $0x28] sm:$0xff]
    %v3123 = vld [vmem:[%s3116 + $0x30] sm:$0xff]
    %v3124 = vld [vmem:[%s3116 + $0x38] sm:$0xff]
    %v3126 = vsel %vm100, %v3055, 0
    %v3129 = vsel %vm100, %v3058, 0
    %3131 = vmatprep.subr.mxu0 0.0
    %3132 = vmatpush1.msra.mxu0 %v3121
    %3133 = vmatprep.subr.mxu0 0.0
    %3134 = vmatpush1.msra.mxu0 %v3122
    %3135 = vmatprep.subr.mxu0 0.0
    %3136 = vmatpush1.msra.mxu0 %v3123
    %3137 = vmatprep.subr.mxu0 0.0
    %3138 = vmatpush1.msra.mxu0 %v3124
    %3139 = vmatprep.subr.mxu0 0.0
    %3140 = vmatpush1.msra.mxu0 0.0
    %3141 = vmatprep.subr.mxu0 0.0
    %3142 = vmatpush1.msra.mxu0 0.0
    %3143 = vmatprep.subr.mxu0 0.0
    %3144 = vmatpush1.msra.mxu0 0.0
    %3145 = vmatprep.subr.mxu0 0.0
    %3146 = vmatpush1.msra.mxu0 0.0
    %3147 = vmatprep.subr.mxu0 0.0
    %3148 = vmatpush1.msra.mxu0 0.0
    %3149 = vmatprep.subr.mxu0 0.0
    %3150 = vmatpush1.msra.mxu0 0.0
    %3151 = vmatprep.subr.mxu0 0.0
    %3152 = vmatpush1.msra.mxu0 0.0
    %3153 = vmatprep.subr.mxu0 0.0
    %3154 = vmatpush1.msra.mxu0 0.0
    %3155 = vmatprep.subr.mxu0 0.0
    %3156 = vmatpush1.msra.mxu0 0.0
    %3157 = vmatprep.subr.mxu0 0.0
    %3158 = vmatpush1.msra.mxu0 0.0
    %3159 = vmatprep.subr.mxu0 0.0
    %3160 = vmatpush1.msra.mxu0 0.0
    %3161 = vmatprep.subr.mxu0 0.0
    %3162 = vmatpush1.msra.mxu0 0.0
    %3163 = vmatprep.subr.mxu0 0.0
    %3164 = vmatpush1.msra.mxu0 0.0
    %3165 = vmatprep.subr.mxu0 0.0
    %3166 = vmatpush1.msra.mxu0 0.0
    %3167 = vmatprep.subr.mxu0 0.0
    %3168 = vmatpush1.msra.mxu0 0.0
    %3169 = vmatprep.subr.mxu0 0.0
    %3170 = vmatpush1.msra.mxu0 0.0
    %3171 = vmatprep.subr.mxu0 0.0
    %3172 = vmatpush1.msra.mxu0 0.0
    %3173 = vmatprep.subr.mxu0 0.0
    %3174 = vmatpush1.msra.mxu0 0.0
    %3175 = vmatprep.subr.mxu0 0.0
    %3176 = vmatpush1.msra.mxu0 0.0
    %3177 = vmatprep.subr.mxu0 0.0
    %3178 = vmatpush1.msra.mxu0 0.0
    %3179 = vmatprep.subr.mxu0 0.0
    %3180 = vmatpush1.msra.mxu0 0.0
    %3181 = vmatprep.subr.mxu0 0.0
    %3182 = vmatpush1.msra.mxu0 0.0
    %3183 = vmatprep.subr.mxu0 0.0
    %3184 = vmatpush1.msra.mxu0 0.0
    %3185 = vmatprep.subr.mxu0 0.0
    %3186 = vmatpush1.msra.mxu0 0.0
    %3187 = vmatprep.subr.mxu0 0.0
    %3188 = vmatpush1.msra.mxu0 0.0
    %3189 = vmatprep.subr.mxu0 0.0
    %3190 = vmatpush1.msra.mxu0 0.0
    %3191 = vmatprep.subr.mxu0 0.0
    %3192 = vmatpush1.msra.mxu0 0.0
    %3193 = vmatprep.subr.mxu0 0.0
    %3194 = vmatpush1.msra.mxu0 0.0
    %3195 = vmatprep.mubr.f32.mxu0 0.0
    %3196 = vmatmul.mubr.f32.gmra.mrb[0].mxu0 %v3126
    %v3197 = vpop.f32.mrb[0].mxu0
    %v3198 = vadd.f32 0.0, %v3197
    %v3199 = vpop.f32.mrb[0].mxu0
    %3200 = vmatprep.mubr.f32.mxu0 0.0
    %3201 = vmatmul.mubr.f32.gmra.mrb[0].mxu0 %v3129
    %v3202 = vpop.f32.mrb[0].mxu0
    %v3203 = vadd.f32 0.0, %v3202
    %v3204 = vpop.f32.mrb[0].mxu0
    %3205 = vdwg.mxu0
    %3206 = vmatprep.subr.mxu0 0.0
    %3207 = vmatpush1.msra.mxu0 %v3117
    %3208 = vmatprep.subr.mxu0 0.0
    %3209 = vmatpush1.msra.mxu0 %v3118
    %3210 = vmatprep.subr.mxu0 0.0
    %3211 = vmatpush1.msra.mxu0 %v3119
    %3212 = vmatprep.subr.mxu0 0.0
    %3213 = vmatpush1.msra.mxu0 %v3120
    %3214 = vmatprep.subr.mxu0 0.0
    %3215 = vmatpush1.msra.mxu0 0.0
    %3216 = vmatprep.subr.mxu0 0.0
    %3217 = vmatpush1.msra.mxu0 0.0
    %3218 = vmatprep.subr.mxu0 0.0
    %3219 = vmatpush1.msra.mxu0 0.0
    %3220 = vmatprep.subr.mxu0 0.0
    %3221 = vmatpush1.msra.mxu0 0.0
    %3222 = vmatprep.subr.mxu0 0.0
    %3223 = vmatpush1.msra.mxu0 0.0
    %3224 = vmatprep.subr.mxu0 0.0
    %3225 = vmatpush1.msra.mxu0 0.0
    %3226 = vmatprep.subr.mxu0 0.0
    %3227 = vmatpush1.msra.mxu0 0.0
    %3228 = vmatprep.subr.mxu0 0.0
    %3229 = vmatpush1.msra.mxu0 0.0
    %3230 = vmatprep.subr.mxu0 0.0
    %3231 = vmatpush1.msra.mxu0 0.0
    %3232 = vmatprep.subr.mxu0 0.0
    %3233 = vmatpush1.msra.mxu0 0.0
    %3234 = vmatprep.subr.mxu0 0.0
    %3235 = vmatpush1.msra.mxu0 0.0
    %3236 = vmatprep.subr.mxu0 0.0
    %3237 = vmatpush1.msra.mxu0 0.0
    %3238 = vmatprep.subr.mxu0 0.0
    %3239 = vmatpush1.msra.mxu0 0.0
    %3240 = vmatprep.subr.mxu0 0.0
    %3241 = vmatpush1.msra.mxu0 0.0
    %3242 = vmatprep.subr.mxu0 0.0
    %3243 = vmatpush1.msra.mxu0 0.0
    %3244 = vmatprep.subr.mxu0 0.0
    %3245 = vmatpush1.msra.mxu0 0.0
    %3246 = vmatprep.subr.mxu0 0.0
    %3247 = vmatpush1.msra.mxu0 0.0
    %3248 = vmatprep.subr.mxu0 0.0
    %3249 = vmatpush1.msra.mxu0 0.0
    %3250 = vmatprep.subr.mxu0 0.0
    %3251 = vmatpush1.msra.mxu0 0.0
    %3252 = vmatprep.subr.mxu0 0.0
    %3253 = vmatpush1.msra.mxu0 0.0
    %3254 = vmatprep.subr.mxu0 0.0
    %3255 = vmatpush1.msra.mxu0 0.0
    %3256 = vmatprep.subr.mxu0 0.0
    %3257 = vmatpush1.msra.mxu0 0.0
    %3258 = vmatprep.subr.mxu0 0.0
    %3259 = vmatpush1.msra.mxu0 0.0
    %3260 = vmatprep.subr.mxu0 0.0
    %3261 = vmatpush1.msra.mxu0 0.0
    %3262 = vmatprep.subr.mxu0 0.0
    %3263 = vmatpush1.msra.mxu0 0.0
    %3264 = vmatprep.subr.mxu0 0.0
    %3265 = vmatpush1.msra.mxu0 0.0
    %3266 = vmatprep.subr.mxu0 0.0
    %3267 = vmatpush1.msra.mxu0 0.0
    %3268 = vmatprep.subr.mxu0 0.0
    %3269 = vmatpush1.msra.mxu0 0.0
    %3270 = vmatprep.mubr.f32.mxu0 0.0
    %3271 = vmatmul.mubr.f32.gmra.mrb[0].mxu0 %v2423
    %v3272 = vpop.f32.mrb[0].mxu0
    %v3273 = vadd.f32 %v3198, %v3272
    %v3274 = vpop.f32.mrb[0].mxu0
    %3275 = vmatprep.mubr.f32.mxu0 0.0
    %3276 = vmatmul.mubr.f32.gmra.mrb[0].mxu0 %v2426
    %v3277 = vpop.f32.mrb[0].mxu0
    %v3278 = vadd.f32 %v3203, %v3277
    %v3279 = vpop.f32.mrb[0].mxu0
    %3280 = vdwg.mxu0
    %v3281 = vld [vmem:[%s3116 + $0x40] sm:$0xff]
    %v3282 = vld [vmem:[%s3116 + $0x48] sm:$0xff]
    %v3283 = vld [vmem:[%s3116 + $0x50] sm:$0xff]
    %v3284 = vld [vmem:[%s3116 + $0x58] sm:$0xff]
    %v3286 = vsel %vm100, %v3110, 0
    %v3289 = vsel %vm100, %v3113, 0
    %3291 = vmatprep.subr.mxu0 0.0
    %3292 = vmatpush1.msra.mxu0 %v3281
    %3293 = vmatprep.subr.mxu0 0.0
    %3294 = vmatpush1.msra.mxu0 %v3282
    %3295 = vmatprep.subr.mxu0 0.0
    %3296 = vmatpush1.msra.mxu0 %v3283
    %3297 = vmatprep.subr.mxu0 0.0
    %3298 = vmatpush1.msra.mxu0 %v3284
    %3299 = vmatprep.subr.mxu0 0.0
    %3300 = vmatpush1.msra.mxu0 0.0
    %3301 = vmatprep.subr.mxu0 0.0
    %3302 = vmatpush1.msra.mxu0 0.0
    %3303 = vmatprep.subr.mxu0 0.0
    %3304 = vmatpush1.msra.mxu0 0.0
    %3305 = vmatprep.subr.mxu0 0.0
    %3306 = vmatpush1.msra.mxu0 0.0
    %3307 = vmatprep.subr.mxu0 0.0
    %3308 = vmatpush1.msra.mxu0 0.0
    %3309 = vmatprep.subr.mxu0 0.0
    %3310 = vmatpush1.msra.mxu0 0.0
    %3311 = vmatprep.subr.mxu0 0.0
    %3312 = vmatpush1.msra.mxu0 0.0
    %3313 = vmatprep.subr.mxu0 0.0
    %3314 = vmatpush1.msra.mxu0 0.0
    %3315 = vmatprep.subr.mxu0 0.0
    %3316 = vmatpush1.msra.mxu0 0.0
    %3317 = vmatprep.subr.mxu0 0.0
    %3318 = vmatpush1.msra.mxu0 0.0
    %3319 = vmatprep.subr.mxu0 0.0
    %3320 = vmatpush1.msra.mxu0 0.0
    %3321 = vmatprep.subr.mxu0 0.0
    %3322 = vmatpush1.msra.mxu0 0.0
    %3323 = vmatprep.subr.mxu0 0.0
    %3324 = vmatpush1.msra.mxu0 0.0
    %3325 = vmatprep.subr.mxu0 0.0
    %3326 = vmatpush1.msra.mxu0 0.0
    %3327 = vmatprep.subr.mxu0 0.0
    %3328 = vmatpush1.msra.mxu0 0.0
    %3329 = vmatprep.subr.mxu0 0.0
    %3330 = vmatpush1.msra.mxu0 0.0
    %3331 = vmatprep.subr.mxu0 0.0
    %3332 = vmatpush1.msra.mxu0 0.0
    %3333 = vmatprep.subr.mxu0 0.0
    %3334 = vmatpush1.msra.mxu0 0.0
    %3335 = vmatprep.subr.mxu0 0.0
    %3336 = vmatpush1.msra.mxu0 0.0
    %3337 = vmatprep.subr.mxu0 0.0
    %3338 = vmatpush1.msra.mxu0 0.0
    %3339 = vmatprep.subr.mxu0 0.0
    %3340 = vmatpush1.msra.mxu0 0.0
    %3341 = vmatprep.subr.mxu0 0.0
    %3342 = vmatpush1.msra.mxu0 0.0
    %3343 = vmatprep.subr.mxu0 0.0
    %3344 = vmatpush1.msra.mxu0 0.0
    %3345 = vmatprep.subr.mxu0 0.0
    %3346 = vmatpush1.msra.mxu0 0.0
    %3347 = vmatprep.subr.mxu0 0.0
    %3348 = vmatpush1.msra.mxu0 0.0
    %3349 = vmatprep.subr.mxu0 0.0
    %3350 = vmatpush1.msra.mxu0 0.0
    %3351 = vmatprep.subr.mxu0 0.0
    %3352 = vmatpush1.msra.mxu0 0.0
    %3353 = vmatprep.subr.mxu0 0.0
    %3354 = vmatpush1.msra.mxu0 0.0
    %3355 = vmatprep.mubr.f32.mxu0 0.0
    %3356 = vmatmul.mubr.f32.gmra.mrb[0].mxu0 %v3286
    %v3357 = vpop.f32.mrb[0].mxu0
    %v3358 = vadd.f32 0.0, %v3357
    %v3359 = vpop.f32.mrb[0].mxu0
    %3360 = vmatprep.mubr.f32.mxu0 0.0
    %3361 = vmatmul.mubr.f32.gmra.mrb[0].mxu0 %v3289
    %v3362 = vpop.f32.mrb[0].mxu0
    %v3363 = vadd.f32 0.0, %v3362
    %v3364 = vpop.f32.mrb[0].mxu0
    %3365 = vdwg.mxu0
    %v3366 = vadd.f32 %v3273, %v3358
    %v3367 = vadd.f32 %v3278, %v3363
    %v3368 = vld [vmem:[%s3116 + $0x60] sm:$0xff]
    %3369 = vmatprep.subr.mxu0 0.0
    %3370 = vmatpush1.msra.mxu0 %v3368
    %3371 = vmatprep.subr.mxu0 0.0
    %3372 = vmatpush1.msra.mxu0 0.0
    %3373 = vmatprep.subr.mxu0 0.0
    %3374 = vmatpush1.msra.mxu0 0.0
    %3375 = vmatprep.subr.mxu0 0.0
    %3376 = vmatpush1.msra.mxu0 0.0
    %3377 = vmatprep.subr.mxu0 0.0
    %3378 = vmatpush1.msra.mxu0 0.0
    %3379 = vmatprep.subr.mxu0 0.0
    %3380 = vmatpush1.msra.mxu0 0.0
    %3381 = vmatprep.subr.mxu0 0.0
    %3382 = vmatpush1.msra.mxu0 0.0
    %3383 = vmatprep.subr.mxu0 0.0
    %3384 = vmatpush1.msra.mxu0 0.0
    %3385 = vmatprep.subr.mxu0 0.0
    %3386 = vmatpush1.msra.mxu0 0.0
    %3387 = vmatprep.subr.mxu0 0.0
    %3388 = vmatpush1.msra.mxu0 0.0
    %3389 = vmatprep.subr.mxu0 0.0
    %3390 = vmatpush1.msra.mxu0 0.0
    %3391 = vmatprep.subr.mxu0 0.0
    %3392 = vmatpush1.msra.mxu0 0.0
    %3393 = vmatprep.subr.mxu0 0.0
    %3394 = vmatpush1.msra.mxu0 0.0
    %3395 = vmatprep.subr.mxu0 0.0
    %3396 = vmatpush1.msra.mxu0 0.0
    %3397 = vmatprep.subr.mxu0 0.0
    %3398 = vmatpush1.msra.mxu0 0.0
    %3399 = vmatprep.subr.mxu0 0.0
    %3400 = vmatpush1.msra.mxu0 0.0
    %3401 = vmatprep.subr.mxu0 0.0
    %3402 = vmatpush1.msra.mxu0 0.0
    %3403 = vmatprep.subr.mxu0 0.0
    %3404 = vmatpush1.msra.mxu0 0.0
    %3405 = vmatprep.subr.mxu0 0.0
    %3406 = vmatpush1.msra.mxu0 0.0
    %3407 = vmatprep.subr.mxu0 0.0
    %3408 = vmatpush1.msra.mxu0 0.0
    %3409 = vmatprep.subr.mxu0 0.0
    %3410 = vmatpush1.msra.mxu0 0.0
    %3411 = vmatprep.subr.mxu0 0.0
    %3412 = vmatpush1.msra.mxu0 0.0
    %3413 = vmatprep.subr.mxu0 0.0
    %3414 = vmatpush1.msra.mxu0 0.0
    %3415 = vmatprep.subr.mxu0 0.0
    %3416 = vmatpush1.msra.mxu0 0.0
    %3417 = vmatprep.subr.mxu0 0.0
    %3418 = vmatpush1.msra.mxu0 0.0
    %3419 = vmatprep.subr.mxu0 0.0
    %3420 = vmatpush1.msra.mxu0 0.0
    %3421 = vmatprep.subr.mxu0 0.0
    %3422 = vmatpush1.msra.mxu0 0.0
    %3423 = vmatprep.subr.mxu0 0.0
    %3424 = vmatpush1.msra.mxu0 0.0
    %3425 = vmatprep.subr.mxu0 0.0
    %3426 = vmatpush1.msra.mxu0 0.0
    %3427 = vmatprep.subr.mxu0 0.0
    %3428 = vmatpush1.msra.mxu0 0.0
    %3429 = vmatprep.subr.mxu0 0.0
    %3430 = vmatpush1.msra.mxu0 0.0
    %3431 = vmatprep.subr.mxu0 0.0
    %3432 = vmatpush1.msra.mxu0 0.0
    %3433 = vmatprep.mubr.f32.mxu0 0.0
    %3434 = vmatmul.mubr.f32.gmra.mrb[0].mxu0 %v1123
    %v3435 = vpop.f32.mrb[0].mxu0
    %v3436 = vadd.f32 0.0, %v3435
    %v3437 = vpop.f32.mrb[0].mxu0
    %3438 = vmatprep.mubr.f32.mxu0 0.0
    %3439 = vmatmul.mubr.f32.gmra.mrb[0].mxu0 %v1126
    %v3440 = vpop.f32.mrb[0].mxu0
    %v3441 = vadd.f32 0.0, %v3440
    %v3442 = vpop.f32.mrb[0].mxu0
    %3443 = vdwg.mxu0
    %v3444 = vadd.f32 %v3366, %v3436
    %v3445 = vadd.f32 %v3367, %v3441
    %v3446 = vmax.f32 %v3444, 0.0
    %v3447 = vmax.f32 %v3445, 0.0
    %s3448 = scalar_lea.vmem %s15, 80
    %v3449 = vld [vmem:[%s3448] sm:$0xff]
    %v3450 = vld [vmem:[%s3448 + $0x8] sm:$0xff]
    %v3451 = vld [vmem:[%s3448 + $0x10] sm:$0xff]
    %v3452 = vld [vmem:[%s3448 + $0x18] sm:$0xff]
    %v3453 = vld [vmem:[%s3448 + $0x20] sm:$0x1]
    %v3454 = vlaneseq
    %v3455 = vshrl.u32 %v3454, 7
    %v3456 = vsub.s32 0, %v3455
    %v3457 = vrot.slane %v3453, %v3456
    %v3459 = vsel %vm100, %v3446, 0
    %v3462 = vsel %vm100, %v3447, 0
    %3464 = vmatprep.subr.mxu0 0.0
    %3465 = vmatpush1.msra.mxu0 %v3449
    %3466 = vmatprep.subr.mxu0 0.0
    %3467 = vmatpush1.msra.mxu0 %v3450
    %3468 = vmatprep.subr.mxu0 0.0
    %3469 = vmatpush1.msra.mxu0 %v3451
    %3470 = vmatprep.subr.mxu0 0.0
    %3471 = vmatpush1.msra.mxu0 %v3452
    %3472 = vmatprep.subr.mxu0 0.0
    %3473 = vmatpush1.msra.mxu0 0.0
    %3474 = vmatprep.subr.mxu0 0.0
    %3475 = vmatpush1.msra.mxu0 0.0
    %3476 = vmatprep.subr.mxu0 0.0
    %3477 = vmatpush1.msra.mxu0 0.0
    %3478 = vmatprep.subr.mxu0 0.0
    %3479 = vmatpush1.msra.mxu0 0.0
    %3480 = vmatprep.subr.mxu0 0.0
    %3481 = vmatpush1.msra.mxu0 0.0
    %3482 = vmatprep.subr.mxu0 0.0
    %3483 = vmatpush1.msra.mxu0 0.0
    %3484 = vmatprep.subr.mxu0 0.0
    %3485 = vmatpush1.msra.mxu0 0.0
    %3486 = vmatprep.subr.mxu0 0.0
    %3487 = vmatpush1.msra.mxu0 0.0
    %3488 = vmatprep.subr.mxu0 0.0
    %3489 = vmatpush1.msra.mxu0 0.0
    %3490 = vmatprep.subr.mxu0 0.0
    %3491 = vmatpush1.msra.mxu0 0.0
    %3492 = vmatprep.subr.mxu0 0.0
    %3493 = vmatpush1.msra.mxu0 0.0
    %3494 = vmatprep.subr.mxu0 0.0
    %3495 = vmatpush1.msra.mxu0 0.0
    %3496 = vmatprep.subr.mxu0 0.0
    %3497 = vmatpush1.msra.mxu0 0.0
    %3498 = vmatprep.subr.mxu0 0.0
    %3499 = vmatpush1.msra.mxu0 0.0
    %3500 = vmatprep.subr.mxu0 0.0
    %3501 = vmatpush1.msra.mxu0 0.0
    %3502 = vmatprep.subr.mxu0 0.0
    %3503 = vmatpush1.msra.mxu0 0.0
    %3504 = vmatprep.subr.mxu0 0.0
    %3505 = vmatpush1.msra.mxu0 0.0
    %3506 = vmatprep.subr.mxu0 0.0
    %3507 = vmatpush1.msra.mxu0 0.0
    %3508 = vmatprep.subr.mxu0 0.0
    %3509 = vmatpush1.msra.mxu0 0.0
    %3510 = vmatprep.subr.mxu0 0.0
    %3511 = vmatpush1.msra.mxu0 0.0
    %3512 = vmatprep.subr.mxu0 0.0
    %3513 = vmatpush1.msra.mxu0 0.0
    %3514 = vmatprep.subr.mxu0 0.0
    %3515 = vmatpush1.msra.mxu0 0.0
    %3516 = vmatprep.subr.mxu0 0.0
    %3517 = vmatpush1.msra.mxu0 0.0
    %3518 = vmatprep.subr.mxu0 0.0
    %3519 = vmatpush1.msra.mxu0 0.0
    %3520 = vmatprep.subr.mxu0 0.0
    %3521 = vmatpush1.msra.mxu0 0.0
    %3522 = vmatprep.subr.mxu0 0.0
    %3523 = vmatpush1.msra.mxu0 0.0
    %3524 = vmatprep.subr.mxu0 0.0
    %3525 = vmatpush1.msra.mxu0 0.0
    %3526 = vmatprep.subr.mxu0 0.0
    %3527 = vmatpush1.msra.mxu0 0.0
    %3528 = vmatprep.mubr.f32.mxu0 0.0
    %3529 = vmatmul.mubr.f32.gmra.mrb[0].mxu0 %v3459
    %v3530 = vpop.f32.mrb[0].mxu0
    %v3531 = vadd.f32 %v3457, %v3530
    %v3532 = vpop.f32.mrb[0].mxu0
    %3533 = vmatprep.mubr.f32.mxu0 0.0
    %3534 = vmatmul.mubr.f32.gmra.mrb[0].mxu0 %v3462
    %v3535 = vpop.f32.mrb[0].mxu0
    %v3536 = vadd.f32 %v3457, %v3535
    %v3537 = vpop.f32.mrb[0].mxu0
    %3538 = vdwg.mxu0
    %v3539 = vmul.f32 %v3531, 0.001
    %v3540 = vmul.f32 %v3536, 0.001
    %v3541 = vadd.f32 %v2410, %v3539
    %v3542 = vadd.f32 %v2411, %v3540
    %s3543 = scalar_lea.vmem %s16, 80
    %v3544 = vld [vmem:[%s3543] sm:$0xff]
    %v3545 = vld [vmem:[%s3543 + $0x8] sm:$0xff]
    %v3546 = vld [vmem:[%s3543 + $0x10] sm:$0xff]
    %v3547 = vld [vmem:[%s3543 + $0x18] sm:$0xff]
    %v3548 = vld [vmem:[%s3543 + $0x20] sm:$0x1]
    %v3549 = vlaneseq
    %v3550 = vshrl.u32 %v3549, 7
    %v3551 = vsub.s32 0, %v3550
    %v3552 = vrot.slane %v3548, %v3551
    %v3554 = vsel %vm100, %v3541, 0
    %v3557 = vsel %vm100, %v3542, 0
    %3559 = vmatprep.subr.mxu0 0.0
    %3560 = vmatpush1.msra.mxu0 %v3544
    %3561 = vmatprep.subr.mxu0 0.0
    %3562 = vmatpush1.msra.mxu0 %v3545
    %3563 = vmatprep.subr.mxu0 0.0
    %3564 = vmatpush1.msra.mxu0 %v3546
    %3565 = vmatprep.subr.mxu0 0.0
    %3566 = vmatpush1.msra.mxu0 %v3547
    %3567 = vmatprep.subr.mxu0 0.0
    %3568 = vmatpush1.msra.mxu0 0.0
    %3569 = vmatprep.subr.mxu0 0.0
    %3570 = vmatpush1.msra.mxu0 0.0
    %3571 = vmatprep.subr.mxu0 0.0
    %3572 = vmatpush1.msra.mxu0 0.0
    %3573 = vmatprep.subr.mxu0 0.0
    %3574 = vmatpush1.msra.mxu0 0.0
    %3575 = vmatprep.subr.mxu0 0.0
    %3576 = vmatpush1.msra.mxu0 0.0
    %3577 = vmatprep.subr.mxu0 0.0
    %3578 = vmatpush1.msra.mxu0 0.0
    %3579 = vmatprep.subr.mxu0 0.0
    %3580 = vmatpush1.msra.mxu0 0.0
    %3581 = vmatprep.subr.mxu0 0.0
    %3582 = vmatpush1.msra.mxu0 0.0
    %3583 = vmatprep.subr.mxu0 0.0
    %3584 = vmatpush1.msra.mxu0 0.0
    %3585 = vmatprep.subr.mxu0 0.0
    %3586 = vmatpush1.msra.mxu0 0.0
    %3587 = vmatprep.subr.mxu0 0.0
    %3588 = vmatpush1.msra.mxu0 0.0
    %3589 = vmatprep.subr.mxu0 0.0
    %3590 = vmatpush1.msra.mxu0 0.0
    %3591 = vmatprep.subr.mxu0 0.0
    %3592 = vmatpush1.msra.mxu0 0.0
    %3593 = vmatprep.subr.mxu0 0.0
    %3594 = vmatpush1.msra.mxu0 0.0
    %3595 = vmatprep.subr.mxu0 0.0
    %3596 = vmatpush1.msra.mxu0 0.0
    %3597 = vmatprep.subr.mxu0 0.0
    %3598 = vmatpush1.msra.mxu0 0.0
    %3599 = vmatprep.subr.mxu0 0.0
    %3600 = vmatpush1.msra.mxu0 0.0
    %3601 = vmatprep.subr.mxu0 0.0
    %3602 = vmatpush1.msra.mxu0 0.0
    %3603 = vmatprep.subr.mxu0 0.0
    %3604 = vmatpush1.msra.mxu0 0.0
    %3605 = vmatprep.subr.mxu0 0.0
    %3606 = vmatpush1.msra.mxu0 0.0
    %3607 = vmatprep.subr.mxu0 0.0
    %3608 = vmatpush1.msra.mxu0 0.0
    %3609 = vmatprep.subr.mxu0 0.0
    %3610 = vmatpush1.msra.mxu0 0.0
    %3611 = vmatprep.subr.mxu0 0.0
    %3612 = vmatpush1.msra.mxu0 0.0
    %3613 = vmatprep.subr.mxu0 0.0
    %3614 = vmatpush1.msra.mxu0 0.0
    %3615 = vmatprep.subr.mxu0 0.0
    %3616 = vmatpush1.msra.mxu0 0.0
    %3617 = vmatprep.subr.mxu0 0.0
    %3618 = vmatpush1.msra.mxu0 0.0
    %3619 = vmatprep.subr.mxu0 0.0
    %3620 = vmatpush1.msra.mxu0 0.0
    %3621 = vmatprep.subr.mxu0 0.0
    %3622 = vmatpush1.msra.mxu0 0.0
    %3623 = vmatprep.mubr.f32.mxu0 0.0
    %3624 = vmatmul.mubr.f32.gmra.mrb[0].mxu0 %v3554
    %v3625 = vpop.f32.mrb[0].mxu0
    %v3626 = vadd.f32 %v3552, %v3625
    %v3627 = vpop.f32.mrb[0].mxu0
    %3628 = vmatprep.mubr.f32.mxu0 0.0
    %3629 = vmatmul.mubr.f32.gmra.mrb[0].mxu0 %v3557
    %v3630 = vpop.f32.mrb[0].mxu0
    %v3631 = vadd.f32 %v3552, %v3630
    %v3632 = vpop.f32.mrb[0].mxu0
    %3633 = vdwg.mxu0
    %v3634 = vmax.f32 %v3626, 0.0
    %v3635 = vmax.f32 %v3631, 0.0
    %s3636 = scalar_lea.vmem %s17, 80
    %v3637 = vld [vmem:[%s3636] sm:$0xff]
    %v3638 = vld [vmem:[%s3636 + $0x8] sm:$0xff]
    %v3639 = vld [vmem:[%s3636 + $0x10] sm:$0xff]
    %v3640 = vld [vmem:[%s3636 + $0x18] sm:$0xff]
    %v3641 = vld [vmem:[%s3636 + $0x20] sm:$0x1]
    %v3642 = vlaneseq
    %v3643 = vshrl.u32 %v3642, 7
    %v3644 = vsub.s32 0, %v3643
    %v3645 = vrot.slane %v3641, %v3644
    %v3647 = vsel %vm100, %v3634, 0
    %v3650 = vsel %vm100, %v3635, 0
    %3652 = vmatprep.subr.mxu0 0.0
    %3653 = vmatpush1.msra.mxu0 %v3637
    %3654 = vmatprep.subr.mxu0 0.0
    %3655 = vmatpush1.msra.mxu0 %v3638
    %3656 = vmatprep.subr.mxu0 0.0
    %3657 = vmatpush1.msra.mxu0 %v3639
    %3658 = vmatprep.subr.mxu0 0.0
    %3659 = vmatpush1.msra.mxu0 %v3640
    %3660 = vmatprep.subr.mxu0 0.0
    %3661 = vmatpush1.msra.mxu0 0.0
    %3662 = vmatprep.subr.mxu0 0.0
    %3663 = vmatpush1.msra.mxu0 0.0
    %3664 = vmatprep.subr.mxu0 0.0
    %3665 = vmatpush1.msra.mxu0 0.0
    %3666 = vmatprep.subr.mxu0 0.0
    %3667 = vmatpush1.msra.mxu0 0.0
    %3668 = vmatprep.subr.mxu0 0.0
    %3669 = vmatpush1.msra.mxu0 0.0
    %3670 = vmatprep.subr.mxu0 0.0
    %3671 = vmatpush1.msra.mxu0 0.0
    %3672 = vmatprep.subr.mxu0 0.0
    %3673 = vmatpush1.msra.mxu0 0.0
    %3674 = vmatprep.subr.mxu0 0.0
    %3675 = vmatpush1.msra.mxu0 0.0
    %3676 = vmatprep.subr.mxu0 0.0
    %3677 = vmatpush1.msra.mxu0 0.0
    %3678 = vmatprep.subr.mxu0 0.0
    %3679 = vmatpush1.msra.mxu0 0.0
    %3680 = vmatprep.subr.mxu0 0.0
    %3681 = vmatpush1.msra.mxu0 0.0
    %3682 = vmatprep.subr.mxu0 0.0
    %3683 = vmatpush1.msra.mxu0 0.0
    %3684 = vmatprep.subr.mxu0 0.0
    %3685 = vmatpush1.msra.mxu0 0.0
    %3686 = vmatprep.subr.mxu0 0.0
    %3687 = vmatpush1.msra.mxu0 0.0
    %3688 = vmatprep.subr.mxu0 0.0
    %3689 = vmatpush1.msra.mxu0 0.0
    %3690 = vmatprep.subr.mxu0 0.0
    %3691 = vmatpush1.msra.mxu0 0.0
    %3692 = vmatprep.subr.mxu0 0.0
    %3693 = vmatpush1.msra.mxu0 0.0
    %3694 = vmatprep.subr.mxu0 0.0
    %3695 = vmatpush1.msra.mxu0 0.0
    %3696 = vmatprep.subr.mxu0 0.0
    %3697 = vmatpush1.msra.mxu0 0.0
    %3698 = vmatprep.subr.mxu0 0.0
    %3699 = vmatpush1.msra.mxu0 0.0
    %3700 = vmatprep.subr.mxu0 0.0
    %3701 = vmatpush1.msra.mxu0 0.0
    %3702 = vmatprep.subr.mxu0 0.0
    %3703 = vmatpush1.msra.mxu0 0.0
    %3704 = vmatprep.subr.mxu0 0.0
    %3705 = vmatpush1.msra.mxu0 0.0
    %3706 = vmatprep.subr.mxu0 0.0
    %3707 = vmatpush1.msra.mxu0 0.0
    %3708 = vmatprep.subr.mxu0 0.0
    %3709 = vmatpush1.msra.mxu0 0.0
    %3710 = vmatprep.subr.mxu0 0.0
    %3711 = vmatpush1.msra.mxu0 0.0
    %3712 = vmatprep.subr.mxu0 0.0
    %3713 = vmatpush1.msra.mxu0 0.0
    %3714 = vmatprep.subr.mxu0 0.0
    %3715 = vmatpush1.msra.mxu0 0.0
    %3716 = vmatprep.mubr.f32.mxu0 0.0
    %3717 = vmatmul.mubr.f32.gmra.mrb[0].mxu0 %v3647
    %v3718 = vpop.f32.mrb[0].mxu0
    %v3719 = vadd.f32 %v3645, %v3718
    %v3720 = vpop.f32.mrb[0].mxu0
    %3721 = vmatprep.mubr.f32.mxu0 0.0
    %3722 = vmatmul.mubr.f32.gmra.mrb[0].mxu0 %v3650
    %v3723 = vpop.f32.mrb[0].mxu0
    %v3724 = vadd.f32 %v3645, %v3723
    %v3725 = vpop.f32.mrb[0].mxu0
    %3726 = vdwg.mxu0
    %3729 = vrot.lane.b32.xlu0 %v1457, 1
    %v3730 = vpop.permute.xlu0 %3729
    %3731 = vrot.lane.b32.xlu0 %v1462, 1
    %v3732 = vpop.permute.xlu0 %3731
    %3737 = vrot.lane.b32.xlu0 %v2588, 2
    %v3738 = vpop.permute.xlu0 %3737
    %3739 = vrot.lane.b32.xlu0 %v2593, 2
    %v3740 = vpop.permute.xlu0 %3739
    %3745 = vrot.lane.b32.xlu0 %v3719, 3
    %v3746 = vpop.permute.xlu0 %3745
    %3747 = vrot.lane.b32.xlu0 %v3724, 3
    %v3748 = vpop.permute.xlu0 %3747
    %vm3751 = vcmask 7168
    %v3752 = vsel %vm3751, %v263, %v3730
    %v3753 = vsel %vm3751, %v268, %v3732
    %vm3754 = vcmask 15360
    %v3755 = vsel %vm3754, %v3752, %v3738
    %v3756 = vsel %vm3754, %v3753, %v3740
    %vm3757 = vcmask 23552
    %v3758 = vsel %vm3757, %v3755, %v3746
    %v3759 = vsel %vm3757, %v3756, %v3748
    %v3761 = vsel %vm368, %v85, 0
    %v3764 = vsel %vm368, %v86, 0
    %3766 = vmatprep.subr.mxu0 0.0
    %3767 = vmatpush1.msra.mxu0 %v3758
    %3768 = vmatprep.subr.mxu0 0.0
    %3769 = vmatpush1.msra.mxu0 %v3759
    %3770 = vmatprep.subr.mxu0 0.0
    %3771 = vmatpush1.msra.mxu0 0.0
    %3772 = vmatprep.subr.mxu0 0.0
    %3773 = vmatpush1.msra.mxu0 0.0
    %3774 = vmatprep.subr.mxu0 0.0
    %3775 = vmatpush1.msra.mxu0 0.0
    %3776 = vmatprep.subr.mxu0 0.0
    %3777 = vmatpush1.msra.mxu0 0.0
    %3778 = vmatprep.subr.mxu0 0.0
    %3779 = vmatpush1.msra.mxu0 0.0
    %3780 = vmatprep.subr.mxu0 0.0
    %3781 = vmatpush1.msra.mxu0 0.0
    %3782 = vmatprep.subr.mxu0 0.0
    %3783 = vmatpush1.msra.mxu0 0.0
    %3784 = vmatprep.subr.mxu0 0.0
    %3785 = vmatpush1.msra.mxu0 0.0
    %3786 = vmatprep.subr.mxu0 0.0
    %3787 = vmatpush1.msra.mxu0 0.0
    %3788 = vmatprep.subr.mxu0 0.0
    %3789 = vmatpush1.msra.mxu0 0.0
    %3790 = vmatprep.subr.mxu0 0.0
    %3791 = vmatpush1.msra.mxu0 0.0
    %3792 = vmatprep.subr.mxu0 0.0
    %3793 = vmatpush1.msra.mxu0 0.0
    %3794 = vmatprep.subr.mxu0 0.0
    %3795 = vmatpush1.msra.mxu0 0.0
    %3796 = vmatprep.subr.mxu0 0.0
    %3797 = vmatpush1.msra.mxu0 0.0
    %3798 = vmatprep.subr.mxu0 0.0
    %3799 = vmatpush1.msra.mxu0 0.0
    %3800 = vmatprep.subr.mxu0 0.0
    %3801 = vmatpush1.msra.mxu0 0.0
    %3802 = vmatprep.subr.mxu0 0.0
    %3803 = vmatpush1.msra.mxu0 0.0
    %3804 = vmatprep.subr.mxu0 0.0
    %3805 = vmatpush1.msra.mxu0 0.0
    %3806 = vmatprep.subr.mxu0 0.0
    %3807 = vmatpush1.msra.mxu0 0.0
    %3808 = vmatprep.subr.mxu0 0.0
    %3809 = vmatpush1.msra.mxu0 0.0
    %3810 = vmatprep.subr.mxu0 0.0
    %3811 = vmatpush1.msra.mxu0 0.0
    %3812 = vmatprep.subr.mxu0 0.0
    %3813 = vmatpush1.msra.mxu0 0.0
    %3814 = vmatprep.subr.mxu0 0.0
    %3815 = vmatpush1.msra.mxu0 0.0
    %3816 = vmatprep.subr.mxu0 0.0
    %3817 = vmatpush1.msra.mxu0 0.0
    %3818 = vmatprep.subr.mxu0 0.0
    %3819 = vmatpush1.msra.mxu0 0.0
    %3820 = vmatprep.subr.mxu0 0.0
    %3821 = vmatpush1.msra.mxu0 0.0
    %3822 = vmatprep.subr.mxu0 0.0
    %3823 = vmatpush1.msra.mxu0 0.0
    %3824 = vmatprep.subr.mxu0 0.0
    %3825 = vmatpush1.msra.mxu0 0.0
    %3826 = vmatprep.subr.mxu0 0.0
    %3827 = vmatpush1.msra.mxu0 0.0
    %3828 = vmatprep.subr.mxu0 0.0
    %3829 = vmatpush1.msra.mxu0 0.0
    %3830 = vmatprep.mubr.f32.mxu0 0.0
    %3831 = vmatmul.mubr.f32.gmra.mrb[0].mxu0 %v3761
    %v3832 = vpop.f32.mrb[0].mxu0
    %v3833 = vadd.f32 0.0, %v3832
    %v3834 = vpop.f32.mrb[0].mxu0
    %3835 = vmatprep.mubr.f32.mxu0 0.0
    %3836 = vmatmul.mubr.f32.gmra.mrb[0].mxu0 %v3764
    %v3837 = vpop.f32.mrb[0].mxu0
    %v3838 = vadd.f32 0.0, %v3837
    %v3839 = vpop.f32.mrb[0].mxu0
    %3840 = vdwg.mxu0
    %3842 = vset.pattern.permute.xlu0 0
    %3843 = vperm.xlu0 %3842, %v87
    %v3844 = vpop.permute.xlu0 %3843
    %3847 = vset.pattern.permute.xlu0 0
    %3848 = vperm.xlu0 %3847, %v88
    %v3849 = vpop.permute.xlu0 %3848
    %v3851 = vsub.f32 %v3833, %v3844
    %v3852 = vsub.f32 %v3838, %v3849
    %v3853 = vmul.f32 %v3851, %v3851
    %v3854 = vmul.f32 %v3852, %v3852
    %vm3855 = vcmask 31744
    %v3856 = vsel %vm3855, %v3853, 0.0
    %v3857 = vsel %vm3855, %v3854, 0.0
    %v3858 = vadd.f32 %v3856, %v3857
    %v3859 = vrot.slane %v3858, 4
    %v3860 = vadd.f32 %v3858, %v3859
    %v3861 = vrot.slane %v3860, 2
    %v3862 = vadd.f32 %v3860, %v3861
    %v3863 = vrot.slane %v3862, 1
    %v3864 = vadd.f32 %v3862, %v3863
    %v3865 = vrcp.pop 16.0
    %v3866 = vmul.f32 %v3864, %v3865
    %3868 = vset.pattern.permute.xlu0 0
    %3869 = vperm.xlu0 %3868, %v89
    %v3870 = vpop.permute.xlu0 %3869
    %3873 = vset.pattern.permute.xlu0 0
    %3874 = vperm.xlu0 %3873, %v90
    %v3875 = vpop.permute.xlu0 %3874
    %v3877 = vsub.f32 %v3758, %v3870
    %v3878 = vsub.f32 %v3759, %v3875
    %v3879 = vmul.f32 %v3877, %v3877
    %v3880 = vmul.f32 %v3878, %v3878
    %v3881 = vsel %vm3855, %v3879, 0.0
    %v3882 = vsel %vm3855, %v3880, 0.0
    %v3883 = vadd.f32 %v3881, %v3882
    %v3884 = vrot.slane %v3883, 4
    %v3885 = vadd.f32 %v3883, %v3884
    %v3886 = vrot.slane %v3885, 2
    %v3887 = vadd.f32 %v3885, %v3886
    %v3888 = vrot.slane %v3887, 1
    %v3889 = vadd.f32 %v3887, %v3888
    %v3890 = vmul.f32 %v3889, %v3865
    %v3891 = vmul.f32 %v89, %v89
    %v3892 = vmul.f32 %v90, %v90
    %v3893 = vsel %vm3751, %v3891, 0.0
    %v3894 = vsel %vm3751, %v3892, 0.0
    %v3895 = vadd.f32 %v3893, %v3894
    %3896 = vadd.xlane.f32.xlu0 %v3895
    %v3897 = vpop.xlane.xlu0 %3896
    %v3898 = vrot.slane %v3897, 4
    %v3899 = vadd.f32 %v3897, %v3898
    %v3900 = vrot.slane %v3899, 2
    %v3901 = vadd.f32 %v3899, %v3900
    %v3902 = vrot.slane %v3901, 1
    %v3903 = vadd.f32 %v3901, %v3902
    %s3904 = vtos %v3903
    %v3905 = vstv %s3904
    %v3906 = vrsqrt.pop %v3905
    %v3907 = vmul.f32 %v3905, %v3906
    %vm3908 = vcmp.eq.f32.partialorder %v3905, inf
    %v3909 = vsel %vm3908, %v3905, %v3907
    %vm3910 = vcmp.eq.f32.partialorder %v3905, 0.0
    %v3911 = vand.u32 %v3905, 2147483648
    %v3912 = vsel %vm3910, %v3911, %v3909
    %v3913 = vrsqrt.pop %v3889
    %v3914 = vmul.f32 %v3889, %v3913
    %vm3915 = vcmp.eq.f32.partialorder %v3889, inf
    %v3916 = vsel %vm3915, %v3889, %v3914
    %vm3917 = vcmp.eq.f32.partialorder %v3889, 0.0
    %v3918 = vand.u32 %v3889, 2147483648
    %v3919 = vsel %vm3917, %v3918, %v3916
    %v3920 = vrcp.pop %v3912
    %v3921 = vmul.f32 %v3919, %v3920
    %v3922 = vld [vmem:[%s9] sm:$0x1]
    %v3923 = vmul.f32 %v3866, %v3922
    %vm3924 = vcmask 24576
    %v3925 = vsel %vm3924, %v3923, 0.0
    %3926 = vadd.xlane.f32.xlu0 %v3925
    %v3927 = vpop.xlane.xlu0 %3926
    %v3928 = vadd.f32 %v3927, 0.0
    %v3930 = vrot.slane %v3928, 5
    %v3932 = vsel %vm760, %v3866, %v3890
    %vm3933 = vcmask 1041408
    %v3934 = vsel %vm3933, %v3932, %v3921
    %vm3935 = vcmask 1042432
    %v3936 = vsel %vm3935, %v3934, %v3930
    %vm3937 = vcmask 27648
    %3938 = vst.msk [vmem:[#allocation4] sm:$0xf] %vm3937, %v3936
    %v3939 = vld [vmem:[%s10] sm:$0xf]
    %v3941 = vsel %vm3855, %v3939, 0
    %v3944 = vsel %vm3855, %v3758, 0
    %v3947 = vsel %vm3855, %v3759, 0
    %3949 = vmatprep.subr.mxu0 0.0
    %3950 = vmatpush1.xpose.msra.mxu0 %v3944
    %3951 = vmatprep.subr.mxu0 0.0
    %3952 = vmatpush1.xpose.msra.mxu0 %v3947
    %3953 = vmatprep.subr.mxu0 0.0
    %3954 = vmatpush1.xpose.msra.mxu0 0.0
    %3955 = vmatprep.subr.mxu0 0.0
    %3956 = vmatpush1.xpose.msra.mxu0 0.0
    %3957 = vmatprep.subr.mxu0 0.0
    %3958 = vmatpush1.xpose.msra.mxu0 0.0
    %3959 = vmatprep.subr.mxu0 0.0
    %3960 = vmatpush1.xpose.msra.mxu0 0.0
    %3961 = vmatprep.subr.mxu0 0.0
    %3962 = vmatpush1.xpose.msra.mxu0 0.0
    %3963 = vmatprep.subr.mxu0 0.0
    %3964 = vmatpush1.xpose.msra.mxu0 0.0
    %3965 = vmatprep.subr.mxu0 0.0
    %3966 = vmatpush1.xpose.msra.mxu0 0.0
    %3967 = vmatprep.subr.mxu0 0.0
    %3968 = vmatpush1.xpose.msra.mxu0 0.0
    %3969 = vmatprep.subr.mxu0 0.0
    %3970 = vmatpush1.xpose.msra.mxu0 0.0
    %3971 = vmatprep.subr.mxu0 0.0
    %3972 = vmatpush1.xpose.msra.mxu0 0.0
    %3973 = vmatprep.subr.mxu0 0.0
    %3974 = vmatpush1.xpose.msra.mxu0 0.0
    %3975 = vmatprep.subr.mxu0 0.0
    %3976 = vmatpush1.xpose.msra.mxu0 0.0
    %3977 = vmatprep.subr.mxu0 0.0
    %3978 = vmatpush1.xpose.msra.mxu0 0.0
    %3979 = vmatprep.subr.mxu0 0.0
    %3980 = vmatpush1.xpose.msra.mxu0 0.0
    %3981 = vmatprep.subr.mxu0 0.0
    %3982 = vmatpush1.xpose.msra.mxu0 0.0
    %3983 = vmatprep.subr.mxu0 0.0
    %3984 = vmatpush1.xpose.msra.mxu0 0.0
    %3985 = vmatprep.subr.mxu0 0.0
    %3986 = vmatpush1.xpose.msra.mxu0 0.0
    %3987 = vmatprep.subr.mxu0 0.0
    %3988 = vmatpush1.xpose.msra.mxu0 0.0
    %3989 = vmatprep.subr.mxu0 0.0
    %3990 = vmatpush1.xpose.msra.mxu0 0.0
    %3991 = vmatprep.subr.mxu0 0.0
    %3992 = vmatpush1.xpose.msra.mxu0 0.0
    %3993 = vmatprep.subr.mxu0 0.0
    %3994 = vmatpush1.xpose.msra.mxu0 0.0
    %3995 = vmatprep.subr.mxu0 0.0
    %3996 = vmatpush1.xpose.msra.mxu0 0.0
    %3997 = vmatprep.subr.mxu0 0.0
    %3998 = vmatpush1.xpose.msra.mxu0 0.0
    %3999 = vmatprep.subr.mxu0 0.0
    %4000 = vmatpush1.xpose.msra.mxu0 0.0
    %4001 = vmatprep.subr.mxu0 0.0
    %4002 = vmatpush1.xpose.msra.mxu0 0.0
    %4003 = vmatprep.subr.mxu0 0.0
    %4004 = vmatpush1.xpose.msra.mxu0 0.0
    %4005 = vmatprep.subr.mxu0 0.0
    %4006 = vmatpush1.xpose.msra.mxu0 0.0
    %4007 = vmatprep.subr.mxu0 0.0
    %4008 = vmatpush1.xpose.msra.mxu0 0.0
    %4009 = vmatprep.subr.mxu0 0.0
    %4010 = vmatpush1.xpose.msra.mxu0 0.0
    %4011 = vmatprep.subr.mxu0 0.0
    %4012 = vmatpush1.xpose.msra.mxu0 0.0
    %4013 = vmatprep.mubr.f32.mxu0 0.0
    %4014 = vmatmul.mubr.f32.gmra.mrb[0].mxu0 %v3941
    %v4015 = vpop.f32.mrb[0].mxu0
    %v4016 = vadd.f32 0.0, %v4015
    %v4017 = vpop.f32.mrb[0].mxu0
    %4018 = vdwg.mxu0
    %vm4019 = vcmask 125952
    %4020 = vst.msk [vmem:[#allocation2] sm:$0xf] %vm4019, %v4016
    // Predicated region
    $region74: #{tpu_custom_call.1} parent=1 // pred_check
      _
    $region75: #{tpu_custom_call.1} parent=1 // pred_check_branch
      %4022 = sbr.rel (0) target = $region77
    $region76: #{tpu_custom_call.1} parent=1 // pred_region
      %s4024 = ssub.s32 64, 64
      %4025 = vsyncadd [#allocation3], %s4024
      %s4027 = sshll.u32 [#allocation2], 4
      %s4028 = int_to_ptr.vmem [resolvable:$true] %s4027
      %4030 = dma.vmem_to_hbm [thread:$0]  %s4028, 64, %s18, [#allocation3]
    $region77: #{tpu_custom_call.1} parent=1 // pred_fallthru
      _
    // Predicated region
    $region78: #{tpu_custom_call.1} parent=1 // pred_check
      _
    $region79: #{tpu_custom_call.1} parent=1 // pred_check_branch
      %4032 = sbr.rel (0) target = $region81
    $region80: #{tpu_custom_call.1} parent=1 // pred_region
      %s4034 = ssub.s32 64, 64
      %4035 = vsyncadd [#allocation5], %s4034
      %s4037 = sshll.u32 [#allocation4], 4
      %s4038 = int_to_ptr.vmem [resolvable:$true] %s4037
      %4040 = dma.vmem_to_hbm [thread:$0]  %s4038, 64, %s19, [#allocation5]
    $region81: #{tpu_custom_call.1} parent=1 // pred_fallthru
      _
    // Predicated region
    $region82: #{tpu_custom_call.1} parent=1 // pred_check
      _
    $region83: #{tpu_custom_call.1} parent=1 // pred_check_branch
      %4042 = sbr.rel (0) target = $region85
    $region84: #{tpu_custom_call.1} parent=1 // pred_region
      %4043 = dma.done [#allocation3], 64
    $region85: #{tpu_custom_call.1} parent=1 // pred_fallthru
      _
    // Predicated region
    $region86: #{tpu_custom_call.1} parent=1 // pred_check
      _
    $region87: #{tpu_custom_call.1} parent=1 // pred_check_branch
      %4045 = sbr.rel (0) target = $region89
    $region88: #{tpu_custom_call.1} parent=1 // pred_region
      %4046 = dma.done [#allocation5], 64
    $region89: #{tpu_custom_call.1} parent=1 // pred_fallthru
      _
    %4047 = vsyncpa [#allocation3], 1
    %4048 = vsyncpa [#allocation5], 1

</llo_original>
